<compile_context>
chip_gen: v6e
topology: v6e:2x2x1
jax: 0.10.0
libtpu: 0.0.40
codegen_flags: <defaults>
</compile_context>

<pallas_src>
import numpy as np
import jax
import jax.numpy as jnp
from jax.experimental import pallas as pl
from jax.experimental.pallas import tpu as pltpu


# ------------------------------ Pallas kernel -------------------------------

def make_vgg_block_kernel(H, W, c_in, c_out, n_convs):
    HP, WP = H // 2, W // 2

    def kernel(*refs):
        x_ref = refs[0]                          # (1, H, W, c_in)  NHWC block
        wb = refs[1:1 + 2 * n_convs]             # (w0, b0, w1, b1, ...)
        o_ref = refs[1 + 2 * n_convs]            # (1, c_out, HP*WP) NCHW-flat
        pad_in = refs[2 + 2 * n_convs]           # VMEM (H+2, W+2, c_in)
        col_ref = refs[3 + 2 * n_convs]          # VMEM (H*W, 9*c_max)
        pad_mid = refs[4 + 2 * n_convs] if n_convs > 1 else None

        # Stage the input into zero-padded VMEM halo buffers (no HBM pad op).
        # Zeroing happens every grid step so the kernel stays correct when the
        # batch axis is sharded across TensorCores (each core has its own
        # scratch); the fill is tiny relative to the conv work.
        pad_in[...] = jnp.zeros_like(pad_in)
        pad_in[1:H + 1, 1:W + 1, :] = x_ref[0]
        if n_convs > 1:
            pad_mid[...] = jnp.zeros_like(pad_mid)

        cur_pad, cur_c = pad_in, c_in
        act = None
        for li in range(n_convs):                # static Python loop over layers
            w = wb[2 * li][...]                  # (9*cur_c, c_out)
            b = wb[2 * li + 1][...]              # (1, c_out)

            # im2col once -> one MXU matmul with K = 9*cur_c (instead of 9 dots).
            # Column order is (dy, dx, c_in) and matches pack_params below.
            j = 0
            for dy in range(3):
                for dx in range(3):
                    col_ref[:, j * cur_c:(j + 1) * cur_c] = (
                        cur_pad[dy:dy + H, dx:dx + W, :].reshape(H * W, cur_c))
                    j += 1
            y = jnp.dot(col_ref[:, :9 * cur_c], w,
                        preferred_element_type=jnp.float32) + b
            act = jnp.maximum(y, 0.0)            # fused bias + ReLU, (H*W, c_out)

            if li + 1 < n_convs:
                # Next layer reads from the padded intermediate buffer.
                pad_mid[1:H + 1, 1:W + 1, :] = act.reshape(H, W, c_out)
                cur_pad, cur_c = pad_mid, c_out

        # Fused MaxPool2d(2, 2) epilogue (only non-minor-dim reshapes + slices).
        a = act.reshape(HP, 2, W, c_out)
        a = jnp.maximum(a[:, 0], a[:, 1])                 # pool over H -> (HP, W, C)
        a = a.reshape(HP, WP, 2, c_out)
        a = jnp.maximum(a[:, :, 0, :], a[:, :, 1, :])     # pool over W -> (HP, WP, C)

        # Emit NCHW directly so the wrapper only needs a free reshape.
        o_ref[0] = jnp.transpose(a.reshape(HP * WP, c_out), (1, 0))

    return kernel


# ------------------------------ host wrappers --------------------------------

def pack_params(weights, biases):
    """PyTorch Conv2d weights (Cout, Cin, 3, 3) -> im2col matmul weights."""
    wmats, bmats = [], []
    for w, b in zip(weights, biases):
        c_out, c_prev = w.shape[0], w.shape[1]
        # column order inside the kernel is (dy, dx, c_in)
        wmats.append(jnp.transpose(jnp.asarray(w), (2, 3, 1, 0))
                     .reshape(9 * c_prev, c_out))
        bmats.append(jnp.asarray(b)[None, :])
    return wmats, bmats


@jax.jit
def vgg_block_forward(x_nchw, wmats, bmats):
    """VGGBlock forward: n_convs x (3x3 same conv + ReLU), then 2x2/2 max-pool."""
    B, c_in, H, W = x_nchw.shape
    n_convs = len(wmats)
    assert n_convs >= 1 and H % 2 == 0 and W % 2 == 0
    c_out = wmats[0].shape[1]
    HP, WP = H // 2, W // 2

    # Single tiny layout change on the external input; all intermediates stay
    # inside the one kernel.
    x_nhwc = jnp.transpose(x_nchw, (0, 2, 3, 1))

    args = [x_nhwc]
    in_specs = [pl.BlockSpec((1, H, W, c_in), lambda i: (i, 0, 0, 0))]
    flops = 0
    bytes_accessed = B * H * W * c_in * 4 + B * c_out * HP * WP * 4
    for li, (wmat, bmat) in enumerate(zip(wmats, bmats)):
        args += [wmat, bmat]
        # Constant block index -> weights stay resident in VMEM across steps.
        in_specs += [pl.BlockSpec(wmat.shape, lambda i: (0, 0)),
                     pl.BlockSpec(bmat.shape, lambda i: (0, 0))]
        c_prev = c_in if li == 0 else c_out
        flops += 2 * B * H * W * (9 * c_prev) * c_out
        bytes_accessed += (wmat.size + bmat.size) * 4

    c_kmax = max(c_in, c_out) if n_convs > 1 else c_in
    scratch = [pltpu.VMEM((H + 2, W + 2, c_in), jnp.float32),   # padded input
               pltpu.VMEM((H * W, 9 * c_kmax), jnp.float32)]    # im2col buffer
    if n_convs > 1:
        scratch.append(pltpu.VMEM((H + 2, W + 2, c_out), jnp.float32))

    out = pl.pallas_call(
        make_vgg_block_kernel(H, W, c_in, c_out, n_convs),
        out_shape=jax.ShapeDtypeStruct((B, c_out, HP * WP), jnp.float32),
        grid=(B,),
        in_specs=in_specs,
        out_specs=pl.BlockSpec((1, c_out, HP * WP), lambda i: (i, 0, 0)),
        scratch_shapes=scratch,
        compiler_params=pltpu.CompilerParams(dimension_semantics=("parallel",)),
        cost_estimate=pl.CostEstimate(flops=int(flops), transcendentals=0,
                                      bytes_accessed=int(bytes_accessed)),
    )(*args)
    return out.reshape(B, c_out, HP, WP)     # pure reshape, no transpose


# ----------------------------- pure-JAX reference ----------------------------

def ref_forward(x, weights, biases):
    o = x
    for w, b in zip(weights, biases):
        o = jax.lax.conv_general_dilated(
            o, w, window_strides=(1, 1), padding=[(1, 1), (1, 1)],
            dimension_numbers=("NCHW", "OIHW", "NCHW"),
            precision=jax.lax.Precision.HIGHEST)
        o = jax.nn.relu(o + b[None, :, None, None])
    return jax.lax.reduce_window(o, -jnp.inf, jax.lax.max,
                                 (1, 1, 2, 2), (1, 1, 2, 2), "VALID")


# ----------------------------------- main ------------------------------------

if __name__ == "__main__":
    key = jax.random.PRNGKey(0)
    B, c_in, c_out, H, W, n_convs = 2, 4, 32, 16, 16, 2
    ks = jax.random.split(key, 1 + 2 * n_convs)

    x = jax.random.normal(ks[0], (B, c_in, H, W), jnp.float32)
    weights, biases = [], []
    for li in range(n_convs):
        c_prev = c_in if li == 0 else c_out
        weights.append(jax.random.normal(ks[1 + 2 * li], (c_out, c_prev, 3, 3),
                                         jnp.float32) / np.sqrt(9 * c_prev))
        biases.append(0.1 * jax.random.normal(ks[2 + 2 * li], (c_out,),
                                              jnp.float32))

    wmats, bmats = pack_params(weights, biases)
    out = jax.block_until_ready(vgg_block_forward(x, wmats, bmats))
    assert out.shape == (B, c_out, H // 2, W // 2)

    ref = jax.block_until_ready(ref_forward(x, weights, biases))
    if not np.allclose(np.asarray(out), np.asarray(ref), atol=1e-2, rtol=1e-2):
        err = float(np.max(np.abs(np.asarray(out) - np.asarray(ref))))
        raise AssertionError(f"Pallas VGGBlock output mismatch (max abs err={err})")

    print("KERNEL_OK")
</pallas_src>

<mosaic_0001>
module attributes {stable_mosaic.version = 11 : i64} {
  func.func @kernel(%arg0: i32, %arg1: memref<1x16x16x4xf32, #tpu.memory_space<vmem>>, %arg2: memref<36x32xf32, #tpu.memory_space<vmem>>, %arg3: memref<1x32xf32, #tpu.memory_space<vmem>>, %arg4: memref<288x32xf32, #tpu.memory_space<vmem>>, %arg5: memref<1x32xf32, #tpu.memory_space<vmem>>, %arg6: memref<1x32x64xf32, #tpu.memory_space<vmem>>, %arg7: memref<18x18x4xf32, #tpu.memory_space<vmem>>, %arg8: memref<256x288xf32, #tpu.memory_space<vmem>>, %arg9: memref<18x18x32xf32, #tpu.memory_space<vmem>>) attributes {dimension_semantics = [#tpu.dimension_semantics<parallel>], iteration_bounds = array<i64: 2>, scalar_prefetch = 0 : i64, scratch_operands = 3 : i64, tpu.core_type = #tpu.core_type<tc>, window_params = [{transform_indices = @transform_0, window_bounds = array<i64: 1, 16, 16, 4>}, {pipeline_mode = #tpu.pipeline_mode<synchronous>, transform_indices = @transform_1, window_bounds = array<i64: 36, 32>}, {pipeline_mode = #tpu.pipeline_mode<synchronous>, transform_indices = @transform_2, window_bounds = array<i64: 1, 32>}, {pipeline_mode = #tpu.pipeline_mode<synchronous>, transform_indices = @transform_3, window_bounds = array<i64: 288, 32>}, {pipeline_mode = #tpu.pipeline_mode<synchronous>, transform_indices = @transform_4, window_bounds = array<i64: 1, 32>}, {transform_indices = @transform_5, window_bounds = array<i64: 1, 32, 64>}]} {
    %cst = arith.constant 0.000000e+00 : f32
    %0 = vector.broadcast %cst : f32 to vector<18x18x4xf32>
    %c0 = arith.constant 0 : index
    %c0_0 = arith.constant 0 : index
    %c0_1 = arith.constant 0 : index
    %1 = vector.load %arg7[%c0, %c0_0, %c0_1] : memref<18x18x4xf32, #tpu.memory_space<vmem>>, vector<18x18x4xf32>
    tpu.vector_store %arg7[%c0, %c0_0, %c0_1], %0 {strides = array<i32>} : memref<18x18x4xf32, #tpu.memory_space<vmem>>, vector<18x18x4xf32>,
    %c0_2 = arith.constant 0 : index
    %c0_3 = arith.constant 0 : index
    %c0_4 = arith.constant 0 : index
    %c0_5 = arith.constant 0 : index
    %2 = vector.load %arg1[%c0_2, %c0_3, %c0_4, %c0_5] : memref<1x16x16x4xf32, #tpu.memory_space<vmem>>, vector<1x16x16x4xf32>
    %3 = vector.shape_cast %2 : vector<1x16x16x4xf32> to vector<16x16x4xf32>
    %c1 = arith.constant 1 : index
    %c1_6 = arith.constant 1 : index
    %c0_7 = arith.constant 0 : index
    %4 = vector.load %arg7[%c1, %c1_6, %c0_7] : memref<18x18x4xf32, #tpu.memory_space<vmem>>, vector<16x16x4xf32>
    tpu.vector_store %arg7[%c1, %c1_6, %c0_7], %3 {strides = array<i32>} : memref<18x18x4xf32, #tpu.memory_space<vmem>>, vector<16x16x4xf32>,
    %cst_8 = arith.constant 0.000000e+00 : f32
    %5 = vector.broadcast %cst_8 : f32 to vector<18x18x32xf32>
    %c0_9 = arith.constant 0 : index
    %c0_10 = arith.constant 0 : index
    %c0_11 = arith.constant 0 : index
    %6 = vector.load %arg9[%c0_9, %c0_10, %c0_11] : memref<18x18x32xf32, #tpu.memory_space<vmem>>, vector<18x18x32xf32>
    tpu.vector_store %arg9[%c0_9, %c0_10, %c0_11], %5 {strides = array<i32>} : memref<18x18x32xf32, #tpu.memory_space<vmem>>, vector<18x18x32xf32>,
    %c0_12 = arith.constant 0 : index
    %c0_13 = arith.constant 0 : index
    %7 = vector.load %arg2[%c0_12, %c0_13] : memref<36x32xf32, #tpu.memory_space<vmem>>, vector<36x32xf32>
    %c0_14 = arith.constant 0 : index
    %c0_15 = arith.constant 0 : index
    %8 = vector.load %arg3[%c0_14, %c0_15] : memref<1x32xf32, #tpu.memory_space<vmem>>, vector<1x32xf32>
    %c0_16 = arith.constant 0 : index
    %c0_17 = arith.constant 0 : index
    %c0_18 = arith.constant 0 : index
    %9 = vector.load %arg7[%c0_16, %c0_17, %c0_18] : memref<18x18x4xf32, #tpu.memory_space<vmem>>, vector<16x16x4xf32>
    %10 = vector.shape_cast %9 : vector<16x16x4xf32> to vector<256x4xf32>
    %c0_19 = arith.constant 0 : index
    %c0_20 = arith.constant 0 : index
    %11 = vector.load %arg8[%c0_19, %c0_20] : memref<256x288xf32, #tpu.memory_space<vmem>>, vector<256x4xf32>
    tpu.vector_store %arg8[%c0_19, %c0_20], %10 {strides = array<i32>} : memref<256x288xf32, #tpu.memory_space<vmem>>, vector<256x4xf32>,
    %c0_21 = arith.constant 0 : index
    %c1_22 = arith.constant 1 : index
    %c0_23 = arith.constant 0 : index
    %12 = vector.load %arg7[%c0_21, %c1_22, %c0_23] : memref<18x18x4xf32, #tpu.memory_space<vmem>>, vector<16x16x4xf32>
    %13 = vector.shape_cast %12 : vector<16x16x4xf32> to vector<256x4xf32>
    %c0_24 = arith.constant 0 : index
    %c4 = arith.constant 4 : index
    %14 = vector.load %arg8[%c0_24, %c4] : memref<256x288xf32, #tpu.memory_space<vmem>>, vector<256x4xf32>
    tpu.vector_store %arg8[%c0_24, %c4], %13 {strides = array<i32>} : memref<256x288xf32, #tpu.memory_space<vmem>>, vector<256x4xf32>,
    %c0_25 = arith.constant 0 : index
    %c2 = arith.constant 2 : index
    %c0_26 = arith.constant 0 : index
    %15 = vector.load %arg7[%c0_25, %c2, %c0_26] : memref<18x18x4xf32, #tpu.memory_space<vmem>>, vector<16x16x4xf32>
    %16 = vector.shape_cast %15 : vector<16x16x4xf32> to vector<256x4xf32>
    %c0_27 = arith.constant 0 : index
    %c8 = arith.constant 8 : index
    %17 = vector.load %arg8[%c0_27, %c8] : memref<256x288xf32, #tpu.memory_space<vmem>>, vector<256x4xf32>
    tpu.vector_store %arg8[%c0_27, %c8], %16 {strides = array<i32>} : memref<256x288xf32, #tpu.memory_space<vmem>>, vector<256x4xf32>,
    %c1_28 = arith.constant 1 : index
    %c0_29 = arith.constant 0 : index
    %c0_30 = arith.constant 0 : index
    %18 = vector.load %arg7[%c1_28, %c0_29, %c0_30] : memref<18x18x4xf32, #tpu.memory_space<vmem>>, vector<16x16x4xf32>
    %19 = vector.shape_cast %18 : vector<16x16x4xf32> to vector<256x4xf32>
    %c0_31 = arith.constant 0 : index
    %c12 = arith.constant 12 : index
    %20 = vector.load %arg8[%c0_31, %c12] : memref<256x288xf32, #tpu.memory_space<vmem>>, vector<256x4xf32>
    tpu.vector_store %arg8[%c0_31, %c12], %19 {strides = array<i32>} : memref<256x288xf32, #tpu.memory_space<vmem>>, vector<256x4xf32>,
    %c1_32 = arith.constant 1 : index
    %c1_33 = arith.constant 1 : index
    %c0_34 = arith.constant 0 : index
    %21 = vector.load %arg7[%c1_32, %c1_33, %c0_34] : memref<18x18x4xf32, #tpu.memory_space<vmem>>, vector<16x16x4xf32>
    %22 = vector.shape_cast %21 : vector<16x16x4xf32> to vector<256x4xf32>
    %c0_35 = arith.constant 0 : index
    %c16 = arith.constant 16 : index
    %23 = vector.load %arg8[%c0_35, %c16] : memref<256x288xf32, #tpu.memory_space<vmem>>, vector<256x4xf32>
    tpu.vector_store %arg8[%c0_35, %c16], %22 {strides = array<i32>} : memref<256x288xf32, #tpu.memory_space<vmem>>, vector<256x4xf32>,
    %c1_36 = arith.constant 1 : index
    %c2_37 = arith.constant 2 : index
    %c0_38 = arith.constant 0 : index
    %24 = vector.load %arg7[%c1_36, %c2_37, %c0_38] : memref<18x18x4xf32, #tpu.memory_space<vmem>>, vector<16x16x4xf32>
    %25 = vector.shape_cast %24 : vector<16x16x4xf32> to vector<256x4xf32>
    %c0_39 = arith.constant 0 : index
    %c20 = arith.constant 20 : index
    %26 = vector.load %arg8[%c0_39, %c20] : memref<256x288xf32, #tpu.memory_space<vmem>>, vector<256x4xf32>
    tpu.vector_store %arg8[%c0_39, %c20], %25 {strides = array<i32>} : memref<256x288xf32, #tpu.memory_space<vmem>>, vector<256x4xf32>,
    %c2_40 = arith.constant 2 : index
    %c0_41 = arith.constant 0 : index
    %c0_42 = arith.constant 0 : index
    %27 = vector.load %arg7[%c2_40, %c0_41, %c0_42] : memref<18x18x4xf32, #tpu.memory_space<vmem>>, vector<16x16x4xf32>
    %28 = vector.shape_cast %27 : vector<16x16x4xf32> to vector<256x4xf32>
    %c0_43 = arith.constant 0 : index
    %c24 = arith.constant 24 : index
    %29 = vector.load %arg8[%c0_43, %c24] : memref<256x288xf32, #tpu.memory_space<vmem>>, vector<256x4xf32>
    tpu.vector_store %arg8[%c0_43, %c24], %28 {strides = array<i32>} : memref<256x288xf32, #tpu.memory_space<vmem>>, vector<256x4xf32>,
    %c2_44 = arith.constant 2 : index
    %c1_45 = arith.constant 1 : index
    %c0_46 = arith.constant 0 : index
    %30 = vector.load %arg7[%c2_44, %c1_45, %c0_46] : memref<18x18x4xf32, #tpu.memory_space<vmem>>, vector<16x16x4xf32>
    %31 = vector.shape_cast %30 : vector<16x16x4xf32> to vector<256x4xf32>
    %c0_47 = arith.constant 0 : index
    %c28 = arith.constant 28 : index
    %32 = vector.load %arg8[%c0_47, %c28] : memref<256x288xf32, #tpu.memory_space<vmem>>, vector<256x4xf32>
    tpu.vector_store %arg8[%c0_47, %c28], %31 {strides = array<i32>} : memref<256x288xf32, #tpu.memory_space<vmem>>, vector<256x4xf32>,
    %c2_48 = arith.constant 2 : index
    %c2_49 = arith.constant 2 : index
    %c0_50 = arith.constant 0 : index
    %33 = vector.load %arg7[%c2_48, %c2_49, %c0_50] : memref<18x18x4xf32, #tpu.memory_space<vmem>>, vector<16x16x4xf32>
    %34 = vector.shape_cast %33 : vector<16x16x4xf32> to vector<256x4xf32>
    %c0_51 = arith.constant 0 : index
    %c32 = arith.constant 32 : index
    %35 = vector.load %arg8[%c0_51, %c32] : memref<256x288xf32, #tpu.memory_space<vmem>>, vector<256x4xf32>
    tpu.vector_store %arg8[%c0_51, %c32], %34 {strides = array<i32>} : memref<256x288xf32, #tpu.memory_space<vmem>>, vector<256x4xf32>,
    %c0_52 = arith.constant 0 : index
    %c0_53 = arith.constant 0 : index
    %36 = vector.load %arg8[%c0_52, %c0_53] : memref<256x288xf32, #tpu.memory_space<vmem>>, vector<256x36xf32>
    %cst_54 = arith.constant dense<0.000000e+00> : vector<256x32xf32>
    %37 = tpu.matmul %36, %7, %cst_54 {dimension_numbers = #tpu.dot_dimension_numbers<[1], [0], [0], [1], [0, 0, 1, 1], [], []>} : vector<256x36xf32>, vector<36x32xf32>, vector<256x32xf32> -> vector<256x32xf32>
    %38 = vector.broadcast %8 : vector<1x32xf32> to vector<256x32xf32>
    %39 = arith.addf %37, %38 : vector<256x32xf32>
    %cst_55 = arith.constant 0.000000e+00 : f32
    %40 = vector.broadcast %cst_55 : f32 to vector<256x32xf32>
    %41 = arith.maximumf %39, %40 : vector<256x32xf32>
    %42 = vector.shape_cast %41 : vector<256x32xf32> to vector<16x16x32xf32>
    %c1_56 = arith.constant 1 : index
    %c1_57 = arith.constant 1 : index
    %c0_58 = arith.constant 0 : index
    %43 = vector.load %arg9[%c1_56, %c1_57, %c0_58] : memref<18x18x32xf32, #tpu.memory_space<vmem>>, vector<16x16x32xf32>
    tpu.vector_store %arg9[%c1_56, %c1_57, %c0_58], %42 {strides = array<i32>} : memref<18x18x32xf32, #tpu.memory_space<vmem>>, vector<16x16x32xf32>,
    %c0_59 = arith.constant 0 : index
    %c0_60 = arith.constant 0 : index
    %44 = vector.load %arg4[%c0_59, %c0_60] : memref<288x32xf32, #tpu.memory_space<vmem>>, vector<288x32xf32>
    %c0_61 = arith.constant 0 : index
    %c0_62 = arith.constant 0 : index
    %45 = vector.load %arg5[%c0_61, %c0_62] : memref<1x32xf32, #tpu.memory_space<vmem>>, vector<1x32xf32>
    %c0_63 = arith.constant 0 : index
    %c0_64 = arith.constant 0 : index
    %c0_65 = arith.constant 0 : index
    %46 = vector.load %arg9[%c0_63, %c0_64, %c0_65] : memref<18x18x32xf32, #tpu.memory_space<vmem>>, vector<16x16x32xf32>
    %47 = vector.shape_cast %46 : vector<16x16x32xf32> to vector<256x32xf32>
    %c0_66 = arith.constant 0 : index
    %c0_67 = arith.constant 0 : index
    %48 = vector.load %arg8[%c0_66, %c0_67] : memref<256x288xf32, #tpu.memory_space<vmem>>, vector<256x32xf32>
    tpu.vector_store %arg8[%c0_66, %c0_67], %47 {strides = array<i32>} : memref<256x288xf32, #tpu.memory_space<vmem>>, vector<256x32xf32>,
    %c0_68 = arith.constant 0 : index
    %c1_69 = arith.constant 1 : index
    %c0_70 = arith.constant 0 : index
    %49 = vector.load %arg9[%c0_68, %c1_69, %c0_70] : memref<18x18x32xf32, #tpu.memory_space<vmem>>, vector<16x16x32xf32>
    %50 = vector.shape_cast %49 : vector<16x16x32xf32> to vector<256x32xf32>
    %c0_71 = arith.constant 0 : index
    %c32_72 = arith.constant 32 : index
    %51 = vector.load %arg8[%c0_71, %c32_72] : memref<256x288xf32, #tpu.memory_space<vmem>>, vector<256x32xf32>
    tpu.vector_store %arg8[%c0_71, %c32_72], %50 {strides = array<i32>} : memref<256x288xf32, #tpu.memory_space<vmem>>, vector<256x32xf32>,
    %c0_73 = arith.constant 0 : index
    %c2_74 = arith.constant 2 : index
    %c0_75 = arith.constant 0 : index
    %52 = vector.load %arg9[%c0_73, %c2_74, %c0_75] : memref<18x18x32xf32, #tpu.memory_space<vmem>>, vector<16x16x32xf32>
    %53 = vector.shape_cast %52 : vector<16x16x32xf32> to vector<256x32xf32>
    %c0_76 = arith.constant 0 : index
    %c64 = arith.constant 64 : index
    %54 = vector.load %arg8[%c0_76, %c64] : memref<256x288xf32, #tpu.memory_space<vmem>>, vector<256x32xf32>
    tpu.vector_store %arg8[%c0_76, %c64], %53 {strides = array<i32>} : memref<256x288xf32, #tpu.memory_space<vmem>>, vector<256x32xf32>,
    %c1_77 = arith.constant 1 : index
    %c0_78 = arith.constant 0 : index
    %c0_79 = arith.constant 0 : index
    %55 = vector.load %arg9[%c1_77, %c0_78, %c0_79] : memref<18x18x32xf32, #tpu.memory_space<vmem>>, vector<16x16x32xf32>
    %56 = vector.shape_cast %55 : vector<16x16x32xf32> to vector<256x32xf32>
    %c0_80 = arith.constant 0 : index
    %c96 = arith.constant 96 : index
    %57 = vector.load %arg8[%c0_80, %c96] : memref<256x288xf32, #tpu.memory_space<vmem>>, vector<256x32xf32>
    tpu.vector_store %arg8[%c0_80, %c96], %56 {strides = array<i32>} : memref<256x288xf32, #tpu.memory_space<vmem>>, vector<256x32xf32>,
    %c1_81 = arith.constant 1 : index
    %c1_82 = arith.constant 1 : index
    %c0_83 = arith.constant 0 : index
    %58 = vector.load %arg9[%c1_81, %c1_82, %c0_83] : memref<18x18x32xf32, #tpu.memory_space<vmem>>, vector<16x16x32xf32>
    %59 = vector.shape_cast %58 : vector<16x16x32xf32> to vector<256x32xf32>
    %c0_84 = arith.constant 0 : index
    %c128 = arith.constant 128 : index
    %60 = vector.load %arg8[%c0_84, %c128] : memref<256x288xf32, #tpu.memory_space<vmem>>, vector<256x32xf32>
    tpu.vector_store %arg8[%c0_84, %c128], %59 {strides = array<i32>} : memref<256x288xf32, #tpu.memory_space<vmem>>, vector<256x32xf32>,
    %c1_85 = arith.constant 1 : index
    %c2_86 = arith.constant 2 : index
    %c0_87 = arith.constant 0 : index
    %61 = vector.load %arg9[%c1_85, %c2_86, %c0_87] : memref<18x18x32xf32, #tpu.memory_space<vmem>>, vector<16x16x32xf32>
    %62 = vector.shape_cast %61 : vector<16x16x32xf32> to vector<256x32xf32>
    %c0_88 = arith.constant 0 : index
    %c160 = arith.constant 160 : index
    %63 = vector.load %arg8[%c0_88, %c160] : memref<256x288xf32, #tpu.memory_space<vmem>>, vector<256x32xf32>
    tpu.vector_store %arg8[%c0_88, %c160], %62 {strides = array<i32>} : memref<256x288xf32, #tpu.memory_space<vmem>>, vector<256x32xf32>,
    %c2_89 = arith.constant 2 : index
    %c0_90 = arith.constant 0 : index
    %c0_91 = arith.constant 0 : index
    %64 = vector.load %arg9[%c2_89, %c0_90, %c0_91] : memref<18x18x32xf32, #tpu.memory_space<vmem>>, vector<16x16x32xf32>
    %65 = vector.shape_cast %64 : vector<16x16x32xf32> to vector<256x32xf32>
    %c0_92 = arith.constant 0 : index
    %c192 = arith.constant 192 : index
    %66 = vector.load %arg8[%c0_92, %c192] : memref<256x288xf32, #tpu.memory_space<vmem>>, vector<256x32xf32>
    tpu.vector_store %arg8[%c0_92, %c192], %65 {strides = array<i32>} : memref<256x288xf32, #tpu.memory_space<vmem>>, vector<256x32xf32>,
    %c2_93 = arith.constant 2 : index
    %c1_94 = arith.constant 1 : index
    %c0_95 = arith.constant 0 : index
    %67 = vector.load %arg9[%c2_93, %c1_94, %c0_95] : memref<18x18x32xf32, #tpu.memory_space<vmem>>, vector<16x16x32xf32>
    %68 = vector.shape_cast %67 : vector<16x16x32xf32> to vector<256x32xf32>
    %c0_96 = arith.constant 0 : index
    %c224 = arith.constant 224 : index
    %69 = vector.load %arg8[%c0_96, %c224] : memref<256x288xf32, #tpu.memory_space<vmem>>, vector<256x32xf32>
    tpu.vector_store %arg8[%c0_96, %c224], %68 {strides = array<i32>} : memref<256x288xf32, #tpu.memory_space<vmem>>, vector<256x32xf32>,
    %c2_97 = arith.constant 2 : index
    %c2_98 = arith.constant 2 : index
    %c0_99 = arith.constant 0 : index
    %70 = vector.load %arg9[%c2_97, %c2_98, %c0_99] : memref<18x18x32xf32, #tpu.memory_space<vmem>>, vector<16x16x32xf32>
    %71 = vector.shape_cast %70 : vector<16x16x32xf32> to vector<256x32xf32>
    %c0_100 = arith.constant 0 : index
    %c256 = arith.constant 256 : index
    %72 = vector.load %arg8[%c0_100, %c256] : memref<256x288xf32, #tpu.memory_space<vmem>>, vector<256x32xf32>
    tpu.vector_store %arg8[%c0_100, %c256], %71 {strides = array<i32>} : memref<256x288xf32, #tpu.memory_space<vmem>>, vector<256x32xf32>,
    %c0_101 = arith.constant 0 : index
    %c0_102 = arith.constant 0 : index
    %73 = vector.load %arg8[%c0_101, %c0_102] : memref<256x288xf32, #tpu.memory_space<vmem>>, vector<256x288xf32>
    %cst_103 = arith.constant dense<0.000000e+00> : vector<256x32xf32>
    %74 = tpu.matmul %73, %44, %cst_103 {dimension_numbers = #tpu.dot_dimension_numbers<[1], [0], [0], [1], [0, 0, 1, 1], [], []>} : vector<256x288xf32>, vector<288x32xf32>, vector<256x32xf32> -> vector<256x32xf32>
    %75 = vector.broadcast %45 : vector<1x32xf32> to vector<256x32xf32>
    %76 = arith.addf %74, %75 : vector<256x32xf32>
    %cst_104 = arith.constant 0.000000e+00 : f32
    %77 = vector.broadcast %cst_104 : f32 to vector<256x32xf32>
    %78 = arith.maximumf %76, %77 : vector<256x32xf32>
    %79 = vector.shape_cast %78 : vector<256x32xf32> to vector<8x2x16x32xf32>
    %80 = vector.extract_strided_slice %79 {offsets = [0, 0, 0, 0], sizes = [8, 1, 16, 32], strides = [1, 1, 1, 1]} : vector<8x2x16x32xf32> to vector<8x1x16x32xf32>
    %81 = vector.shape_cast %80 : vector<8x1x16x32xf32> to vector<8x16x32xf32>
    %82 = vector.extract_strided_slice %79 {offsets = [0, 1, 0, 0], sizes = [8, 1, 16, 32], strides = [1, 1, 1, 1]} : vector<8x2x16x32xf32> to vector<8x1x16x32xf32>
    %83 = vector.shape_cast %82 : vector<8x1x16x32xf32> to vector<8x16x32xf32>
    %84 = arith.maximumf %81, %83 : vector<8x16x32xf32>
    %85 = vector.shape_cast %84 : vector<8x16x32xf32> to vector<8x8x2x32xf32>
    %86 = vector.extract_strided_slice %85 {offsets = [0, 0, 0, 0], sizes = [8, 8, 1, 32], strides = [1, 1, 1, 1]} : vector<8x8x2x32xf32> to vector<8x8x1x32xf32>
    %87 = vector.shape_cast %86 : vector<8x8x1x32xf32> to vector<8x8x32xf32>
    %88 = vector.extract_strided_slice %85 {offsets = [0, 0, 1, 0], sizes = [8, 8, 1, 32], strides = [1, 1, 1, 1]} : vector<8x8x2x32xf32> to vector<8x8x1x32xf32>
    %89 = vector.shape_cast %88 : vector<8x8x1x32xf32> to vector<8x8x32xf32>
    %90 = arith.maximumf %87, %89 : vector<8x8x32xf32>
    %91 = vector.shape_cast %90 : vector<8x8x32xf32> to vector<64x32xf32>
    %92 = tpu.transpose %91, [1, 0] : vector<64x32xf32> -> vector<32x64xf32>
    %c0_105 = arith.constant 0 : index
    %c0_106 = arith.constant 0 : index
    %c0_107 = arith.constant 0 : index
    %93 = vector.load %arg6[%c0_105, %c0_106, %c0_107] : memref<1x32x64xf32, #tpu.memory_space<vmem>>, vector<1x32x64xf32>
    %94 = vector.shape_cast %93 : vector<1x32x64xf32> to vector<32x64xf32>
    %95 = vector.shape_cast %92 : vector<32x64xf32> to vector<1x32x64xf32>
    tpu.vector_store %arg6[%c0_105, %c0_106, %c0_107], %95 {strides = array<i32>} : memref<1x32x64xf32, #tpu.memory_space<vmem>>, vector<1x32x64xf32>,
    return
  }
  func.func @transform_0(%arg0: i32) -> (i32, i32, i32, i32) {
    %c0_i32 = arith.constant 0 : i32
    %c0_i32_0 = arith.constant 0 : i32
    %c0_i32_1 = arith.constant 0 : i32
    %c0_i32_2 = arith.constant 0 : i32
    return %arg0, %c0_i32, %c0_i32_0, %c0_i32_1 : i32, i32, i32, i32
  }
  func.func @transform_1(%arg0: i32) -> (i32, i32) {
    %c0_i32 = arith.constant 0 : i32
    %c0_i32_0 = arith.constant 0 : i32
    %c0_i32_1 = arith.constant 0 : i32
    return %c0_i32, %c0_i32_0 : i32, i32
  }
  func.func @transform_2(%arg0: i32) -> (i32, i32) {
    %c0_i32 = arith.constant 0 : i32
    %c0_i32_0 = arith.constant 0 : i32
    %c0_i32_1 = arith.constant 0 : i32
    return %c0_i32, %c0_i32_0 : i32, i32
  }
  func.func @transform_3(%arg0: i32) -> (i32, i32) {
    %c0_i32 = arith.constant 0 : i32
    %c0_i32_0 = arith.constant 0 : i32
    %c0_i32_1 = arith.constant 0 : i32
    return %c0_i32, %c0_i32_0 : i32, i32
  }
  func.func @transform_4(%arg0: i32) -> (i32, i32) {
    %c0_i32 = arith.constant 0 : i32
    %c0_i32_0 = arith.constant 0 : i32
    %c0_i32_1 = arith.constant 0 : i32
    return %c0_i32, %c0_i32_0 : i32, i32
  }
  func.func @transform_5(%arg0: i32) -> (i32, i32, i32) {
    %c0_i32 = arith.constant 0 : i32
    %c0_i32_0 = arith.constant 0 : i32
    %c0_i32_1 = arith.constant 0 : i32
    return %arg0, %c0_i32, %c0_i32_0 : i32, i32, i32
  }
}

</mosaic_0001>

<llo_original>
// kernel: vgg_block_forward.1
$region0: #{vgg_block_forward.1}
  #allocation0 [shape = 'u32[]', space=smem, size = 0x4, offset = 0x4, fixed_abs, tag = 'smem constant byte address 0x4 - core index']
  #allocation1 [shape = 'u32[144,128]{1,0:T(1,128)}', space=vmem, size = 0x12000, scoped, tag = 'internal scratch']
  #allocation2 [shape = 'f32[18,18,4]{2,1,0:T(8,128)}', space=vmem, size = 0x36000, scoped, tag = 'scratch operand']
  #allocation3 [shape = 'f32[256,288]{1,0:T(8,128)}', space=vmem, size = 0x60000, scoped, tag = 'scratch operand']
  #allocation4 [shape = 'f32[18,18,32]{2,1,0:T(8,128)}', space=vmem, size = 0x36000, scoped, tag = 'scratch operand']
  %s0 = inlined_call_operand.vmem [shape: f32[2,16,16,4], index: 0, kind: input, shape index: {}]
  %s1 = inlined_call_operand.vmem [shape: f32[36,32], index: 1, kind: input, shape index: {}]
  %s2 = inlined_call_operand.vmem [shape: f32[1,32], index: 2, kind: input, shape index: {}]
  %s3 = inlined_call_operand.vmem [shape: f32[288,32], index: 3, kind: input, shape index: {}]
  %s4 = inlined_call_operand.vmem [shape: f32[1,32], index: 4, kind: input, shape index: {}]
  %s5 = inlined_call_operand.vmem [shape: f32[2,32,64], index: 5, kind: output, shape index: {}]
  %s6 = sld [smem:[#allocation0]]
  $region53: #{vgg_block_forward.1} parent=0
    _
  %s8 = ssub.s32 1, %s6
  %s9 = scalar_select 0, %s8, %s6
  loop: start=0, step=1, limit=4
  $region2: #{vgg_block_forward.1} parent=0 // loop_pre_header
    _
  $region3: #{vgg_block_forward.1} parent=0 // loop_header
    %s11 = sphi 0, %s15
    %p12 = scmp.ge.s32.totalorder %s11, 4
    %s21 = sphi 0, %s23
    %s24 = sphi 0, %s21
    %s25 = sphi 0, %s24
    %s41 = sphi 0, %s25
    %s45 = sphi 0, %s45
    %s47 = sphi 0, %s45
    %s48 = sphi 0, %s47
    %s62 = sphi 0, %s48
    %s66 = sphi 0, %s66
    %s68 = sphi 0, %s66
    %s69 = sphi 0, %s68
    %s83 = sphi 0, %s69
    %s87 = sphi 0, %s87
    %s89 = sphi 0, %s87
    %s90 = sphi 0, %s89
    %s104 = sphi 0, %s90
    %s108 = sphi 0, %s108
    %s110 = sphi 0, %s108
    %s111 = sphi 0, %s110
    %s125 = sphi 0, %s111
    %s131 = sphi 0, %s133
    %s134 = sphi 0, %s131
    %s135 = sphi 0, %s134
    %s151 = sphi 0, %s135
  $region4: #{vgg_block_forward.1} parent=0 // loop_header_branch
    %14 = sbr.rel (%p12) target = $region8
  $region5: #{vgg_block_forward.1} parent=0 // loop_body
    %s16 = ssub.s32 %s11, 1
    %s17 = ssub.s32 %s11, 2
    %s18 = sadd.s32 %s11, 1
    %s19 = ssub.s32 %s11, %s18
    %p20 = scmp.eq.s32.totalorder %s19, 0
    %s22 = sadd.s32 %s21, 1
    %s23 = scalar_select %p20, %s21, %s22
    %p26 = pneg %p20
    %p27 = scmp.eq.s32.totalorder %s11, 1
    %p28 = por %p26, %p27
    %p29 = scmp.ne.s32.totalorder %s21, %s24
    %p30 = scmp.eq.s32.totalorder %s11, 0
    %p31 = por %p29, %p30
    %p32 = scmp.ne.s32.totalorder %s21, %s24
    %p33 = scmp.eq.s32.totalorder %s16, 1
    %p34 = por %p32, %p33
    %p35 = scmp.ne.s32.totalorder %s24, %s25
    %p36 = scmp.eq.s32.totalorder %s16, 0
    %p37 = por %p35, %p36
    %p38 = scmp.ne.s32.totalorder %s24, %s25
    %p39 = scmp.eq.s32.totalorder %s17, 1
    %p40 = por %p38, %p39
    %p42 = scmp.ne.s32.totalorder %s25, %s41
    %p43 = scmp.eq.s32.totalorder %s17, 0
    %p44 = por %p42, %p43
    %s46 = sadd.s32 %s45, 1
    %p49 = scmp.eq.s32.totalorder %s11, 1
    %p50 = scmp.ne.s32.totalorder %s45, %s47
    %p51 = scmp.eq.s32.totalorder %s11, 0
    %p52 = por %p50, %p51
    %p53 = scmp.ne.s32.totalorder %s45, %s47
    %p54 = scmp.eq.s32.totalorder %s16, 1
    %p55 = por %p53, %p54
    %p56 = scmp.ne.s32.totalorder %s47, %s48
    %p57 = scmp.eq.s32.totalorder %s16, 0
    %p58 = por %p56, %p57
    %p59 = scmp.ne.s32.totalorder %s47, %s48
    %p60 = scmp.eq.s32.totalorder %s17, 1
    %p61 = por %p59, %p60
    %p63 = scmp.ne.s32.totalorder %s48, %s62
    %p64 = scmp.eq.s32.totalorder %s17, 0
    %p65 = por %p63, %p64
    %s67 = sadd.s32 %s66, 1
    %p70 = scmp.eq.s32.totalorder %s11, 1
    %p71 = scmp.ne.s32.totalorder %s66, %s68
    %p72 = scmp.eq.s32.totalorder %s11, 0
    %p73 = por %p71, %p72
    %p74 = scmp.ne.s32.totalorder %s66, %s68
    %p75 = scmp.eq.s32.totalorder %s16, 1
    %p76 = por %p74, %p75
    %p77 = scmp.ne.s32.totalorder %s68, %s69
    %p78 = scmp.eq.s32.totalorder %s16, 0
    %p79 = por %p77, %p78
    %p80 = scmp.ne.s32.totalorder %s68, %s69
    %p81 = scmp.eq.s32.totalorder %s17, 1
    %p82 = por %p80, %p81
    %p84 = scmp.ne.s32.totalorder %s69, %s83
    %p85 = scmp.eq.s32.totalorder %s17, 0
    %p86 = por %p84, %p85
    %s88 = sadd.s32 %s87, 1
    %p91 = scmp.eq.s32.totalorder %s11, 1
    %p92 = scmp.ne.s32.totalorder %s87, %s89
    %p93 = scmp.eq.s32.totalorder %s11, 0
    %p94 = por %p92, %p93
    %p95 = scmp.ne.s32.totalorder %s87, %s89
    %p96 = scmp.eq.s32.totalorder %s16, 1
    %p97 = por %p95, %p96
    %p98 = scmp.ne.s32.totalorder %s89, %s90
    %p99 = scmp.eq.s32.totalorder %s16, 0
    %p100 = por %p98, %p99
    %p101 = scmp.ne.s32.totalorder %s89, %s90
    %p102 = scmp.eq.s32.totalorder %s17, 1
    %p103 = por %p101, %p102
    %p105 = scmp.ne.s32.totalorder %s90, %s104
    %p106 = scmp.eq.s32.totalorder %s17, 0
    %p107 = por %p105, %p106
    %s109 = sadd.s32 %s108, 1
    %p112 = scmp.eq.s32.totalorder %s11, 1
    %p113 = scmp.ne.s32.totalorder %s108, %s110
    %p114 = scmp.eq.s32.totalorder %s11, 0
    %p115 = por %p113, %p114
    %p116 = scmp.ne.s32.totalorder %s108, %s110
    %p117 = scmp.eq.s32.totalorder %s16, 1
    %p118 = por %p116, %p117
    %p119 = scmp.ne.s32.totalorder %s110, %s111
    %p120 = scmp.eq.s32.totalorder %s16, 0
    %p121 = por %p119, %p120
    %p122 = scmp.ne.s32.totalorder %s110, %s111
    %p123 = scmp.eq.s32.totalorder %s17, 1
    %p124 = por %p122, %p123
    %p126 = scmp.ne.s32.totalorder %s111, %s125
    %p127 = scmp.eq.s32.totalorder %s17, 0
    %p128 = por %p126, %p127
    %s129 = ssub.s32 %s11, %s18
    %p130 = scmp.eq.s32.totalorder %s129, 0
    %s132 = sadd.s32 %s131, 1
    %s133 = scalar_select %p130, %s131, %s132
    %p136 = pneg %p130
    %p137 = scmp.eq.s32.totalorder %s11, 1
    %p138 = por %p136, %p137
    %p139 = scmp.ne.s32.totalorder %s131, %s134
    %p140 = scmp.eq.s32.totalorder %s11, 0
    %p141 = por %p139, %p140
    %p142 = scmp.ne.s32.totalorder %s131, %s134
    %p143 = scmp.eq.s32.totalorder %s16, 1
    %p144 = por %p142, %p143
    %p145 = scmp.ne.s32.totalorder %s134, %s135
    %p146 = scmp.eq.s32.totalorder %s16, 0
    %p147 = por %p145, %p146
    %p148 = scmp.ne.s32.totalorder %s134, %s135
    %p149 = scmp.eq.s32.totalorder %s17, 1
    %p150 = por %p148, %p149
    %p152 = scmp.ne.s32.totalorder %s135, %s151
    %p153 = scmp.eq.s32.totalorder %s17, 0
    %p154 = por %p152, %p153
    %p155 = scmp.le.s32.totalorder 1, %s11
    %p156 = scmp.lt.s32.totalorder %s11, 3
    %p157 = pnand %p155, %p156
    %p158 = pneg %p157
    // Predicated region
    $region9: #{vgg_block_forward.1} parent=5 // pred_check
      _
    $region10: #{vgg_block_forward.1} parent=5 // pred_check_branch
      %160 = sbr.rel (%p157) target = $region12
    $region11: #{vgg_block_forward.1} parent=5 // pred_region
      %s161 = ssub.s32 %s11, 1
      // Predicated region
      $region13: #{vgg_block_forward.1} parent=11 // pred_check
        %p162 = pneg %p58
      $region14: #{vgg_block_forward.1} parent=11 // pred_check_branch
        %164 = sbr.rel (%p162) target = $region16
      $region15: #{vgg_block_forward.1} parent=11 // pred_region
        _
      $region16: #{vgg_block_forward.1} parent=11 // pred_fallthru
        _
      // Predicated region
      $region17: #{vgg_block_forward.1} parent=11 // pred_check
        %p165 = pneg %p79
      $region18: #{vgg_block_forward.1} parent=11 // pred_check_branch
        %167 = sbr.rel (%p165) target = $region20
      $region19: #{vgg_block_forward.1} parent=11 // pred_region
        _
      $region20: #{vgg_block_forward.1} parent=11 // pred_fallthru
        _
      // Predicated region
      $region21: #{vgg_block_forward.1} parent=11 // pred_check
        %p168 = pneg %p100
      $region22: #{vgg_block_forward.1} parent=11 // pred_check_branch
        %170 = sbr.rel (%p168) target = $region24
      $region23: #{vgg_block_forward.1} parent=11 // pred_region
        _
      $region24: #{vgg_block_forward.1} parent=11 // pred_fallthru
        _
      // Predicated region
      $region25: #{vgg_block_forward.1} parent=11 // pred_check
        %p171 = pneg %p121
      $region26: #{vgg_block_forward.1} parent=11 // pred_check_branch
        %173 = sbr.rel (%p171) target = $region28
      $region27: #{vgg_block_forward.1} parent=11 // pred_region
        _
      $region28: #{vgg_block_forward.1} parent=11 // pred_fallthru
        _
    $region12: #{vgg_block_forward.1} parent=5 // pred_fallthru
      _
    %p174 = scmp.lt.s32.totalorder %s11, 2
    // Predicated region
    $region29: #{vgg_block_forward.1} parent=5 // pred_check
      %p175 = pneg %p174
    $region30: #{vgg_block_forward.1} parent=5 // pred_check_branch
      %177 = sbr.rel (%p175) target = $region32
    $region31: #{vgg_block_forward.1} parent=5 // pred_region
      // Predicated region
      $region33: #{vgg_block_forward.1} parent=31 // pred_check
        %p178 = pneg %p31
      $region34: #{vgg_block_forward.1} parent=31 // pred_check_branch
        %180 = sbr.rel (%p178) target = $region36
      $region35: #{vgg_block_forward.1} parent=31 // pred_region
        %p181 = scmp.lt.s32.totalorder %s11, 1
        %s182 = scalar_select %p181, %s11, 1
        %s183 = smul.addr %s182, 32
        %s184 = smul.addr %s183, 8
        %s185 = scalar_lea.vmem %s0, %s184
      $region36: #{vgg_block_forward.1} parent=31 // pred_fallthru
        _
    $region32: #{vgg_block_forward.1} parent=5 // pred_fallthru
      _
    %p186 = scmp.le.s32.totalorder 1, %s11
    %p187 = scmp.lt.s32.totalorder %s11, 3
    %p188 = pnand %p186, %p187
    %p189 = pneg %p188
    // Predicated region
    $region37: #{vgg_block_forward.1} parent=5 // pred_check
      _
    $region38: #{vgg_block_forward.1} parent=5 // pred_check_branch
      %191 = sbr.rel (%p188) target = $region40
    $region39: #{vgg_block_forward.1} parent=5 // pred_region
      %s192 = ssub.s32 %s11, 1
      %p193 = scmp.lt.s32.totalorder %s16, 1
      %s194 = scalar_select %p193, %s16, 1
      %s195 = smul.addr %s194, 32
      %s196 = smul.addr %s195, 8
      %s197 = scalar_lea.vmem %s0, %s196
      %p198 = pneg %p37
      %p199 = pneg %p34
      %p200 = pneg %p58
      %p201 = pneg %p55
      %p202 = pneg %p79
      %p203 = pneg %p76
      %p204 = pneg %p100
      %p205 = pneg %p97
      %p206 = pneg %p121
      %p207 = pneg %p118
      %p208 = pneg %p147
      %p209 = pneg %p144
      %p210 = scmp.lt.s32.totalorder %s16, 1
      %s211 = scalar_select %p210, %s16, 1
      %s212 = smul.addr %s211, 4
      %s213 = smul.addr %s212, 8
      %s214 = scalar_lea.vmem %s5, %s213
      %p215 = scmp.lt.s32.totalorder %s16, 1
      %s216 = scalar_select %p215, %s16, 1
      %s217 = smul.addr %s216, 32
      %s218 = smul.addr %s217, 8
      %s219 = scalar_lea.vmem %s0, %s218
      %p220 = scmp.lt.s32.totalorder %s16, 1
      %s221 = scalar_select %p220, %s16, 1
      %s222 = smul.addr %s221, 4
      %s223 = smul.addr %s222, 8
      %s224 = scalar_lea.vmem %s5, %s223
      %vm225 = vcmask 31744
      %226 = vst.msk [vmem:[#allocation2] sm:$0xff] %vm225, 0.0
      %227 = vst.msk [vmem:[#allocation2 + $0x8] sm:$0xff] %vm225, 0.0
      %vm228 = vcmask 25600
      %229 = vst.msk [vmem:[#allocation2 + $0x10] sm:$0x3] %vm228, 0.0
      %230 = vst.msk [vmem:[#allocation2 + $0x18] sm:$0xff] %vm225, 0.0
      %231 = vst.msk [vmem:[#allocation2 + $0x20] sm:$0xff] %vm225, 0.0
      %232 = vst.msk [vmem:[#allocation2 + $0x28] sm:$0x3] %vm228, 0.0
      %233 = vst.msk [vmem:[#allocation2 + $0x30] sm:$0xff] %vm225, 0.0
      %234 = vst.msk [vmem:[#allocation2 + $0x38] sm:$0xff] %vm225, 0.0
      %235 = vst.msk [vmem:[#allocation2 + $0x40] sm:$0x3] %vm228, 0.0
      %236 = vst.msk [vmem:[#allocation2 + $0x48] sm:$0xff] %vm225, 0.0
      %237 = vst.msk [vmem:[#allocation2 + $0x50] sm:$0xff] %vm225, 0.0
      %238 = vst.msk [vmem:[#allocation2 + $0x58] sm:$0x3] %vm228, 0.0
      %239 = vst.msk [vmem:[#allocation2 + $0x60] sm:$0xff] %vm225, 0.0
      %240 = vst.msk [vmem:[#allocation2 + $0x68] sm:$0xff] %vm225, 0.0
      %241 = vst.msk [vmem:[#allocation2 + $0x70] sm:$0x3] %vm228, 0.0
      %242 = vst.msk [vmem:[#allocation2 + $0x78] sm:$0xff] %vm225, 0.0
      %243 = vst.msk [vmem:[#allocation2 + $0x80] sm:$0xff] %vm225, 0.0
      %244 = vst.msk [vmem:[#allocation2 + $0x88] sm:$0x3] %vm228, 0.0
      %245 = vst.msk [vmem:[#allocation2 + $0x90] sm:$0xff] %vm225, 0.0
      %246 = vst.msk [vmem:[#allocation2 + $0x98] sm:$0xff] %vm225, 0.0
      %247 = vst.msk [vmem:[#allocation2 + $0xa0] sm:$0x3] %vm228, 0.0
      %248 = vst.msk [vmem:[#allocation2 + $0xa8] sm:$0xff] %vm225, 0.0
      %249 = vst.msk [vmem:[#allocation2 + $0xb0] sm:$0xff] %vm225, 0.0
      %250 = vst.msk [vmem:[#allocation2 + $0xb8] sm:$0x3] %vm228, 0.0
      %251 = vst.msk [vmem:[#allocation2 + $0xc0] sm:$0xff] %vm225, 0.0
      %252 = vst.msk [vmem:[#allocation2 + $0xc8] sm:$0xff] %vm225, 0.0
      %253 = vst.msk [vmem:[#allocation2 + $0xd0] sm:$0x3] %vm228, 0.0
      %254 = vst.msk [vmem:[#allocation2 + $0xd8] sm:$0xff] %vm225, 0.0
      %255 = vst.msk [vmem:[#allocation2 + $0xe0] sm:$0xff] %vm225, 0.0
      %256 = vst.msk [vmem:[#allocation2 + $0xe8] sm:$0x3] %vm228, 0.0
      %257 = vst.msk [vmem:[#allocation2 + $0xf0] sm:$0xff] %vm225, 0.0
      %258 = vst.msk [vmem:[#allocation2 + $0xf8] sm:$0xff] %vm225, 0.0
      %259 = vst.msk [vmem:[#allocation2 + $0x100] sm:$0x3] %vm228, 0.0
      %260 = vst.msk [vmem:[#allocation2 + $0x108] sm:$0xff] %vm225, 0.0
      %261 = vst.msk [vmem:[#allocation2 + $0x110] sm:$0xff] %vm225, 0.0
      %262 = vst.msk [vmem:[#allocation2 + $0x118] sm:$0x3] %vm228, 0.0
      %263 = vst.msk [vmem:[#allocation2 + $0x120] sm:$0xff] %vm225, 0.0
      %264 = vst.msk [vmem:[#allocation2 + $0x128] sm:$0xff] %vm225, 0.0
      %265 = vst.msk [vmem:[#allocation2 + $0x130] sm:$0x3] %vm228, 0.0
      %266 = vst.msk [vmem:[#allocation2 + $0x138] sm:$0xff] %vm225, 0.0
      %267 = vst.msk [vmem:[#allocation2 + $0x140] sm:$0xff] %vm225, 0.0
      %268 = vst.msk [vmem:[#allocation2 + $0x148] sm:$0x3] %vm228, 0.0
      %269 = vst.msk [vmem:[#allocation2 + $0x150] sm:$0xff] %vm225, 0.0
      %270 = vst.msk [vmem:[#allocation2 + $0x158] sm:$0xff] %vm225, 0.0
      %271 = vst.msk [vmem:[#allocation2 + $0x160] sm:$0x3] %vm228, 0.0
      %272 = vst.msk [vmem:[#allocation2 + $0x168] sm:$0xff] %vm225, 0.0
      %273 = vst.msk [vmem:[#allocation2 + $0x170] sm:$0xff] %vm225, 0.0
      %274 = vst.msk [vmem:[#allocation2 + $0x178] sm:$0x3] %vm228, 0.0
      %275 = vst.msk [vmem:[#allocation2 + $0x180] sm:$0xff] %vm225, 0.0
      %276 = vst.msk [vmem:[#allocation2 + $0x188] sm:$0xff] %vm225, 0.0
      %277 = vst.msk [vmem:[#allocation2 + $0x190] sm:$0x3] %vm228, 0.0
      %278 = vst.msk [vmem:[#allocation2 + $0x198] sm:$0xff] %vm225, 0.0
      %279 = vst.msk [vmem:[#allocation2 + $0x1a0] sm:$0xff] %vm225, 0.0
      %280 = vst.msk [vmem:[#allocation2 + $0x1a8] sm:$0x3] %vm228, 0.0
      %v281 = vld [vmem:[%s219] sm:$0xff]
      %v282 = vld [vmem:[%s219 + $0x8] sm:$0xff]
      %v283 = vld [vmem:[%s219 + $0x10] sm:$0xff]
      %v284 = vld [vmem:[%s219 + $0x18] sm:$0xff]
      %v285 = vld [vmem:[%s219 + $0x20] sm:$0xff]
      %v286 = vld [vmem:[%s219 + $0x28] sm:$0xff]
      %v287 = vld [vmem:[%s219 + $0x30] sm:$0xff]
      %v288 = vld [vmem:[%s219 + $0x38] sm:$0xff]
      %v289 = vld [vmem:[%s219 + $0x40] sm:$0xff]
      %v290 = vld [vmem:[%s219 + $0x48] sm:$0xff]
      %v291 = vld [vmem:[%s219 + $0x50] sm:$0xff]
      %v292 = vld [vmem:[%s219 + $0x58] sm:$0xff]
      %v293 = vld [vmem:[%s219 + $0x60] sm:$0xff]
      %v294 = vld [vmem:[%s219 + $0x68] sm:$0xff]
      %v295 = vld [vmem:[%s219 + $0x70] sm:$0xff]
      %v296 = vld [vmem:[%s219 + $0x78] sm:$0xff]
      %v297 = vld [vmem:[%s219 + $0x80] sm:$0xff]
      %v298 = vld [vmem:[%s219 + $0x88] sm:$0xff]
      %v299 = vld [vmem:[%s219 + $0x90] sm:$0xff]
      %v300 = vld [vmem:[%s219 + $0x98] sm:$0xff]
      %v301 = vld [vmem:[%s219 + $0xa0] sm:$0xff]
      %v302 = vld [vmem:[%s219 + $0xa8] sm:$0xff]
      %v303 = vld [vmem:[%s219 + $0xb0] sm:$0xff]
      %v304 = vld [vmem:[%s219 + $0xb8] sm:$0xff]
      %v305 = vld [vmem:[%s219 + $0xc0] sm:$0xff]
      %v306 = vld [vmem:[%s219 + $0xc8] sm:$0xff]
      %v307 = vld [vmem:[%s219 + $0xd0] sm:$0xff]
      %v308 = vld [vmem:[%s219 + $0xd8] sm:$0xff]
      %v309 = vld [vmem:[%s219 + $0xe0] sm:$0xff]
      %v310 = vld [vmem:[%s219 + $0xe8] sm:$0xff]
      %v311 = vld [vmem:[%s219 + $0xf0] sm:$0xff]
      %v312 = vld [vmem:[%s219 + $0xf8] sm:$0xff]
      %s313 = scalar_lea.vmem [#allocation2], 24
      %314 = vst.msk [vmem:[%s313 + $0x1] sm:$0xff] %vm225, %v281
      %315 = vst.msk [vmem:[%s313 + $0x9] sm:$0xff] %vm225, %v282
      %316 = vst.msk [vmem:[%s313 + $0x19] sm:$0xff] %vm225, %v283
      %317 = vst.msk [vmem:[%s313 + $0x21] sm:$0xff] %vm225, %v284
      %318 = vst.msk [vmem:[%s313 + $0x31] sm:$0xff] %vm225, %v285
      %319 = vst.msk [vmem:[%s313 + $0x39] sm:$0xff] %vm225, %v286
      %320 = vst.msk [vmem:[%s313 + $0x49] sm:$0xff] %vm225, %v287
      %321 = vst.msk [vmem:[%s313 + $0x51] sm:$0xff] %vm225, %v288
      %322 = vst.msk [vmem:[%s313 + $0x61] sm:$0xff] %vm225, %v289
      %323 = vst.msk [vmem:[%s313 + $0x69] sm:$0xff] %vm225, %v290
      %324 = vst.msk [vmem:[%s313 + $0x79] sm:$0xff] %vm225, %v291
      %325 = vst.msk [vmem:[%s313 + $0x81] sm:$0xff] %vm225, %v292
      %326 = vst.msk [vmem:[%s313 + $0x91] sm:$0xff] %vm225, %v293
      %327 = vst.msk [vmem:[%s313 + $0x99] sm:$0xff] %vm225, %v294
      %328 = vst.msk [vmem:[%s313 + $0xa9] sm:$0xff] %vm225, %v295
      %329 = vst.msk [vmem:[%s313 + $0xb1] sm:$0xff] %vm225, %v296
      %330 = vst.msk [vmem:[%s313 + $0xc1] sm:$0xff] %vm225, %v297
      %331 = vst.msk [vmem:[%s313 + $0xc9] sm:$0xff] %vm225, %v298
      %332 = vst.msk [vmem:[%s313 + $0xd9] sm:$0xff] %vm225, %v299
      %333 = vst.msk [vmem:[%s313 + $0xe1] sm:$0xff] %vm225, %v300
      %334 = vst.msk [vmem:[%s313 + $0xf1] sm:$0xff] %vm225, %v301
      %335 = vst.msk [vmem:[%s313 + $0xf9] sm:$0xff] %vm225, %v302
      %336 = vst.msk [vmem:[%s313 + $0x109] sm:$0xff] %vm225, %v303
      %337 = vst.msk [vmem:[%s313 + $0x111] sm:$0xff] %vm225, %v304
      %338 = vst.msk [vmem:[%s313 + $0x121] sm:$0xff] %vm225, %v305
      %339 = vst.msk [vmem:[%s313 + $0x129] sm:$0xff] %vm225, %v306
      %340 = vst.msk [vmem:[%s313 + $0x139] sm:$0xff] %vm225, %v307
      %341 = vst.msk [vmem:[%s313 + $0x141] sm:$0xff] %vm225, %v308
      %342 = vst.msk [vmem:[%s313 + $0x151] sm:$0xff] %vm225, %v309
      %343 = vst.msk [vmem:[%s313 + $0x159] sm:$0xff] %vm225, %v310
      %344 = vst.msk [vmem:[%s313 + $0x169] sm:$0xff] %vm225, %v311
      %345 = vst.msk [vmem:[%s313 + $0x171] sm:$0xff] %vm225, %v312
      %vm346 = vcmask 261120
      %347 = vst.msk [vmem:[#allocation4] sm:$0xff] %vm346, 0.0
      %348 = vst.msk [vmem:[#allocation4 + $0x8] sm:$0xff] %vm346, 0.0
      %vm349 = vcmask 254976
      %350 = vst.msk [vmem:[#allocation4 + $0x10] sm:$0x3] %vm349, 0.0
      %351 = vst.msk [vmem:[#allocation4 + $0x18] sm:$0xff] %vm346, 0.0
      %352 = vst.msk [vmem:[#allocation4 + $0x20] sm:$0xff] %vm346, 0.0
      %353 = vst.msk [vmem:[#allocation4 + $0x28] sm:$0x3] %vm349, 0.0
      %354 = vst.msk [vmem:[#allocation4 + $0x30] sm:$0xff] %vm346, 0.0
      %355 = vst.msk [vmem:[#allocation4 + $0x38] sm:$0xff] %vm346, 0.0
      %356 = vst.msk [vmem:[#allocation4 + $0x40] sm:$0x3] %vm349, 0.0
      %357 = vst.msk [vmem:[#allocation4 + $0x48] sm:$0xff] %vm346, 0.0
      %358 = vst.msk [vmem:[#allocation4 + $0x50] sm:$0xff] %vm346, 0.0
      %359 = vst.msk [vmem:[#allocation4 + $0x58] sm:$0x3] %vm349, 0.0
      %360 = vst.msk [vmem:[#allocation4 + $0x60] sm:$0xff] %vm346, 0.0
      %361 = vst.msk [vmem:[#allocation4 + $0x68] sm:$0xff] %vm346, 0.0
      %362 = vst.msk [vmem:[#allocation4 + $0x70] sm:$0x3] %vm349, 0.0
      %363 = vst.msk [vmem:[#allocation4 + $0x78] sm:$0xff] %vm346, 0.0
      %364 = vst.msk [vmem:[#allocation4 + $0x80] sm:$0xff] %vm346, 0.0
      %365 = vst.msk [vmem:[#allocation4 + $0x88] sm:$0x3] %vm349, 0.0
      %366 = vst.msk [vmem:[#allocation4 + $0x90] sm:$0xff] %vm346, 0.0
      %367 = vst.msk [vmem:[#allocation4 + $0x98] sm:$0xff] %vm346, 0.0
      %368 = vst.msk [vmem:[#allocation4 + $0xa0] sm:$0x3] %vm349, 0.0
      %369 = vst.msk [vmem:[#allocation4 + $0xa8] sm:$0xff] %vm346, 0.0
      %370 = vst.msk [vmem:[#allocation4 + $0xb0] sm:$0xff] %vm346, 0.0
      %371 = vst.msk [vmem:[#allocation4 + $0xb8] sm:$0x3] %vm349, 0.0
      %372 = vst.msk [vmem:[#allocation4 + $0xc0] sm:$0xff] %vm346, 0.0
      %373 = vst.msk [vmem:[#allocation4 + $0xc8] sm:$0xff] %vm346, 0.0
      %374 = vst.msk [vmem:[#allocation4 + $0xd0] sm:$0x3] %vm349, 0.0
      %375 = vst.msk [vmem:[#allocation4 + $0xd8] sm:$0xff] %vm346, 0.0
      %376 = vst.msk [vmem:[#allocation4 + $0xe0] sm:$0xff] %vm346, 0.0
      %377 = vst.msk [vmem:[#allocation4 + $0xe8] sm:$0x3] %vm349, 0.0
      %378 = vst.msk [vmem:[#allocation4 + $0xf0] sm:$0xff] %vm346, 0.0
      %379 = vst.msk [vmem:[#allocation4 + $0xf8] sm:$0xff] %vm346, 0.0
      %380 = vst.msk [vmem:[#allocation4 + $0x100] sm:$0x3] %vm349, 0.0
      %381 = vst.msk [vmem:[#allocation4 + $0x108] sm:$0xff] %vm346, 0.0
      %382 = vst.msk [vmem:[#allocation4 + $0x110] sm:$0xff] %vm346, 0.0
      %383 = vst.msk [vmem:[#allocation4 + $0x118] sm:$0x3] %vm349, 0.0
      %384 = vst.msk [vmem:[#allocation4 + $0x120] sm:$0xff] %vm346, 0.0
      %385 = vst.msk [vmem:[#allocation4 + $0x128] sm:$0xff] %vm346, 0.0
      %386 = vst.msk [vmem:[#allocation4 + $0x130] sm:$0x3] %vm349, 0.0
      %387 = vst.msk [vmem:[#allocation4 + $0x138] sm:$0xff] %vm346, 0.0
      %388 = vst.msk [vmem:[#allocation4 + $0x140] sm:$0xff] %vm346, 0.0
      %389 = vst.msk [vmem:[#allocation4 + $0x148] sm:$0x3] %vm349, 0.0
      %390 = vst.msk [vmem:[#allocation4 + $0x150] sm:$0xff] %vm346, 0.0
      %391 = vst.msk [vmem:[#allocation4 + $0x158] sm:$0xff] %vm346, 0.0
      %392 = vst.msk [vmem:[#allocation4 + $0x160] sm:$0x3] %vm349, 0.0
      %393 = vst.msk [vmem:[#allocation4 + $0x168] sm:$0xff] %vm346, 0.0
      %394 = vst.msk [vmem:[#allocation4 + $0x170] sm:$0xff] %vm346, 0.0
      %395 = vst.msk [vmem:[#allocation4 + $0x178] sm:$0x3] %vm349, 0.0
      %396 = vst.msk [vmem:[#allocation4 + $0x180] sm:$0xff] %vm346, 0.0
      %397 = vst.msk [vmem:[#allocation4 + $0x188] sm:$0xff] %vm346, 0.0
      %398 = vst.msk [vmem:[#allocation4 + $0x190] sm:$0x3] %vm349, 0.0
      %399 = vst.msk [vmem:[#allocation4 + $0x198] sm:$0xff] %vm346, 0.0
      %400 = vst.msk [vmem:[#allocation4 + $0x1a0] sm:$0xff] %vm346, 0.0
      %401 = vst.msk [vmem:[#allocation4 + $0x1a8] sm:$0x3] %vm349, 0.0
      %v402 = vld [vmem:[%s1] sm:$0xff]
      %v403 = vld [vmem:[%s1 + $0x8] sm:$0xff]
      %v404 = vld [vmem:[%s1 + $0x10] sm:$0xff]
      %v405 = vld [vmem:[%s1 + $0x18] sm:$0xff]
      %v406 = vld [vmem:[%s1 + $0x20] sm:$0xf]
      %v407 = vld [vmem:[%s2] sm:$0x1]
      %v408 = vld [vmem:[#allocation2] sm:$0xff]
      %v409 = vld [vmem:[#allocation2 + $0x8] sm:$0xff]
      %v410 = vld [vmem:[#allocation2 + $0x18] sm:$0xff]
      %v411 = vld [vmem:[#allocation2 + $0x20] sm:$0xff]
      %v412 = vld [vmem:[#allocation2 + $0x30] sm:$0xff]
      %v413 = vld [vmem:[#allocation2 + $0x38] sm:$0xff]
      %v414 = vld [vmem:[#allocation2 + $0x48] sm:$0xff]
      %v415 = vld [vmem:[#allocation2 + $0x50] sm:$0xff]
      %v416 = vld [vmem:[#allocation2 + $0x60] sm:$0xff]
      %v417 = vld [vmem:[#allocation2 + $0x68] sm:$0xff]
      %v418 = vld [vmem:[#allocation2 + $0x78] sm:$0xff]
      %v419 = vld [vmem:[#allocation2 + $0x80] sm:$0xff]
      %v420 = vld [vmem:[#allocation2 + $0x90] sm:$0xff]
      %v421 = vld [vmem:[#allocation2 + $0x98] sm:$0xff]
      %v422 = vld [vmem:[#allocation2 + $0xa8] sm:$0xff]
      %v423 = vld [vmem:[#allocation2 + $0xb0] sm:$0xff]
      %v424 = vld [vmem:[#allocation2 + $0xc0] sm:$0xff]
      %v425 = vld [vmem:[#allocation2 + $0xc8] sm:$0xff]
      %v426 = vld [vmem:[#allocation2 + $0xd8] sm:$0xff]
      %v427 = vld [vmem:[#allocation2 + $0xe0] sm:$0xff]
      %v428 = vld [vmem:[#allocation2 + $0xf0] sm:$0xff]
      %v429 = vld [vmem:[#allocation2 + $0xf8] sm:$0xff]
      %v430 = vld [vmem:[#allocation2 + $0x108] sm:$0xff]
      %v431 = vld [vmem:[#allocation2 + $0x110] sm:$0xff]
      %v432 = vld [vmem:[#allocation2 + $0x120] sm:$0xff]
      %v433 = vld [vmem:[#allocation2 + $0x128] sm:$0xff]
      %v434 = vld [vmem:[#allocation2 + $0x138] sm:$0xff]
      %v435 = vld [vmem:[#allocation2 + $0x140] sm:$0xff]
      %v436 = vld [vmem:[#allocation2 + $0x150] sm:$0xff]
      %v437 = vld [vmem:[#allocation2 + $0x158] sm:$0xff]
      %v438 = vld [vmem:[#allocation2 + $0x168] sm:$0xff]
      %v439 = vld [vmem:[#allocation2 + $0x170] sm:$0xff]
      %440 = vst.msk [vmem:[#allocation3] sm:$0xff] %vm225, %v408
      %441 = vst.msk [vmem:[#allocation3 + $0x18] sm:$0xff] %vm225, %v409
      %442 = vst.msk [vmem:[#allocation3 + $0x30] sm:$0xff] %vm225, %v410
      %443 = vst.msk [vmem:[#allocation3 + $0x48] sm:$0xff] %vm225, %v411
      %444 = vst.msk [vmem:[#allocation3 + $0x60] sm:$0xff] %vm225, %v412
      %445 = vst.msk [vmem:[#allocation3 + $0x78] sm:$0xff] %vm225, %v413
      %446 = vst.msk [vmem:[#allocation3 + $0x90] sm:$0xff] %vm225, %v414
      %447 = vst.msk [vmem:[#allocation3 + $0xa8] sm:$0xff] %vm225, %v415
      %448 = vst.msk [vmem:[#allocation3 + $0xc0] sm:$0xff] %vm225, %v416
      %449 = vst.msk [vmem:[#allocation3 + $0xd8] sm:$0xff] %vm225, %v417
      %450 = vst.msk [vmem:[#allocation3 + $0xf0] sm:$0xff] %vm225, %v418
      %451 = vst.msk [vmem:[#allocation3 + $0x108] sm:$0xff] %vm225, %v419
      %452 = vst.msk [vmem:[#allocation3 + $0x120] sm:$0xff] %vm225, %v420
      %453 = vst.msk [vmem:[#allocation3 + $0x138] sm:$0xff] %vm225, %v421
      %454 = vst.msk [vmem:[#allocation3 + $0x150] sm:$0xff] %vm225, %v422
      %455 = vst.msk [vmem:[#allocation3 + $0x168] sm:$0xff] %vm225, %v423
      %456 = vst.msk [vmem:[#allocation3 + $0x180] sm:$0xff] %vm225, %v424
      %457 = vst.msk [vmem:[#allocation3 + $0x198] sm:$0xff] %vm225, %v425
      %458 = vst.msk [vmem:[#allocation3 + $0x1b0] sm:$0xff] %vm225, %v426
      %459 = vst.msk [vmem:[#allocation3 + $0x1c8] sm:$0xff] %vm225, %v427
      %460 = vst.msk [vmem:[#allocation3 + $0x1e0] sm:$0xff] %vm225, %v428
      %461 = vst.msk [vmem:[#allocation3 + $0x1f8] sm:$0xff] %vm225, %v429
      %462 = vst.msk [vmem:[#allocation3 + $0x210] sm:$0xff] %vm225, %v430
      %463 = vst.msk [vmem:[#allocation3 + $0x228] sm:$0xff] %vm225, %v431
      %464 = vst.msk [vmem:[#allocation3 + $0x240] sm:$0xff] %vm225, %v432
      %465 = vst.msk [vmem:[#allocation3 + $0x258] sm:$0xff] %vm225, %v433
      %466 = vst.msk [vmem:[#allocation3 + $0x270] sm:$0xff] %vm225, %v434
      %467 = vst.msk [vmem:[#allocation3 + $0x288] sm:$0xff] %vm225, %v435
      %468 = vst.msk [vmem:[#allocation3 + $0x2a0] sm:$0xff] %vm225, %v436
      %469 = vst.msk [vmem:[#allocation3 + $0x2b8] sm:$0xff] %vm225, %v437
      %470 = vst.msk [vmem:[#allocation3 + $0x2d0] sm:$0xff] %vm225, %v438
      %471 = vst.msk [vmem:[#allocation3 + $0x2e8] sm:$0xff] %vm225, %v439
      %v472 = vld [vmem:[#allocation2 + $0x1] sm:$0xff]
      %v473 = vld [vmem:[#allocation2 + $0x9] sm:$0xff]
      %v474 = vld [vmem:[#allocation2 + $0x19] sm:$0xff]
      %v475 = vld [vmem:[#allocation2 + $0x21] sm:$0xff]
      %v476 = vld [vmem:[#allocation2 + $0x31] sm:$0xff]
      %v477 = vld [vmem:[#allocation2 + $0x39] sm:$0xff]
      %v478 = vld [vmem:[#allocation2 + $0x49] sm:$0xff]
      %v479 = vld [vmem:[#allocation2 + $0x51] sm:$0xff]
      %v480 = vld [vmem:[#allocation2 + $0x61] sm:$0xff]
      %v481 = vld [vmem:[#allocation2 + $0x69] sm:$0xff]
      %v482 = vld [vmem:[#allocation2 + $0x79] sm:$0xff]
      %v483 = vld [vmem:[#allocation2 + $0x81] sm:$0xff]
      %v484 = vld [vmem:[#allocation2 + $0x91] sm:$0xff]
      %v485 = vld [vmem:[#allocation2 + $0x99] sm:$0xff]
      %v486 = vld [vmem:[#allocation2 + $0xa9] sm:$0xff]
      %v487 = vld [vmem:[#allocation2 + $0xb1] sm:$0xff]
      %v488 = vld [vmem:[#allocation2 + $0xc1] sm:$0xff]
      %v489 = vld [vmem:[#allocation2 + $0xc9] sm:$0xff]
      %v490 = vld [vmem:[#allocation2 + $0xd9] sm:$0xff]
      %v491 = vld [vmem:[#allocation2 + $0xe1] sm:$0xff]
      %v492 = vld [vmem:[#allocation2 + $0xf1] sm:$0xff]
      %v493 = vld [vmem:[#allocation2 + $0xf9] sm:$0xff]
      %v494 = vld [vmem:[#allocation2 + $0x109] sm:$0xff]
      %v495 = vld [vmem:[#allocation2 + $0x111] sm:$0xff]
      %v496 = vld [vmem:[#allocation2 + $0x121] sm:$0xff]
      %v497 = vld [vmem:[#allocation2 + $0x129] sm:$0xff]
      %v498 = vld [vmem:[#allocation2 + $0x139] sm:$0xff]
      %v499 = vld [vmem:[#allocation2 + $0x141] sm:$0xff]
      %v500 = vld [vmem:[#allocation2 + $0x151] sm:$0xff]
      %v501 = vld [vmem:[#allocation2 + $0x159] sm:$0xff]
      %v502 = vld [vmem:[#allocation2 + $0x169] sm:$0xff]
      %v503 = vld [vmem:[#allocation2 + $0x171] sm:$0xff]
      %536 = vrot.lane.b32.xlu0 %v472, 4
      %v537 = vpop.permute.xlu0 %536
      %538 = vrot.lane.b32.xlu0 %v473, 4
      %v539 = vpop.permute.xlu0 %538
      %540 = vrot.lane.b32.xlu0 %v474, 4
      %v541 = vpop.permute.xlu0 %540
      %542 = vrot.lane.b32.xlu0 %v475, 4
      %v543 = vpop.permute.xlu0 %542
      %544 = vrot.lane.b32.xlu0 %v476, 4
      %v545 = vpop.permute.xlu0 %544
      %546 = vrot.lane.b32.xlu0 %v477, 4
      %v547 = vpop.permute.xlu0 %546
      %548 = vrot.lane.b32.xlu0 %v478, 4
      %v549 = vpop.permute.xlu0 %548
      %550 = vrot.lane.b32.xlu0 %v479, 4
      %v551 = vpop.permute.xlu0 %550
      %552 = vrot.lane.b32.xlu0 %v480, 4
      %v553 = vpop.permute.xlu0 %552
      %554 = vrot.lane.b32.xlu0 %v481, 4
      %v555 = vpop.permute.xlu0 %554
      %556 = vrot.lane.b32.xlu0 %v482, 4
      %v557 = vpop.permute.xlu0 %556
      %558 = vrot.lane.b32.xlu0 %v483, 4
      %v559 = vpop.permute.xlu0 %558
      %560 = vrot.lane.b32.xlu0 %v484, 4
      %v561 = vpop.permute.xlu0 %560
      %562 = vrot.lane.b32.xlu0 %v485, 4
      %v563 = vpop.permute.xlu0 %562
      %564 = vrot.lane.b32.xlu0 %v486, 4
      %v565 = vpop.permute.xlu0 %564
      %566 = vrot.lane.b32.xlu0 %v487, 4
      %v567 = vpop.permute.xlu0 %566
      %568 = vrot.lane.b32.xlu0 %v488, 4
      %v569 = vpop.permute.xlu0 %568
      %570 = vrot.lane.b32.xlu0 %v489, 4
      %v571 = vpop.permute.xlu0 %570
      %572 = vrot.lane.b32.xlu0 %v490, 4
      %v573 = vpop.permute.xlu0 %572
      %574 = vrot.lane.b32.xlu0 %v491, 4
      %v575 = vpop.permute.xlu0 %574
      %576 = vrot.lane.b32.xlu0 %v492, 4
      %v577 = vpop.permute.xlu0 %576
      %578 = vrot.lane.b32.xlu0 %v493, 4
      %v579 = vpop.permute.xlu0 %578
      %580 = vrot.lane.b32.xlu0 %v494, 4
      %v581 = vpop.permute.xlu0 %580
      %582 = vrot.lane.b32.xlu0 %v495, 4
      %v583 = vpop.permute.xlu0 %582
      %584 = vrot.lane.b32.xlu0 %v496, 4
      %v585 = vpop.permute.xlu0 %584
      %586 = vrot.lane.b32.xlu0 %v497, 4
      %v587 = vpop.permute.xlu0 %586
      %588 = vrot.lane.b32.xlu0 %v498, 4
      %v589 = vpop.permute.xlu0 %588
      %590 = vrot.lane.b32.xlu0 %v499, 4
      %v591 = vpop.permute.xlu0 %590
      %592 = vrot.lane.b32.xlu0 %v500, 4
      %v593 = vpop.permute.xlu0 %592
      %594 = vrot.lane.b32.xlu0 %v501, 4
      %v595 = vpop.permute.xlu0 %594
      %596 = vrot.lane.b32.xlu0 %v502, 4
      %v597 = vpop.permute.xlu0 %596
      %598 = vrot.lane.b32.xlu0 %v503, 4
      %v599 = vpop.permute.xlu0 %598
      %vm632 = vcmask 64544
      %633 = vst.msk [vmem:[#allocation3] sm:$0xff] %vm632, %v537
      %634 = vst.msk [vmem:[#allocation3 + $0x18] sm:$0xff] %vm632, %v539
      %635 = vst.msk [vmem:[#allocation3 + $0x30] sm:$0xff] %vm632, %v541
      %636 = vst.msk [vmem:[#allocation3 + $0x48] sm:$0xff] %vm632, %v543
      %637 = vst.msk [vmem:[#allocation3 + $0x60] sm:$0xff] %vm632, %v545
      %638 = vst.msk [vmem:[#allocation3 + $0x78] sm:$0xff] %vm632, %v547
      %639 = vst.msk [vmem:[#allocation3 + $0x90] sm:$0xff] %vm632, %v549
      %640 = vst.msk [vmem:[#allocation3 + $0xa8] sm:$0xff] %vm632, %v551
      %641 = vst.msk [vmem:[#allocation3 + $0xc0] sm:$0xff] %vm632, %v553
      %642 = vst.msk [vmem:[#allocation3 + $0xd8] sm:$0xff] %vm632, %v555
      %643 = vst.msk [vmem:[#allocation3 + $0xf0] sm:$0xff] %vm632, %v557
      %644 = vst.msk [vmem:[#allocation3 + $0x108] sm:$0xff] %vm632, %v559
      %645 = vst.msk [vmem:[#allocation3 + $0x120] sm:$0xff] %vm632, %v561
      %646 = vst.msk [vmem:[#allocation3 + $0x138] sm:$0xff] %vm632, %v563
      %647 = vst.msk [vmem:[#allocation3 + $0x150] sm:$0xff] %vm632, %v565
      %648 = vst.msk [vmem:[#allocation3 + $0x168] sm:$0xff] %vm632, %v567
      %649 = vst.msk [vmem:[#allocation3 + $0x180] sm:$0xff] %vm632, %v569
      %650 = vst.msk [vmem:[#allocation3 + $0x198] sm:$0xff] %vm632, %v571
      %651 = vst.msk [vmem:[#allocation3 + $0x1b0] sm:$0xff] %vm632, %v573
      %652 = vst.msk [vmem:[#allocation3 + $0x1c8] sm:$0xff] %vm632, %v575
      %653 = vst.msk [vmem:[#allocation3 + $0x1e0] sm:$0xff] %vm632, %v577
      %654 = vst.msk [vmem:[#allocation3 + $0x1f8] sm:$0xff] %vm632, %v579
      %655 = vst.msk [vmem:[#allocation3 + $0x210] sm:$0xff] %vm632, %v581
      %656 = vst.msk [vmem:[#allocation3 + $0x228] sm:$0xff] %vm632, %v583
      %657 = vst.msk [vmem:[#allocation3 + $0x240] sm:$0xff] %vm632, %v585
      %658 = vst.msk [vmem:[#allocation3 + $0x258] sm:$0xff] %vm632, %v587
      %659 = vst.msk [vmem:[#allocation3 + $0x270] sm:$0xff] %vm632, %v589
      %660 = vst.msk [vmem:[#allocation3 + $0x288] sm:$0xff] %vm632, %v591
      %661 = vst.msk [vmem:[#allocation3 + $0x2a0] sm:$0xff] %vm632, %v593
      %662 = vst.msk [vmem:[#allocation3 + $0x2b8] sm:$0xff] %vm632, %v595
      %663 = vst.msk [vmem:[#allocation3 + $0x2d0] sm:$0xff] %vm632, %v597
      %664 = vst.msk [vmem:[#allocation3 + $0x2e8] sm:$0xff] %vm632, %v599
      %v665 = vld [vmem:[#allocation2 + $0x2] sm:$0xff]
      %v666 = vld [vmem:[#allocation2 + $0xa] sm:$0xff]
      %v667 = vld [vmem:[#allocation2 + $0x1a] sm:$0xff]
      %v668 = vld [vmem:[#allocation2 + $0x22] sm:$0xff]
      %v669 = vld [vmem:[#allocation2 + $0x32] sm:$0xff]
      %v670 = vld [vmem:[#allocation2 + $0x3a] sm:$0xff]
      %v671 = vld [vmem:[#allocation2 + $0x4a] sm:$0xff]
      %v672 = vld [vmem:[#allocation2 + $0x52] sm:$0xff]
      %v673 = vld [vmem:[#allocation2 + $0x62] sm:$0xff]
      %v674 = vld [vmem:[#allocation2 + $0x6a] sm:$0xff]
      %v675 = vld [vmem:[#allocation2 + $0x7a] sm:$0xff]
      %v676 = vld [vmem:[#allocation2 + $0x82] sm:$0xff]
      %v677 = vld [vmem:[#allocation2 + $0x92] sm:$0xff]
      %v678 = vld [vmem:[#allocation2 + $0x9a] sm:$0xff]
      %v679 = vld [vmem:[#allocation2 + $0xaa] sm:$0xff]
      %v680 = vld [vmem:[#allocation2 + $0xb2] sm:$0xff]
      %v681 = vld [vmem:[#allocation2 + $0xc2] sm:$0xff]
      %v682 = vld [vmem:[#allocation2 + $0xca] sm:$0xff]
      %v683 = vld [vmem:[#allocation2 + $0xda] sm:$0xff]
      %v684 = vld [vmem:[#allocation2 + $0xe2] sm:$0xff]
      %v685 = vld [vmem:[#allocation2 + $0xf2] sm:$0xff]
      %v686 = vld [vmem:[#allocation2 + $0xfa] sm:$0xff]
      %v687 = vld [vmem:[#allocation2 + $0x10a] sm:$0xff]
      %v688 = vld [vmem:[#allocation2 + $0x112] sm:$0xff]
      %v689 = vld [vmem:[#allocation2 + $0x122] sm:$0xff]
      %v690 = vld [vmem:[#allocation2 + $0x12a] sm:$0xff]
      %v691 = vld [vmem:[#allocation2 + $0x13a] sm:$0xff]
      %v692 = vld [vmem:[#allocation2 + $0x142] sm:$0xff]
      %v693 = vld [vmem:[#allocation2 + $0x152] sm:$0xff]
      %v694 = vld [vmem:[#allocation2 + $0x15a] sm:$0xff]
      %v695 = vld [vmem:[#allocation2 + $0x16a] sm:$0xff]
      %v696 = vld [vmem:[#allocation2 + $0x172] sm:$0xff]
      %729 = vrot.lane.b32.xlu0 %v665, 8
      %v730 = vpop.permute.xlu0 %729
      %731 = vrot.lane.b32.xlu0 %v666, 8
      %v732 = vpop.permute.xlu0 %731
      %733 = vrot.lane.b32.xlu0 %v667, 8
      %v734 = vpop.permute.xlu0 %733
      %735 = vrot.lane.b32.xlu0 %v668, 8
      %v736 = vpop.permute.xlu0 %735
      %737 = vrot.lane.b32.xlu0 %v669, 8
      %v738 = vpop.permute.xlu0 %737
      %739 = vrot.lane.b32.xlu0 %v670, 8
      %v740 = vpop.permute.xlu0 %739
      %741 = vrot.lane.b32.xlu0 %v671, 8
      %v742 = vpop.permute.xlu0 %741
      %743 = vrot.lane.b32.xlu0 %v672, 8
      %v744 = vpop.permute.xlu0 %743
      %745 = vrot.lane.b32.xlu0 %v673, 8
      %v746 = vpop.permute.xlu0 %745
      %747 = vrot.lane.b32.xlu0 %v674, 8
      %v748 = vpop.permute.xlu0 %747
      %749 = vrot.lane.b32.xlu0 %v675, 8
      %v750 = vpop.permute.xlu0 %749
      %751 = vrot.lane.b32.xlu0 %v676, 8
      %v752 = vpop.permute.xlu0 %751
      %753 = vrot.lane.b32.xlu0 %v677, 8
      %v754 = vpop.permute.xlu0 %753
      %755 = vrot.lane.b32.xlu0 %v678, 8
      %v756 = vpop.permute.xlu0 %755
      %757 = vrot.lane.b32.xlu0 %v679, 8
      %v758 = vpop.permute.xlu0 %757
      %759 = vrot.lane.b32.xlu0 %v680, 8
      %v760 = vpop.permute.xlu0 %759
      %761 = vrot.lane.b32.xlu0 %v681, 8
      %v762 = vpop.permute.xlu0 %761
      %763 = vrot.lane.b32.xlu0 %v682, 8
      %v764 = vpop.permute.xlu0 %763
      %765 = vrot.lane.b32.xlu0 %v683, 8
      %v766 = vpop.permute.xlu0 %765
      %767 = vrot.lane.b32.xlu0 %v684, 8
      %v768 = vpop.permute.xlu0 %767
      %769 = vrot.lane.b32.xlu0 %v685, 8
      %v770 = vpop.permute.xlu0 %769
      %771 = vrot.lane.b32.xlu0 %v686, 8
      %v772 = vpop.permute.xlu0 %771
      %773 = vrot.lane.b32.xlu0 %v687, 8
      %v774 = vpop.permute.xlu0 %773
      %775 = vrot.lane.b32.xlu0 %v688, 8
      %v776 = vpop.permute.xlu0 %775
      %777 = vrot.lane.b32.xlu0 %v689, 8
      %v778 = vpop.permute.xlu0 %777
      %779 = vrot.lane.b32.xlu0 %v690, 8
      %v780 = vpop.permute.xlu0 %779
      %781 = vrot.lane.b32.xlu0 %v691, 8
      %v782 = vpop.permute.xlu0 %781
      %783 = vrot.lane.b32.xlu0 %v692, 8
      %v784 = vpop.permute.xlu0 %783
      %785 = vrot.lane.b32.xlu0 %v693, 8
      %v786 = vpop.permute.xlu0 %785
      %787 = vrot.lane.b32.xlu0 %v694, 8
      %v788 = vpop.permute.xlu0 %787
      %789 = vrot.lane.b32.xlu0 %v695, 8
      %v790 = vpop.permute.xlu0 %789
      %791 = vrot.lane.b32.xlu0 %v696, 8
      %v792 = vpop.permute.xlu0 %791
      %vm825 = vcmask 97344
      %826 = vst.msk [vmem:[#allocation3] sm:$0xff] %vm825, %v730
      %827 = vst.msk [vmem:[#allocation3 + $0x18] sm:$0xff] %vm825, %v732
      %828 = vst.msk [vmem:[#allocation3 + $0x30] sm:$0xff] %vm825, %v734
      %829 = vst.msk [vmem:[#allocation3 + $0x48] sm:$0xff] %vm825, %v736
      %830 = vst.msk [vmem:[#allocation3 + $0x60] sm:$0xff] %vm825, %v738
      %831 = vst.msk [vmem:[#allocation3 + $0x78] sm:$0xff] %vm825, %v740
      %832 = vst.msk [vmem:[#allocation3 + $0x90] sm:$0xff] %vm825, %v742
      %833 = vst.msk [vmem:[#allocation3 + $0xa8] sm:$0xff] %vm825, %v744
      %834 = vst.msk [vmem:[#allocation3 + $0xc0] sm:$0xff] %vm825, %v746
      %835 = vst.msk [vmem:[#allocation3 + $0xd8] sm:$0xff] %vm825, %v748
      %836 = vst.msk [vmem:[#allocation3 + $0xf0] sm:$0xff] %vm825, %v750
      %837 = vst.msk [vmem:[#allocation3 + $0x108] sm:$0xff] %vm825, %v752
      %838 = vst.msk [vmem:[#allocation3 + $0x120] sm:$0xff] %vm825, %v754
      %839 = vst.msk [vmem:[#allocation3 + $0x138] sm:$0xff] %vm825, %v756
      %840 = vst.msk [vmem:[#allocation3 + $0x150] sm:$0xff] %vm825, %v758
      %841 = vst.msk [vmem:[#allocation3 + $0x168] sm:$0xff] %vm825, %v760
      %842 = vst.msk [vmem:[#allocation3 + $0x180] sm:$0xff] %vm825, %v762
      %843 = vst.msk [vmem:[#allocation3 + $0x198] sm:$0xff] %vm825, %v764
      %844 = vst.msk [vmem:[#allocation3 + $0x1b0] sm:$0xff] %vm825, %v766
      %845 = vst.msk [vmem:[#allocation3 + $0x1c8] sm:$0xff] %vm825, %v768
      %846 = vst.msk [vmem:[#allocation3 + $0x1e0] sm:$0xff] %vm825, %v770
      %847 = vst.msk [vmem:[#allocation3 + $0x1f8] sm:$0xff] %vm825, %v772
      %848 = vst.msk [vmem:[#allocation3 + $0x210] sm:$0xff] %vm825, %v774
      %849 = vst.msk [vmem:[#allocation3 + $0x228] sm:$0xff] %vm825, %v776
      %850 = vst.msk [vmem:[#allocation3 + $0x240] sm:$0xff] %vm825, %v778
      %851 = vst.msk [vmem:[#allocation3 + $0x258] sm:$0xff] %vm825, %v780
      %852 = vst.msk [vmem:[#allocation3 + $0x270] sm:$0xff] %vm825, %v782
      %853 = vst.msk [vmem:[#allocation3 + $0x288] sm:$0xff] %vm825, %v784
      %854 = vst.msk [vmem:[#allocation3 + $0x2a0] sm:$0xff] %vm825, %v786
      %855 = vst.msk [vmem:[#allocation3 + $0x2b8] sm:$0xff] %vm825, %v788
      %856 = vst.msk [vmem:[#allocation3 + $0x2d0] sm:$0xff] %vm825, %v790
      %857 = vst.msk [vmem:[#allocation3 + $0x2e8] sm:$0xff] %vm825, %v792
      %v858 = vld [vmem:[%s313] sm:$0xff]
      %v859 = vld [vmem:[%s313 + $0x8] sm:$0xff]
      %v860 = vld [vmem:[%s313 + $0x18] sm:$0xff]
      %v861 = vld [vmem:[%s313 + $0x20] sm:$0xff]
      %v862 = vld [vmem:[%s313 + $0x30] sm:$0xff]
      %v863 = vld [vmem:[%s313 + $0x38] sm:$0xff]
      %v864 = vld [vmem:[%s313 + $0x48] sm:$0xff]
      %v865 = vld [vmem:[%s313 + $0x50] sm:$0xff]
      %v866 = vld [vmem:[%s313 + $0x60] sm:$0xff]
      %v867 = vld [vmem:[%s313 + $0x68] sm:$0xff]
      %v868 = vld [vmem:[%s313 + $0x78] sm:$0xff]
      %v869 = vld [vmem:[%s313 + $0x80] sm:$0xff]
      %v870 = vld [vmem:[%s313 + $0x90] sm:$0xff]
      %v871 = vld [vmem:[%s313 + $0x98] sm:$0xff]
      %v872 = vld [vmem:[%s313 + $0xa8] sm:$0xff]
      %v873 = vld [vmem:[%s313 + $0xb0] sm:$0xff]
      %v874 = vld [vmem:[%s313 + $0xc0] sm:$0xff]
      %v875 = vld [vmem:[%s313 + $0xc8] sm:$0xff]
      %v876 = vld [vmem:[%s313 + $0xd8] sm:$0xff]
      %v877 = vld [vmem:[%s313 + $0xe0] sm:$0xff]
      %v878 = vld [vmem:[%s313 + $0xf0] sm:$0xff]
      %v879 = vld [vmem:[%s313 + $0xf8] sm:$0xff]
      %v880 = vld [vmem:[%s313 + $0x108] sm:$0xff]
      %v881 = vld [vmem:[%s313 + $0x110] sm:$0xff]
      %v882 = vld [vmem:[%s313 + $0x120] sm:$0xff]
      %v883 = vld [vmem:[%s313 + $0x128] sm:$0xff]
      %v884 = vld [vmem:[%s313 + $0x138] sm:$0xff]
      %v885 = vld [vmem:[%s313 + $0x140] sm:$0xff]
      %v886 = vld [vmem:[%s313 + $0x150] sm:$0xff]
      %v887 = vld [vmem:[%s313 + $0x158] sm:$0xff]
      %v888 = vld [vmem:[%s313 + $0x168] sm:$0xff]
      %v889 = vld [vmem:[%s313 + $0x170] sm:$0xff]
      %922 = vrot.lane.b32.xlu0 %v858, 12
      %v923 = vpop.permute.xlu0 %922
      %924 = vrot.lane.b32.xlu0 %v859, 12
      %v925 = vpop.permute.xlu0 %924
      %926 = vrot.lane.b32.xlu0 %v860, 12
      %v927 = vpop.permute.xlu0 %926
      %928 = vrot.lane.b32.xlu0 %v861, 12
      %v929 = vpop.permute.xlu0 %928
      %930 = vrot.lane.b32.xlu0 %v862, 12
      %v931 = vpop.permute.xlu0 %930
      %932 = vrot.lane.b32.xlu0 %v863, 12
      %v933 = vpop.permute.xlu0 %932
      %934 = vrot.lane.b32.xlu0 %v864, 12
      %v935 = vpop.permute.xlu0 %934
      %936 = vrot.lane.b32.xlu0 %v865, 12
      %v937 = vpop.permute.xlu0 %936
      %938 = vrot.lane.b32.xlu0 %v866, 12
      %v939 = vpop.permute.xlu0 %938
      %940 = vrot.lane.b32.xlu0 %v867, 12
      %v941 = vpop.permute.xlu0 %940
      %942 = vrot.lane.b32.xlu0 %v868, 12
      %v943 = vpop.permute.xlu0 %942
      %944 = vrot.lane.b32.xlu0 %v869, 12
      %v945 = vpop.permute.xlu0 %944
      %946 = vrot.lane.b32.xlu0 %v870, 12
      %v947 = vpop.permute.xlu0 %946
      %948 = vrot.lane.b32.xlu0 %v871, 12
      %v949 = vpop.permute.xlu0 %948
      %950 = vrot.lane.b32.xlu0 %v872, 12
      %v951 = vpop.permute.xlu0 %950
      %952 = vrot.lane.b32.xlu0 %v873, 12
      %v953 = vpop.permute.xlu0 %952
      %954 = vrot.lane.b32.xlu0 %v874, 12
      %v955 = vpop.permute.xlu0 %954
      %956 = vrot.lane.b32.xlu0 %v875, 12
      %v957 = vpop.permute.xlu0 %956
      %958 = vrot.lane.b32.xlu0 %v876, 12
      %v959 = vpop.permute.xlu0 %958
      %960 = vrot.lane.b32.xlu0 %v877, 12
      %v961 = vpop.permute.xlu0 %960
      %962 = vrot.lane.b32.xlu0 %v878, 12
      %v963 = vpop.permute.xlu0 %962
      %964 = vrot.lane.b32.xlu0 %v879, 12
      %v965 = vpop.permute.xlu0 %964
      %966 = vrot.lane.b32.xlu0 %v880, 12
      %v967 = vpop.permute.xlu0 %966
      %968 = vrot.lane.b32.xlu0 %v881, 12
      %v969 = vpop.permute.xlu0 %968
      %970 = vrot.lane.b32.xlu0 %v882, 12
      %v971 = vpop.permute.xlu0 %970
      %972 = vrot.lane.b32.xlu0 %v883, 12
      %v973 = vpop.permute.xlu0 %972
      %974 = vrot.lane.b32.xlu0 %v884, 12
      %v975 = vpop.permute.xlu0 %974
      %976 = vrot.lane.b32.xlu0 %v885, 12
      %v977 = vpop.permute.xlu0 %976
      %978 = vrot.lane.b32.xlu0 %v886, 12
      %v979 = vpop.permute.xlu0 %978
      %980 = vrot.lane.b32.xlu0 %v887, 12
      %v981 = vpop.permute.xlu0 %980
      %982 = vrot.lane.b32.xlu0 %v888, 12
      %v983 = vpop.permute.xlu0 %982
      %984 = vrot.lane.b32.xlu0 %v889, 12
      %v985 = vpop.permute.xlu0 %984
      %vm1018 = vcmask 130144
      %1019 = vst.msk [vmem:[#allocation3] sm:$0xff] %vm1018, %v923
      %1020 = vst.msk [vmem:[#allocation3 + $0x18] sm:$0xff] %vm1018, %v925
      %1021 = vst.msk [vmem:[#allocation3 + $0x30] sm:$0xff] %vm1018, %v927
      %1022 = vst.msk [vmem:[#allocation3 + $0x48] sm:$0xff] %vm1018, %v929
      %1023 = vst.msk [vmem:[#allocation3 + $0x60] sm:$0xff] %vm1018, %v931
      %1024 = vst.msk [vmem:[#allocation3 + $0x78] sm:$0xff] %vm1018, %v933
      %1025 = vst.msk [vmem:[#allocation3 + $0x90] sm:$0xff] %vm1018, %v935
      %1026 = vst.msk [vmem:[#allocation3 + $0xa8] sm:$0xff] %vm1018, %v937
      %1027 = vst.msk [vmem:[#allocation3 + $0xc0] sm:$0xff] %vm1018, %v939
      %1028 = vst.msk [vmem:[#allocation3 + $0xd8] sm:$0xff] %vm1018, %v941
      %1029 = vst.msk [vmem:[#allocation3 + $0xf0] sm:$0xff] %vm1018, %v943
      %1030 = vst.msk [vmem:[#allocation3 + $0x108] sm:$0xff] %vm1018, %v945
      %1031 = vst.msk [vmem:[#allocation3 + $0x120] sm:$0xff] %vm1018, %v947
      %1032 = vst.msk [vmem:[#allocation3 + $0x138] sm:$0xff] %vm1018, %v949
      %1033 = vst.msk [vmem:[#allocation3 + $0x150] sm:$0xff] %vm1018, %v951
      %1034 = vst.msk [vmem:[#allocation3 + $0x168] sm:$0xff] %vm1018, %v953
      %1035 = vst.msk [vmem:[#allocation3 + $0x180] sm:$0xff] %vm1018, %v955
      %1036 = vst.msk [vmem:[#allocation3 + $0x198] sm:$0xff] %vm1018, %v957
      %1037 = vst.msk [vmem:[#allocation3 + $0x1b0] sm:$0xff] %vm1018, %v959
      %1038 = vst.msk [vmem:[#allocation3 + $0x1c8] sm:$0xff] %vm1018, %v961
      %1039 = vst.msk [vmem:[#allocation3 + $0x1e0] sm:$0xff] %vm1018, %v963
      %1040 = vst.msk [vmem:[#allocation3 + $0x1f8] sm:$0xff] %vm1018, %v965
      %1041 = vst.msk [vmem:[#allocation3 + $0x210] sm:$0xff] %vm1018, %v967
      %1042 = vst.msk [vmem:[#allocation3 + $0x228] sm:$0xff] %vm1018, %v969
      %1043 = vst.msk [vmem:[#allocation3 + $0x240] sm:$0xff] %vm1018, %v971
      %1044 = vst.msk [vmem:[#allocation3 + $0x258] sm:$0xff] %vm1018, %v973
      %1045 = vst.msk [vmem:[#allocation3 + $0x270] sm:$0xff] %vm1018, %v975
      %1046 = vst.msk [vmem:[#allocation3 + $0x288] sm:$0xff] %vm1018, %v977
      %1047 = vst.msk [vmem:[#allocation3 + $0x2a0] sm:$0xff] %vm1018, %v979
      %1048 = vst.msk [vmem:[#allocation3 + $0x2b8] sm:$0xff] %vm1018, %v981
      %1049 = vst.msk [vmem:[#allocation3 + $0x2d0] sm:$0xff] %vm1018, %v983
      %1050 = vst.msk [vmem:[#allocation3 + $0x2e8] sm:$0xff] %vm1018, %v985
      %v1051 = vld [vmem:[%s313 + $0x1] sm:$0xff]
      %v1052 = vld [vmem:[%s313 + $0x9] sm:$0xff]
      %v1053 = vld [vmem:[%s313 + $0x19] sm:$0xff]
      %v1054 = vld [vmem:[%s313 + $0x21] sm:$0xff]
      %v1055 = vld [vmem:[%s313 + $0x31] sm:$0xff]
      %v1056 = vld [vmem:[%s313 + $0x39] sm:$0xff]
      %v1057 = vld [vmem:[%s313 + $0x49] sm:$0xff]
      %v1058 = vld [vmem:[%s313 + $0x51] sm:$0xff]
      %v1059 = vld [vmem:[%s313 + $0x61] sm:$0xff]
      %v1060 = vld [vmem:[%s313 + $0x69] sm:$0xff]
      %v1061 = vld [vmem:[%s313 + $0x79] sm:$0xff]
      %v1062 = vld [vmem:[%s313 + $0x81] sm:$0xff]
      %v1063 = vld [vmem:[%s313 + $0x91] sm:$0xff]
      %v1064 = vld [vmem:[%s313 + $0x99] sm:$0xff]
      %v1065 = vld [vmem:[%s313 + $0xa9] sm:$0xff]
      %v1066 = vld [vmem:[%s313 + $0xb1] sm:$0xff]
      %v1067 = vld [vmem:[%s313 + $0xc1] sm:$0xff]
      %v1068 = vld [vmem:[%s313 + $0xc9] sm:$0xff]
      %v1069 = vld [vmem:[%s313 + $0xd9] sm:$0xff]
      %v1070 = vld [vmem:[%s313 + $0xe1] sm:$0xff]
      %v1071 = vld [vmem:[%s313 + $0xf1] sm:$0xff]
      %v1072 = vld [vmem:[%s313 + $0xf9] sm:$0xff]
      %v1073 = vld [vmem:[%s313 + $0x109] sm:$0xff]
      %v1074 = vld [vmem:[%s313 + $0x111] sm:$0xff]
      %v1075 = vld [vmem:[%s313 + $0x121] sm:$0xff]
      %v1076 = vld [vmem:[%s313 + $0x129] sm:$0xff]
      %v1077 = vld [vmem:[%s313 + $0x139] sm:$0xff]
      %v1078 = vld [vmem:[%s313 + $0x141] sm:$0xff]
      %v1079 = vld [vmem:[%s313 + $0x151] sm:$0xff]
      %v1080 = vld [vmem:[%s313 + $0x159] sm:$0xff]
      %v1081 = vld [vmem:[%s313 + $0x169] sm:$0xff]
      %v1082 = vld [vmem:[%s313 + $0x171] sm:$0xff]
      %1115 = vrot.lane.b32.xlu0 %v1051, 16
      %v1116 = vpop.permute.xlu0 %1115
      %1117 = vrot.lane.b32.xlu0 %v1052, 16
      %v1118 = vpop.permute.xlu0 %1117
      %1119 = vrot.lane.b32.xlu0 %v1053, 16
      %v1120 = vpop.permute.xlu0 %1119
      %1121 = vrot.lane.b32.xlu0 %v1054, 16
      %v1122 = vpop.permute.xlu0 %1121
      %1123 = vrot.lane.b32.xlu0 %v1055, 16
      %v1124 = vpop.permute.xlu0 %1123
      %1125 = vrot.lane.b32.xlu0 %v1056, 16
      %v1126 = vpop.permute.xlu0 %1125
      %1127 = vrot.lane.b32.xlu0 %v1057, 16
      %v1128 = vpop.permute.xlu0 %1127
      %1129 = vrot.lane.b32.xlu0 %v1058, 16
      %v1130 = vpop.permute.xlu0 %1129
      %1131 = vrot.lane.b32.xlu0 %v1059, 16
      %v1132 = vpop.permute.xlu0 %1131
      %1133 = vrot.lane.b32.xlu0 %v1060, 16
      %v1134 = vpop.permute.xlu0 %1133
      %1135 = vrot.lane.b32.xlu0 %v1061, 16
      %v1136 = vpop.permute.xlu0 %1135
      %1137 = vrot.lane.b32.xlu0 %v1062, 16
      %v1138 = vpop.permute.xlu0 %1137
      %1139 = vrot.lane.b32.xlu0 %v1063, 16
      %v1140 = vpop.permute.xlu0 %1139
      %1141 = vrot.lane.b32.xlu0 %v1064, 16
      %v1142 = vpop.permute.xlu0 %1141
      %1143 = vrot.lane.b32.xlu0 %v1065, 16
      %v1144 = vpop.permute.xlu0 %1143
      %1145 = vrot.lane.b32.xlu0 %v1066, 16
      %v1146 = vpop.permute.xlu0 %1145
      %1147 = vrot.lane.b32.xlu0 %v1067, 16
      %v1148 = vpop.permute.xlu0 %1147
      %1149 = vrot.lane.b32.xlu0 %v1068, 16
      %v1150 = vpop.permute.xlu0 %1149
      %1151 = vrot.lane.b32.xlu0 %v1069, 16
      %v1152 = vpop.permute.xlu0 %1151
      %1153 = vrot.lane.b32.xlu0 %v1070, 16
      %v1154 = vpop.permute.xlu0 %1153
      %1155 = vrot.lane.b32.xlu0 %v1071, 16
      %v1156 = vpop.permute.xlu0 %1155
      %1157 = vrot.lane.b32.xlu0 %v1072, 16
      %v1158 = vpop.permute.xlu0 %1157
      %1159 = vrot.lane.b32.xlu0 %v1073, 16
      %v1160 = vpop.permute.xlu0 %1159
      %1161 = vrot.lane.b32.xlu0 %v1074, 16
      %v1162 = vpop.permute.xlu0 %1161
      %1163 = vrot.lane.b32.xlu0 %v1075, 16
      %v1164 = vpop.permute.xlu0 %1163
      %1165 = vrot.lane.b32.xlu0 %v1076, 16
      %v1166 = vpop.permute.xlu0 %1165
      %1167 = vrot.lane.b32.xlu0 %v1077, 16
      %v1168 = vpop.permute.xlu0 %1167
      %1169 = vrot.lane.b32.xlu0 %v1078, 16
      %v1170 = vpop.permute.xlu0 %1169
      %1171 = vrot.lane.b32.xlu0 %v1079, 16
      %v1172 = vpop.permute.xlu0 %1171
      %1173 = vrot.lane.b32.xlu0 %v1080, 16
      %v1174 = vpop.permute.xlu0 %1173
      %1175 = vrot.lane.b32.xlu0 %v1081, 16
      %v1176 = vpop.permute.xlu0 %1175
      %1177 = vrot.lane.b32.xlu0 %v1082, 16
      %v1178 = vpop.permute.xlu0 %1177
      %vm1211 = vcmask 162944
      %1212 = vst.msk [vmem:[#allocation3] sm:$0xff] %vm1211, %v1116
      %1213 = vst.msk [vmem:[#allocation3 + $0x18] sm:$0xff] %vm1211, %v1118
      %1214 = vst.msk [vmem:[#allocation3 + $0x30] sm:$0xff] %vm1211, %v1120
      %1215 = vst.msk [vmem:[#allocation3 + $0x48] sm:$0xff] %vm1211, %v1122
      %1216 = vst.msk [vmem:[#allocation3 + $0x60] sm:$0xff] %vm1211, %v1124
      %1217 = vst.msk [vmem:[#allocation3 + $0x78] sm:$0xff] %vm1211, %v1126
      %1218 = vst.msk [vmem:[#allocation3 + $0x90] sm:$0xff] %vm1211, %v1128
      %1219 = vst.msk [vmem:[#allocation3 + $0xa8] sm:$0xff] %vm1211, %v1130
      %1220 = vst.msk [vmem:[#allocation3 + $0xc0] sm:$0xff] %vm1211, %v1132
      %1221 = vst.msk [vmem:[#allocation3 + $0xd8] sm:$0xff] %vm1211, %v1134
      %1222 = vst.msk [vmem:[#allocation3 + $0xf0] sm:$0xff] %vm1211, %v1136
      %1223 = vst.msk [vmem:[#allocation3 + $0x108] sm:$0xff] %vm1211, %v1138
      %1224 = vst.msk [vmem:[#allocation3 + $0x120] sm:$0xff] %vm1211, %v1140
      %1225 = vst.msk [vmem:[#allocation3 + $0x138] sm:$0xff] %vm1211, %v1142
      %1226 = vst.msk [vmem:[#allocation3 + $0x150] sm:$0xff] %vm1211, %v1144
      %1227 = vst.msk [vmem:[#allocation3 + $0x168] sm:$0xff] %vm1211, %v1146
      %1228 = vst.msk [vmem:[#allocation3 + $0x180] sm:$0xff] %vm1211, %v1148
      %1229 = vst.msk [vmem:[#allocation3 + $0x198] sm:$0xff] %vm1211, %v1150
      %1230 = vst.msk [vmem:[#allocation3 + $0x1b0] sm:$0xff] %vm1211, %v1152
      %1231 = vst.msk [vmem:[#allocation3 + $0x1c8] sm:$0xff] %vm1211, %v1154
      %1232 = vst.msk [vmem:[#allocation3 + $0x1e0] sm:$0xff] %vm1211, %v1156
      %1233 = vst.msk [vmem:[#allocation3 + $0x1f8] sm:$0xff] %vm1211, %v1158
      %1234 = vst.msk [vmem:[#allocation3 + $0x210] sm:$0xff] %vm1211, %v1160
      %1235 = vst.msk [vmem:[#allocation3 + $0x228] sm:$0xff] %vm1211, %v1162
      %1236 = vst.msk [vmem:[#allocation3 + $0x240] sm:$0xff] %vm1211, %v1164
      %1237 = vst.msk [vmem:[#allocation3 + $0x258] sm:$0xff] %vm1211, %v1166
      %1238 = vst.msk [vmem:[#allocation3 + $0x270] sm:$0xff] %vm1211, %v1168
      %1239 = vst.msk [vmem:[#allocation3 + $0x288] sm:$0xff] %vm1211, %v1170
      %1240 = vst.msk [vmem:[#allocation3 + $0x2a0] sm:$0xff] %vm1211, %v1172
      %1241 = vst.msk [vmem:[#allocation3 + $0x2b8] sm:$0xff] %vm1211, %v1174
      %1242 = vst.msk [vmem:[#allocation3 + $0x2d0] sm:$0xff] %vm1211, %v1176
      %1243 = vst.msk [vmem:[#allocation3 + $0x2e8] sm:$0xff] %vm1211, %v1178
      %v1244 = vld [vmem:[%s313 + $0x2] sm:$0xff]
      %v1245 = vld [vmem:[%s313 + $0xa] sm:$0xff]
      %v1246 = vld [vmem:[%s313 + $0x1a] sm:$0xff]
      %v1247 = vld [vmem:[%s313 + $0x22] sm:$0xff]
      %v1248 = vld [vmem:[%s313 + $0x32] sm:$0xff]
      %v1249 = vld [vmem:[%s313 + $0x3a] sm:$0xff]
      %v1250 = vld [vmem:[%s313 + $0x4a] sm:$0xff]
      %v1251 = vld [vmem:[%s313 + $0x52] sm:$0xff]
      %v1252 = vld [vmem:[%s313 + $0x62] sm:$0xff]
      %v1253 = vld [vmem:[%s313 + $0x6a] sm:$0xff]
      %v1254 = vld [vmem:[%s313 + $0x7a] sm:$0xff]
      %v1255 = vld [vmem:[%s313 + $0x82] sm:$0xff]
      %v1256 = vld [vmem:[%s313 + $0x92] sm:$0xff]
      %v1257 = vld [vmem:[%s313 + $0x9a] sm:$0xff]
      %v1258 = vld [vmem:[%s313 + $0xaa] sm:$0xff]
      %v1259 = vld [vmem:[%s313 + $0xb2] sm:$0xff]
      %v1260 = vld [vmem:[%s313 + $0xc2] sm:$0xff]
      %v1261 = vld [vmem:[%s313 + $0xca] sm:$0xff]
      %v1262 = vld [vmem:[%s313 + $0xda] sm:$0xff]
      %v1263 = vld [vmem:[%s313 + $0xe2] sm:$0xff]
      %v1264 = vld [vmem:[%s313 + $0xf2] sm:$0xff]
      %v1265 = vld [vmem:[%s313 + $0xfa] sm:$0xff]
      %v1266 = vld [vmem:[%s313 + $0x10a] sm:$0xff]
      %v1267 = vld [vmem:[%s313 + $0x112] sm:$0xff]
      %v1268 = vld [vmem:[%s313 + $0x122] sm:$0xff]
      %v1269 = vld [vmem:[%s313 + $0x12a] sm:$0xff]
      %v1270 = vld [vmem:[%s313 + $0x13a] sm:$0xff]
      %v1271 = vld [vmem:[%s313 + $0x142] sm:$0xff]
      %v1272 = vld [vmem:[%s313 + $0x152] sm:$0xff]
      %v1273 = vld [vmem:[%s313 + $0x15a] sm:$0xff]
      %v1274 = vld [vmem:[%s313 + $0x16a] sm:$0xff]
      %v1275 = vld [vmem:[%s313 + $0x172] sm:$0xff]
      %1308 = vrot.lane.b32.xlu0 %v1244, 20
      %v1309 = vpop.permute.xlu0 %1308
      %1310 = vrot.lane.b32.xlu0 %v1245, 20
      %v1311 = vpop.permute.xlu0 %1310
      %1312 = vrot.lane.b32.xlu0 %v1246, 20
      %v1313 = vpop.permute.xlu0 %1312
      %1314 = vrot.lane.b32.xlu0 %v1247, 20
      %v1315 = vpop.permute.xlu0 %1314
      %1316 = vrot.lane.b32.xlu0 %v1248, 20
      %v1317 = vpop.permute.xlu0 %1316
      %1318 = vrot.lane.b32.xlu0 %v1249, 20
      %v1319 = vpop.permute.xlu0 %1318
      %1320 = vrot.lane.b32.xlu0 %v1250, 20
      %v1321 = vpop.permute.xlu0 %1320
      %1322 = vrot.lane.b32.xlu0 %v1251, 20
      %v1323 = vpop.permute.xlu0 %1322
      %1324 = vrot.lane.b32.xlu0 %v1252, 20
      %v1325 = vpop.permute.xlu0 %1324
      %1326 = vrot.lane.b32.xlu0 %v1253, 20
      %v1327 = vpop.permute.xlu0 %1326
      %1328 = vrot.lane.b32.xlu0 %v1254, 20
      %v1329 = vpop.permute.xlu0 %1328
      %1330 = vrot.lane.b32.xlu0 %v1255, 20
      %v1331 = vpop.permute.xlu0 %1330
      %1332 = vrot.lane.b32.xlu0 %v1256, 20
      %v1333 = vpop.permute.xlu0 %1332
      %1334 = vrot.lane.b32.xlu0 %v1257, 20
      %v1335 = vpop.permute.xlu0 %1334
      %1336 = vrot.lane.b32.xlu0 %v1258, 20
      %v1337 = vpop.permute.xlu0 %1336
      %1338 = vrot.lane.b32.xlu0 %v1259, 20
      %v1339 = vpop.permute.xlu0 %1338
      %1340 = vrot.lane.b32.xlu0 %v1260, 20
      %v1341 = vpop.permute.xlu0 %1340
      %1342 = vrot.lane.b32.xlu0 %v1261, 20
      %v1343 = vpop.permute.xlu0 %1342
      %1344 = vrot.lane.b32.xlu0 %v1262, 20
      %v1345 = vpop.permute.xlu0 %1344
      %1346 = vrot.lane.b32.xlu0 %v1263, 20
      %v1347 = vpop.permute.xlu0 %1346
      %1348 = vrot.lane.b32.xlu0 %v1264, 20
      %v1349 = vpop.permute.xlu0 %1348
      %1350 = vrot.lane.b32.xlu0 %v1265, 20
      %v1351 = vpop.permute.xlu0 %1350
      %1352 = vrot.lane.b32.xlu0 %v1266, 20
      %v1353 = vpop.permute.xlu0 %1352
      %1354 = vrot.lane.b32.xlu0 %v1267, 20
      %v1355 = vpop.permute.xlu0 %1354
      %1356 = vrot.lane.b32.xlu0 %v1268, 20
      %v1357 = vpop.permute.xlu0 %1356
      %1358 = vrot.lane.b32.xlu0 %v1269, 20
      %v1359 = vpop.permute.xlu0 %1358
      %1360 = vrot.lane.b32.xlu0 %v1270, 20
      %v1361 = vpop.permute.xlu0 %1360
      %1362 = vrot.lane.b32.xlu0 %v1271, 20
      %v1363 = vpop.permute.xlu0 %1362
      %1364 = vrot.lane.b32.xlu0 %v1272, 20
      %v1365 = vpop.permute.xlu0 %1364
      %1366 = vrot.lane.b32.xlu0 %v1273, 20
      %v1367 = vpop.permute.xlu0 %1366
      %1368 = vrot.lane.b32.xlu0 %v1274, 20
      %v1369 = vpop.permute.xlu0 %1368
      %1370 = vrot.lane.b32.xlu0 %v1275, 20
      %v1371 = vpop.permute.xlu0 %1370
      %vm1404 = vcmask 195744
      %1405 = vst.msk [vmem:[#allocation3] sm:$0xff] %vm1404, %v1309
      %1406 = vst.msk [vmem:[#allocation3 + $0x18] sm:$0xff] %vm1404, %v1311
      %1407 = vst.msk [vmem:[#allocation3 + $0x30] sm:$0xff] %vm1404, %v1313
      %1408 = vst.msk [vmem:[#allocation3 + $0x48] sm:$0xff] %vm1404, %v1315
      %1409 = vst.msk [vmem:[#allocation3 + $0x60] sm:$0xff] %vm1404, %v1317
      %1410 = vst.msk [vmem:[#allocation3 + $0x78] sm:$0xff] %vm1404, %v1319
      %1411 = vst.msk [vmem:[#allocation3 + $0x90] sm:$0xff] %vm1404, %v1321
      %1412 = vst.msk [vmem:[#allocation3 + $0xa8] sm:$0xff] %vm1404, %v1323
      %1413 = vst.msk [vmem:[#allocation3 + $0xc0] sm:$0xff] %vm1404, %v1325
      %1414 = vst.msk [vmem:[#allocation3 + $0xd8] sm:$0xff] %vm1404, %v1327
      %1415 = vst.msk [vmem:[#allocation3 + $0xf0] sm:$0xff] %vm1404, %v1329
      %1416 = vst.msk [vmem:[#allocation3 + $0x108] sm:$0xff] %vm1404, %v1331
      %1417 = vst.msk [vmem:[#allocation3 + $0x120] sm:$0xff] %vm1404, %v1333
      %1418 = vst.msk [vmem:[#allocation3 + $0x138] sm:$0xff] %vm1404, %v1335
      %1419 = vst.msk [vmem:[#allocation3 + $0x150] sm:$0xff] %vm1404, %v1337
      %1420 = vst.msk [vmem:[#allocation3 + $0x168] sm:$0xff] %vm1404, %v1339
      %1421 = vst.msk [vmem:[#allocation3 + $0x180] sm:$0xff] %vm1404, %v1341
      %1422 = vst.msk [vmem:[#allocation3 + $0x198] sm:$0xff] %vm1404, %v1343
      %1423 = vst.msk [vmem:[#allocation3 + $0x1b0] sm:$0xff] %vm1404, %v1345
      %1424 = vst.msk [vmem:[#allocation3 + $0x1c8] sm:$0xff] %vm1404, %v1347
      %1425 = vst.msk [vmem:[#allocation3 + $0x1e0] sm:$0xff] %vm1404, %v1349
      %1426 = vst.msk [vmem:[#allocation3 + $0x1f8] sm:$0xff] %vm1404, %v1351
      %1427 = vst.msk [vmem:[#allocation3 + $0x210] sm:$0xff] %vm1404, %v1353
      %1428 = vst.msk [vmem:[#allocation3 + $0x228] sm:$0xff] %vm1404, %v1355
      %1429 = vst.msk [vmem:[#allocation3 + $0x240] sm:$0xff] %vm1404, %v1357
      %1430 = vst.msk [vmem:[#allocation3 + $0x258] sm:$0xff] %vm1404, %v1359
      %1431 = vst.msk [vmem:[#allocation3 + $0x270] sm:$0xff] %vm1404, %v1361
      %1432 = vst.msk [vmem:[#allocation3 + $0x288] sm:$0xff] %vm1404, %v1363
      %1433 = vst.msk [vmem:[#allocation3 + $0x2a0] sm:$0xff] %vm1404, %v1365
      %1434 = vst.msk [vmem:[#allocation3 + $0x2b8] sm:$0xff] %vm1404, %v1367
      %1435 = vst.msk [vmem:[#allocation3 + $0x2d0] sm:$0xff] %vm1404, %v1369
      %1436 = vst.msk [vmem:[#allocation3 + $0x2e8] sm:$0xff] %vm1404, %v1371
      %s1437 = scalar_lea.vmem [#allocation2], 48
      %v1438 = vld [vmem:[%s1437] sm:$0xff]
      %v1439 = vld [vmem:[%s1437 + $0x8] sm:$0xff]
      %v1440 = vld [vmem:[%s1437 + $0x18] sm:$0xff]
      %v1441 = vld [vmem:[%s1437 + $0x20] sm:$0xff]
      %v1442 = vld [vmem:[%s1437 + $0x30] sm:$0xff]
      %v1443 = vld [vmem:[%s1437 + $0x38] sm:$0xff]
      %v1444 = vld [vmem:[%s1437 + $0x48] sm:$0xff]
      %v1445 = vld [vmem:[%s1437 + $0x50] sm:$0xff]
      %v1446 = vld [vmem:[%s1437 + $0x60] sm:$0xff]
      %v1447 = vld [vmem:[%s1437 + $0x68] sm:$0xff]
      %v1448 = vld [vmem:[%s1437 + $0x78] sm:$0xff]
      %v1449 = vld [vmem:[%s1437 + $0x80] sm:$0xff]
      %v1450 = vld [vmem:[%s1437 + $0x90] sm:$0xff]
      %v1451 = vld [vmem:[%s1437 + $0x98] sm:$0xff]
      %v1452 = vld [vmem:[%s1437 + $0xa8] sm:$0xff]
      %v1453 = vld [vmem:[%s1437 + $0xb0] sm:$0xff]
      %v1454 = vld [vmem:[%s1437 + $0xc0] sm:$0xff]
      %v1455 = vld [vmem:[%s1437 + $0xc8] sm:$0xff]
      %v1456 = vld [vmem:[%s1437 + $0xd8] sm:$0xff]
      %v1457 = vld [vmem:[%s1437 + $0xe0] sm:$0xff]
      %v1458 = vld [vmem:[%s1437 + $0xf0] sm:$0xff]
      %v1459 = vld [vmem:[%s1437 + $0xf8] sm:$0xff]
      %v1460 = vld [vmem:[%s1437 + $0x108] sm:$0xff]
      %v1461 = vld [vmem:[%s1437 + $0x110] sm:$0xff]
      %v1462 = vld [vmem:[%s1437 + $0x120] sm:$0xff]
      %v1463 = vld [vmem:[%s1437 + $0x128] sm:$0xff]
      %v1464 = vld [vmem:[%s1437 + $0x138] sm:$0xff]
      %v1465 = vld [vmem:[%s1437 + $0x140] sm:$0xff]
      %v1466 = vld [vmem:[%s1437 + $0x150] sm:$0xff]
      %v1467 = vld [vmem:[%s1437 + $0x158] sm:$0xff]
      %v1468 = vld [vmem:[%s1437 + $0x168] sm:$0xff]
      %v1469 = vld [vmem:[%s1437 + $0x170] sm:$0xff]
      %1502 = vrot.lane.b32.xlu0 %v1438, 24
      %v1503 = vpop.permute.xlu0 %1502
      %1504 = vrot.lane.b32.xlu0 %v1439, 24
      %v1505 = vpop.permute.xlu0 %1504
      %1506 = vrot.lane.b32.xlu0 %v1440, 24
      %v1507 = vpop.permute.xlu0 %1506
      %1508 = vrot.lane.b32.xlu0 %v1441, 24
      %v1509 = vpop.permute.xlu0 %1508
      %1510 = vrot.lane.b32.xlu0 %v1442, 24
      %v1511 = vpop.permute.xlu0 %1510
      %1512 = vrot.lane.b32.xlu0 %v1443, 24
      %v1513 = vpop.permute.xlu0 %1512
      %1514 = vrot.lane.b32.xlu0 %v1444, 24
      %v1515 = vpop.permute.xlu0 %1514
      %1516 = vrot.lane.b32.xlu0 %v1445, 24
      %v1517 = vpop.permute.xlu0 %1516
      %1518 = vrot.lane.b32.xlu0 %v1446, 24
      %v1519 = vpop.permute.xlu0 %1518
      %1520 = vrot.lane.b32.xlu0 %v1447, 24
      %v1521 = vpop.permute.xlu0 %1520
      %1522 = vrot.lane.b32.xlu0 %v1448, 24
      %v1523 = vpop.permute.xlu0 %1522
      %1524 = vrot.lane.b32.xlu0 %v1449, 24
      %v1525 = vpop.permute.xlu0 %1524
      %1526 = vrot.lane.b32.xlu0 %v1450, 24
      %v1527 = vpop.permute.xlu0 %1526
      %1528 = vrot.lane.b32.xlu0 %v1451, 24
      %v1529 = vpop.permute.xlu0 %1528
      %1530 = vrot.lane.b32.xlu0 %v1452, 24
      %v1531 = vpop.permute.xlu0 %1530
      %1532 = vrot.lane.b32.xlu0 %v1453, 24
      %v1533 = vpop.permute.xlu0 %1532
      %1534 = vrot.lane.b32.xlu0 %v1454, 24
      %v1535 = vpop.permute.xlu0 %1534
      %1536 = vrot.lane.b32.xlu0 %v1455, 24
      %v1537 = vpop.permute.xlu0 %1536
      %1538 = vrot.lane.b32.xlu0 %v1456, 24
      %v1539 = vpop.permute.xlu0 %1538
      %1540 = vrot.lane.b32.xlu0 %v1457, 24
      %v1541 = vpop.permute.xlu0 %1540
      %1542 = vrot.lane.b32.xlu0 %v1458, 24
      %v1543 = vpop.permute.xlu0 %1542
      %1544 = vrot.lane.b32.xlu0 %v1459, 24
      %v1545 = vpop.permute.xlu0 %1544
      %1546 = vrot.lane.b32.xlu0 %v1460, 24
      %v1547 = vpop.permute.xlu0 %1546
      %1548 = vrot.lane.b32.xlu0 %v1461, 24
      %v1549 = vpop.permute.xlu0 %1548
      %1550 = vrot.lane.b32.xlu0 %v1462, 24
      %v1551 = vpop.permute.xlu0 %1550
      %1552 = vrot.lane.b32.xlu0 %v1463, 24
      %v1553 = vpop.permute.xlu0 %1552
      %1554 = vrot.lane.b32.xlu0 %v1464, 24
      %v1555 = vpop.permute.xlu0 %1554
      %1556 = vrot.lane.b32.xlu0 %v1465, 24
      %v1557 = vpop.permute.xlu0 %1556
      %1558 = vrot.lane.b32.xlu0 %v1466, 24
      %v1559 = vpop.permute.xlu0 %1558
      %1560 = vrot.lane.b32.xlu0 %v1467, 24
      %v1561 = vpop.permute.xlu0 %1560
      %1562 = vrot.lane.b32.xlu0 %v1468, 24
      %v1563 = vpop.permute.xlu0 %1562
      %1564 = vrot.lane.b32.xlu0 %v1469, 24
      %v1565 = vpop.permute.xlu0 %1564
      %vm1598 = vcmask 228544
      %1599 = vst.msk [vmem:[#allocation3] sm:$0xff] %vm1598, %v1503
      %1600 = vst.msk [vmem:[#allocation3 + $0x18] sm:$0xff] %vm1598, %v1505
      %1601 = vst.msk [vmem:[#allocation3 + $0x30] sm:$0xff] %vm1598, %v1507
      %1602 = vst.msk [vmem:[#allocation3 + $0x48] sm:$0xff] %vm1598, %v1509
      %1603 = vst.msk [vmem:[#allocation3 + $0x60] sm:$0xff] %vm1598, %v1511
      %1604 = vst.msk [vmem:[#allocation3 + $0x78] sm:$0xff] %vm1598, %v1513
      %1605 = vst.msk [vmem:[#allocation3 + $0x90] sm:$0xff] %vm1598, %v1515
      %1606 = vst.msk [vmem:[#allocation3 + $0xa8] sm:$0xff] %vm1598, %v1517
      %1607 = vst.msk [vmem:[#allocation3 + $0xc0] sm:$0xff] %vm1598, %v1519
      %1608 = vst.msk [vmem:[#allocation3 + $0xd8] sm:$0xff] %vm1598, %v1521
      %1609 = vst.msk [vmem:[#allocation3 + $0xf0] sm:$0xff] %vm1598, %v1523
      %1610 = vst.msk [vmem:[#allocation3 + $0x108] sm:$0xff] %vm1598, %v1525
      %1611 = vst.msk [vmem:[#allocation3 + $0x120] sm:$0xff] %vm1598, %v1527
      %1612 = vst.msk [vmem:[#allocation3 + $0x138] sm:$0xff] %vm1598, %v1529
      %1613 = vst.msk [vmem:[#allocation3 + $0x150] sm:$0xff] %vm1598, %v1531
      %1614 = vst.msk [vmem:[#allocation3 + $0x168] sm:$0xff] %vm1598, %v1533
      %1615 = vst.msk [vmem:[#allocation3 + $0x180] sm:$0xff] %vm1598, %v1535
      %1616 = vst.msk [vmem:[#allocation3 + $0x198] sm:$0xff] %vm1598, %v1537
      %1617 = vst.msk [vmem:[#allocation3 + $0x1b0] sm:$0xff] %vm1598, %v1539
      %1618 = vst.msk [vmem:[#allocation3 + $0x1c8] sm:$0xff] %vm1598, %v1541
      %1619 = vst.msk [vmem:[#allocation3 + $0x1e0] sm:$0xff] %vm1598, %v1543
      %1620 = vst.msk [vmem:[#allocation3 + $0x1f8] sm:$0xff] %vm1598, %v1545
      %1621 = vst.msk [vmem:[#allocation3 + $0x210] sm:$0xff] %vm1598, %v1547
      %1622 = vst.msk [vmem:[#allocation3 + $0x228] sm:$0xff] %vm1598, %v1549
      %1623 = vst.msk [vmem:[#allocation3 + $0x240] sm:$0xff] %vm1598, %v1551
      %1624 = vst.msk [vmem:[#allocation3 + $0x258] sm:$0xff] %vm1598, %v1553
      %1625 = vst.msk [vmem:[#allocation3 + $0x270] sm:$0xff] %vm1598, %v1555
      %1626 = vst.msk [vmem:[#allocation3 + $0x288] sm:$0xff] %vm1598, %v1557
      %1627 = vst.msk [vmem:[#allocation3 + $0x2a0] sm:$0xff] %vm1598, %v1559
      %1628 = vst.msk [vmem:[#allocation3 + $0x2b8] sm:$0xff] %vm1598, %v1561
      %1629 = vst.msk [vmem:[#allocation3 + $0x2d0] sm:$0xff] %vm1598, %v1563
      %1630 = vst.msk [vmem:[#allocation3 + $0x2e8] sm:$0xff] %vm1598, %v1565
      %v1631 = vld [vmem:[%s1437 + $0x1] sm:$0xff]
      %v1632 = vld [vmem:[%s1437 + $0x9] sm:$0xff]
      %v1633 = vld [vmem:[%s1437 + $0x19] sm:$0xff]
      %v1634 = vld [vmem:[%s1437 + $0x21] sm:$0xff]
      %v1635 = vld [vmem:[%s1437 + $0x31] sm:$0xff]
      %v1636 = vld [vmem:[%s1437 + $0x39] sm:$0xff]
      %v1637 = vld [vmem:[%s1437 + $0x49] sm:$0xff]
      %v1638 = vld [vmem:[%s1437 + $0x51] sm:$0xff]
      %v1639 = vld [vmem:[%s1437 + $0x61] sm:$0xff]
      %v1640 = vld [vmem:[%s1437 + $0x69] sm:$0xff]
      %v1641 = vld [vmem:[%s1437 + $0x79] sm:$0xff]
      %v1642 = vld [vmem:[%s1437 + $0x81] sm:$0xff]
      %v1643 = vld [vmem:[%s1437 + $0x91] sm:$0xff]
      %v1644 = vld [vmem:[%s1437 + $0x99] sm:$0xff]
      %v1645 = vld [vmem:[%s1437 + $0xa9] sm:$0xff]
      %v1646 = vld [vmem:[%s1437 + $0xb1] sm:$0xff]
      %v1647 = vld [vmem:[%s1437 + $0xc1] sm:$0xff]
      %v1648 = vld [vmem:[%s1437 + $0xc9] sm:$0xff]
      %v1649 = vld [vmem:[%s1437 + $0xd9] sm:$0xff]
      %v1650 = vld [vmem:[%s1437 + $0xe1] sm:$0xff]
      %v1651 = vld [vmem:[%s1437 + $0xf1] sm:$0xff]
      %v1652 = vld [vmem:[%s1437 + $0xf9] sm:$0xff]
      %v1653 = vld [vmem:[%s1437 + $0x109] sm:$0xff]
      %v1654 = vld [vmem:[%s1437 + $0x111] sm:$0xff]
      %v1655 = vld [vmem:[%s1437 + $0x121] sm:$0xff]
      %v1656 = vld [vmem:[%s1437 + $0x129] sm:$0xff]
      %v1657 = vld [vmem:[%s1437 + $0x139] sm:$0xff]
      %v1658 = vld [vmem:[%s1437 + $0x141] sm:$0xff]
      %v1659 = vld [vmem:[%s1437 + $0x151] sm:$0xff]
      %v1660 = vld [vmem:[%s1437 + $0x159] sm:$0xff]
      %v1661 = vld [vmem:[%s1437 + $0x169] sm:$0xff]
      %v1662 = vld [vmem:[%s1437 + $0x171] sm:$0xff]
      %1695 = vrot.lane.b32.xlu0 %v1631, 28
      %v1696 = vpop.permute.xlu0 %1695
      %1697 = vrot.lane.b32.xlu0 %v1632, 28
      %v1698 = vpop.permute.xlu0 %1697
      %1699 = vrot.lane.b32.xlu0 %v1633, 28
      %v1700 = vpop.permute.xlu0 %1699
      %1701 = vrot.lane.b32.xlu0 %v1634, 28
      %v1702 = vpop.permute.xlu0 %1701
      %1703 = vrot.lane.b32.xlu0 %v1635, 28
      %v1704 = vpop.permute.xlu0 %1703
      %1705 = vrot.lane.b32.xlu0 %v1636, 28
      %v1706 = vpop.permute.xlu0 %1705
      %1707 = vrot.lane.b32.xlu0 %v1637, 28
      %v1708 = vpop.permute.xlu0 %1707
      %1709 = vrot.lane.b32.xlu0 %v1638, 28
      %v1710 = vpop.permute.xlu0 %1709
      %1711 = vrot.lane.b32.xlu0 %v1639, 28
      %v1712 = vpop.permute.xlu0 %1711
      %1713 = vrot.lane.b32.xlu0 %v1640, 28
      %v1714 = vpop.permute.xlu0 %1713
      %1715 = vrot.lane.b32.xlu0 %v1641, 28
      %v1716 = vpop.permute.xlu0 %1715
      %1717 = vrot.lane.b32.xlu0 %v1642, 28
      %v1718 = vpop.permute.xlu0 %1717
      %1719 = vrot.lane.b32.xlu0 %v1643, 28
      %v1720 = vpop.permute.xlu0 %1719
      %1721 = vrot.lane.b32.xlu0 %v1644, 28
      %v1722 = vpop.permute.xlu0 %1721
      %1723 = vrot.lane.b32.xlu0 %v1645, 28
      %v1724 = vpop.permute.xlu0 %1723
      %1725 = vrot.lane.b32.xlu0 %v1646, 28
      %v1726 = vpop.permute.xlu0 %1725
      %1727 = vrot.lane.b32.xlu0 %v1647, 28
      %v1728 = vpop.permute.xlu0 %1727
      %1729 = vrot.lane.b32.xlu0 %v1648, 28
      %v1730 = vpop.permute.xlu0 %1729
      %1731 = vrot.lane.b32.xlu0 %v1649, 28
      %v1732 = vpop.permute.xlu0 %1731
      %1733 = vrot.lane.b32.xlu0 %v1650, 28
      %v1734 = vpop.permute.xlu0 %1733
      %1735 = vrot.lane.b32.xlu0 %v1651, 28
      %v1736 = vpop.permute.xlu0 %1735
      %1737 = vrot.lane.b32.xlu0 %v1652, 28
      %v1738 = vpop.permute.xlu0 %1737
      %1739 = vrot.lane.b32.xlu0 %v1653, 28
      %v1740 = vpop.permute.xlu0 %1739
      %1741 = vrot.lane.b32.xlu0 %v1654, 28
      %v1742 = vpop.permute.xlu0 %1741
      %1743 = vrot.lane.b32.xlu0 %v1655, 28
      %v1744 = vpop.permute.xlu0 %1743
      %1745 = vrot.lane.b32.xlu0 %v1656, 28
      %v1746 = vpop.permute.xlu0 %1745
      %1747 = vrot.lane.b32.xlu0 %v1657, 28
      %v1748 = vpop.permute.xlu0 %1747
      %1749 = vrot.lane.b32.xlu0 %v1658, 28
      %v1750 = vpop.permute.xlu0 %1749
      %1751 = vrot.lane.b32.xlu0 %v1659, 28
      %v1752 = vpop.permute.xlu0 %1751
      %1753 = vrot.lane.b32.xlu0 %v1660, 28
      %v1754 = vpop.permute.xlu0 %1753
      %1755 = vrot.lane.b32.xlu0 %v1661, 28
      %v1756 = vpop.permute.xlu0 %1755
      %1757 = vrot.lane.b32.xlu0 %v1662, 28
      %v1758 = vpop.permute.xlu0 %1757
      %vm1791 = vcmask 261344
      %1792 = vst.msk [vmem:[#allocation3] sm:$0xff] %vm1791, %v1696
      %1793 = vst.msk [vmem:[#allocation3 + $0x18] sm:$0xff] %vm1791, %v1698
      %1794 = vst.msk [vmem:[#allocation3 + $0x30] sm:$0xff] %vm1791, %v1700
      %1795 = vst.msk [vmem:[#allocation3 + $0x48] sm:$0xff] %vm1791, %v1702
      %1796 = vst.msk [vmem:[#allocation3 + $0x60] sm:$0xff] %vm1791, %v1704
      %1797 = vst.msk [vmem:[#allocation3 + $0x78] sm:$0xff] %vm1791, %v1706
      %1798 = vst.msk [vmem:[#allocation3 + $0x90] sm:$0xff] %vm1791, %v1708
      %1799 = vst.msk [vmem:[#allocation3 + $0xa8] sm:$0xff] %vm1791, %v1710
      %1800 = vst.msk [vmem:[#allocation3 + $0xc0] sm:$0xff] %vm1791, %v1712
      %1801 = vst.msk [vmem:[#allocation3 + $0xd8] sm:$0xff] %vm1791, %v1714
      %1802 = vst.msk [vmem:[#allocation3 + $0xf0] sm:$0xff] %vm1791, %v1716
      %1803 = vst.msk [vmem:[#allocation3 + $0x108] sm:$0xff] %vm1791, %v1718
      %1804 = vst.msk [vmem:[#allocation3 + $0x120] sm:$0xff] %vm1791, %v1720
      %1805 = vst.msk [vmem:[#allocation3 + $0x138] sm:$0xff] %vm1791, %v1722
      %1806 = vst.msk [vmem:[#allocation3 + $0x150] sm:$0xff] %vm1791, %v1724
      %1807 = vst.msk [vmem:[#allocation3 + $0x168] sm:$0xff] %vm1791, %v1726
      %1808 = vst.msk [vmem:[#allocation3 + $0x180] sm:$0xff] %vm1791, %v1728
      %1809 = vst.msk [vmem:[#allocation3 + $0x198] sm:$0xff] %vm1791, %v1730
      %1810 = vst.msk [vmem:[#allocation3 + $0x1b0] sm:$0xff] %vm1791, %v1732
      %1811 = vst.msk [vmem:[#allocation3 + $0x1c8] sm:$0xff] %vm1791, %v1734
      %1812 = vst.msk [vmem:[#allocation3 + $0x1e0] sm:$0xff] %vm1791, %v1736
      %1813 = vst.msk [vmem:[#allocation3 + $0x1f8] sm:$0xff] %vm1791, %v1738
      %1814 = vst.msk [vmem:[#allocation3 + $0x210] sm:$0xff] %vm1791, %v1740
      %1815 = vst.msk [vmem:[#allocation3 + $0x228] sm:$0xff] %vm1791, %v1742
      %1816 = vst.msk [vmem:[#allocation3 + $0x240] sm:$0xff] %vm1791, %v1744
      %1817 = vst.msk [vmem:[#allocation3 + $0x258] sm:$0xff] %vm1791, %v1746
      %1818 = vst.msk [vmem:[#allocation3 + $0x270] sm:$0xff] %vm1791, %v1748
      %1819 = vst.msk [vmem:[#allocation3 + $0x288] sm:$0xff] %vm1791, %v1750
      %1820 = vst.msk [vmem:[#allocation3 + $0x2a0] sm:$0xff] %vm1791, %v1752
      %1821 = vst.msk [vmem:[#allocation3 + $0x2b8] sm:$0xff] %vm1791, %v1754
      %1822 = vst.msk [vmem:[#allocation3 + $0x2d0] sm:$0xff] %vm1791, %v1756
      %1823 = vst.msk [vmem:[#allocation3 + $0x2e8] sm:$0xff] %vm1791, %v1758
      %v1824 = vld [vmem:[%s1437 + $0x2] sm:$0xff]
      %v1825 = vld [vmem:[%s1437 + $0xa] sm:$0xff]
      %v1826 = vld [vmem:[%s1437 + $0x1a] sm:$0xff]
      %v1827 = vld [vmem:[%s1437 + $0x22] sm:$0xff]
      %v1828 = vld [vmem:[%s1437 + $0x32] sm:$0xff]
      %v1829 = vld [vmem:[%s1437 + $0x3a] sm:$0xff]
      %v1830 = vld [vmem:[%s1437 + $0x4a] sm:$0xff]
      %v1831 = vld [vmem:[%s1437 + $0x52] sm:$0xff]
      %v1832 = vld [vmem:[%s1437 + $0x62] sm:$0xff]
      %v1833 = vld [vmem:[%s1437 + $0x6a] sm:$0xff]
      %v1834 = vld [vmem:[%s1437 + $0x7a] sm:$0xff]
      %v1835 = vld [vmem:[%s1437 + $0x82] sm:$0xff]
      %v1836 = vld [vmem:[%s1437 + $0x92] sm:$0xff]
      %v1837 = vld [vmem:[%s1437 + $0x9a] sm:$0xff]
      %v1838 = vld [vmem:[%s1437 + $0xaa] sm:$0xff]
      %v1839 = vld [vmem:[%s1437 + $0xb2] sm:$0xff]
      %v1840 = vld [vmem:[%s1437 + $0xc2] sm:$0xff]
      %v1841 = vld [vmem:[%s1437 + $0xca] sm:$0xff]
      %v1842 = vld [vmem:[%s1437 + $0xda] sm:$0xff]
      %v1843 = vld [vmem:[%s1437 + $0xe2] sm:$0xff]
      %v1844 = vld [vmem:[%s1437 + $0xf2] sm:$0xff]
      %v1845 = vld [vmem:[%s1437 + $0xfa] sm:$0xff]
      %v1846 = vld [vmem:[%s1437 + $0x10a] sm:$0xff]
      %v1847 = vld [vmem:[%s1437 + $0x112] sm:$0xff]
      %v1848 = vld [vmem:[%s1437 + $0x122] sm:$0xff]
      %v1849 = vld [vmem:[%s1437 + $0x12a] sm:$0xff]
      %v1850 = vld [vmem:[%s1437 + $0x13a] sm:$0xff]
      %v1851 = vld [vmem:[%s1437 + $0x142] sm:$0xff]
      %v1852 = vld [vmem:[%s1437 + $0x152] sm:$0xff]
      %v1853 = vld [vmem:[%s1437 + $0x15a] sm:$0xff]
      %v1854 = vld [vmem:[%s1437 + $0x16a] sm:$0xff]
      %v1855 = vld [vmem:[%s1437 + $0x172] sm:$0xff]
      %1888 = vrot.lane.b32.xlu0 %v1824, 32
      %v1889 = vpop.permute.xlu0 %1888
      %1890 = vrot.lane.b32.xlu0 %v1825, 32
      %v1891 = vpop.permute.xlu0 %1890
      %1892 = vrot.lane.b32.xlu0 %v1826, 32
      %v1893 = vpop.permute.xlu0 %1892
      %1894 = vrot.lane.b32.xlu0 %v1827, 32
      %v1895 = vpop.permute.xlu0 %1894
      %1896 = vrot.lane.b32.xlu0 %v1828, 32
      %v1897 = vpop.permute.xlu0 %1896
      %1898 = vrot.lane.b32.xlu0 %v1829, 32
      %v1899 = vpop.permute.xlu0 %1898
      %1900 = vrot.lane.b32.xlu0 %v1830, 32
      %v1901 = vpop.permute.xlu0 %1900
      %1902 = vrot.lane.b32.xlu0 %v1831, 32
      %v1903 = vpop.permute.xlu0 %1902
      %1904 = vrot.lane.b32.xlu0 %v1832, 32
      %v1905 = vpop.permute.xlu0 %1904
      %1906 = vrot.lane.b32.xlu0 %v1833, 32
      %v1907 = vpop.permute.xlu0 %1906
      %1908 = vrot.lane.b32.xlu0 %v1834, 32
      %v1909 = vpop.permute.xlu0 %1908
      %1910 = vrot.lane.b32.xlu0 %v1835, 32
      %v1911 = vpop.permute.xlu0 %1910
      %1912 = vrot.lane.b32.xlu0 %v1836, 32
      %v1913 = vpop.permute.xlu0 %1912
      %1914 = vrot.lane.b32.xlu0 %v1837, 32
      %v1915 = vpop.permute.xlu0 %1914
      %1916 = vrot.lane.b32.xlu0 %v1838, 32
      %v1917 = vpop.permute.xlu0 %1916
      %1918 = vrot.lane.b32.xlu0 %v1839, 32
      %v1919 = vpop.permute.xlu0 %1918
      %1920 = vrot.lane.b32.xlu0 %v1840, 32
      %v1921 = vpop.permute.xlu0 %1920
      %1922 = vrot.lane.b32.xlu0 %v1841, 32
      %v1923 = vpop.permute.xlu0 %1922
      %1924 = vrot.lane.b32.xlu0 %v1842, 32
      %v1925 = vpop.permute.xlu0 %1924
      %1926 = vrot.lane.b32.xlu0 %v1843, 32
      %v1927 = vpop.permute.xlu0 %1926
      %1928 = vrot.lane.b32.xlu0 %v1844, 32
      %v1929 = vpop.permute.xlu0 %1928
      %1930 = vrot.lane.b32.xlu0 %v1845, 32
      %v1931 = vpop.permute.xlu0 %1930
      %1932 = vrot.lane.b32.xlu0 %v1846, 32
      %v1933 = vpop.permute.xlu0 %1932
      %1934 = vrot.lane.b32.xlu0 %v1847, 32
      %v1935 = vpop.permute.xlu0 %1934
      %1936 = vrot.lane.b32.xlu0 %v1848, 32
      %v1937 = vpop.permute.xlu0 %1936
      %1938 = vrot.lane.b32.xlu0 %v1849, 32
      %v1939 = vpop.permute.xlu0 %1938
      %1940 = vrot.lane.b32.xlu0 %v1850, 32
      %v1941 = vpop.permute.xlu0 %1940
      %1942 = vrot.lane.b32.xlu0 %v1851, 32
      %v1943 = vpop.permute.xlu0 %1942
      %1944 = vrot.lane.b32.xlu0 %v1852, 32
      %v1945 = vpop.permute.xlu0 %1944
      %1946 = vrot.lane.b32.xlu0 %v1853, 32
      %v1947 = vpop.permute.xlu0 %1946
      %1948 = vrot.lane.b32.xlu0 %v1854, 32
      %v1949 = vpop.permute.xlu0 %1948
      %1950 = vrot.lane.b32.xlu0 %v1855, 32
      %v1951 = vpop.permute.xlu0 %1950
      %vm1984 = vcmask 294144
      %1985 = vst.msk [vmem:[#allocation3] sm:$0xff] %vm1984, %v1889
      %1986 = vst.msk [vmem:[#allocation3 + $0x18] sm:$0xff] %vm1984, %v1891
      %1987 = vst.msk [vmem:[#allocation3 + $0x30] sm:$0xff] %vm1984, %v1893
      %1988 = vst.msk [vmem:[#allocation3 + $0x48] sm:$0xff] %vm1984, %v1895
      %1989 = vst.msk [vmem:[#allocation3 + $0x60] sm:$0xff] %vm1984, %v1897
      %1990 = vst.msk [vmem:[#allocation3 + $0x78] sm:$0xff] %vm1984, %v1899
      %1991 = vst.msk [vmem:[#allocation3 + $0x90] sm:$0xff] %vm1984, %v1901
      %1992 = vst.msk [vmem:[#allocation3 + $0xa8] sm:$0xff] %vm1984, %v1903
      %1993 = vst.msk [vmem:[#allocation3 + $0xc0] sm:$0xff] %vm1984, %v1905
      %1994 = vst.msk [vmem:[#allocation3 + $0xd8] sm:$0xff] %vm1984, %v1907
      %1995 = vst.msk [vmem:[#allocation3 + $0xf0] sm:$0xff] %vm1984, %v1909
      %1996 = vst.msk [vmem:[#allocation3 + $0x108] sm:$0xff] %vm1984, %v1911
      %1997 = vst.msk [vmem:[#allocation3 + $0x120] sm:$0xff] %vm1984, %v1913
      %1998 = vst.msk [vmem:[#allocation3 + $0x138] sm:$0xff] %vm1984, %v1915
      %1999 = vst.msk [vmem:[#allocation3 + $0x150] sm:$0xff] %vm1984, %v1917
      %2000 = vst.msk [vmem:[#allocation3 + $0x168] sm:$0xff] %vm1984, %v1919
      %2001 = vst.msk [vmem:[#allocation3 + $0x180] sm:$0xff] %vm1984, %v1921
      %2002 = vst.msk [vmem:[#allocation3 + $0x198] sm:$0xff] %vm1984, %v1923
      %2003 = vst.msk [vmem:[#allocation3 + $0x1b0] sm:$0xff] %vm1984, %v1925
      %2004 = vst.msk [vmem:[#allocation3 + $0x1c8] sm:$0xff] %vm1984, %v1927
      %2005 = vst.msk [vmem:[#allocation3 + $0x1e0] sm:$0xff] %vm1984, %v1929
      %2006 = vst.msk [vmem:[#allocation3 + $0x1f8] sm:$0xff] %vm1984, %v1931
      %2007 = vst.msk [vmem:[#allocation3 + $0x210] sm:$0xff] %vm1984, %v1933
      %2008 = vst.msk [vmem:[#allocation3 + $0x228] sm:$0xff] %vm1984, %v1935
      %2009 = vst.msk [vmem:[#allocation3 + $0x240] sm:$0xff] %vm1984, %v1937
      %2010 = vst.msk [vmem:[#allocation3 + $0x258] sm:$0xff] %vm1984, %v1939
      %2011 = vst.msk [vmem:[#allocation3 + $0x270] sm:$0xff] %vm1984, %v1941
      %2012 = vst.msk [vmem:[#allocation3 + $0x288] sm:$0xff] %vm1984, %v1943
      %2013 = vst.msk [vmem:[#allocation3 + $0x2a0] sm:$0xff] %vm1984, %v1945
      %2014 = vst.msk [vmem:[#allocation3 + $0x2b8] sm:$0xff] %vm1984, %v1947
      %2015 = vst.msk [vmem:[#allocation3 + $0x2d0] sm:$0xff] %vm1984, %v1949
      %2016 = vst.msk [vmem:[#allocation3 + $0x2e8] sm:$0xff] %vm1984, %v1951
      %v2017 = vld [vmem:[#allocation3] sm:$0xff]
      %v2018 = vld [vmem:[#allocation3 + $0x18] sm:$0xff]
      %v2019 = vld [vmem:[#allocation3 + $0x30] sm:$0xff]
      %v2020 = vld [vmem:[#allocation3 + $0x48] sm:$0xff]
      %v2021 = vld [vmem:[#allocation3 + $0x60] sm:$0xff]
      %v2022 = vld [vmem:[#allocation3 + $0x78] sm:$0xff]
      %v2023 = vld [vmem:[#allocation3 + $0x90] sm:$0xff]
      %v2024 = vld [vmem:[#allocation3 + $0xa8] sm:$0xff]
      %v2025 = vld [vmem:[#allocation3 + $0xc0] sm:$0xff]
      %v2026 = vld [vmem:[#allocation3 + $0xd8] sm:$0xff]
      %v2027 = vld [vmem:[#allocation3 + $0xf0] sm:$0xff]
      %v2028 = vld [vmem:[#allocation3 + $0x108] sm:$0xff]
      %v2029 = vld [vmem:[#allocation3 + $0x120] sm:$0xff]
      %v2030 = vld [vmem:[#allocation3 + $0x138] sm:$0xff]
      %v2031 = vld [vmem:[#allocation3 + $0x150] sm:$0xff]
      %v2032 = vld [vmem:[#allocation3 + $0x168] sm:$0xff]
      %v2033 = vld [vmem:[#allocation3 + $0x180] sm:$0xff]
      %v2034 = vld [vmem:[#allocation3 + $0x198] sm:$0xff]
      %v2035 = vld [vmem:[#allocation3 + $0x1b0] sm:$0xff]
      %v2036 = vld [vmem:[#allocation3 + $0x1c8] sm:$0xff]
      %v2037 = vld [vmem:[#allocation3 + $0x1e0] sm:$0xff]
      %v2038 = vld [vmem:[#allocation3 + $0x1f8] sm:$0xff]
      %v2039 = vld [vmem:[#allocation3 + $0x210] sm:$0xff]
      %v2040 = vld [vmem:[#allocation3 + $0x228] sm:$0xff]
      %v2041 = vld [vmem:[#allocation3 + $0x240] sm:$0xff]
      %v2042 = vld [vmem:[#allocation3 + $0x258] sm:$0xff]
      %v2043 = vld [vmem:[#allocation3 + $0x270] sm:$0xff]
      %v2044 = vld [vmem:[#allocation3 + $0x288] sm:$0xff]
      %v2045 = vld [vmem:[#allocation3 + $0x2a0] sm:$0xff]
      %v2046 = vld [vmem:[#allocation3 + $0x2b8] sm:$0xff]
      %v2047 = vld [vmem:[#allocation3 + $0x2d0] sm:$0xff]
      %v2048 = vld [vmem:[#allocation3 + $0x2e8] sm:$0xff]
      %v2050 = vlaneseq
      %v2051 = vshrl.u32 %v2050, 7
      %v2052 = vsub.s32 0, %v2051
      %v2053 = vrot.slane %v407, %v2052
      %vm2055 = vcmask 293888
      %v2057 = vsel %vm2055, %v2017, 0
      %v2060 = vsel %vm2055, %v2018, 0
      %v2063 = vsel %vm2055, %v2019, 0
      %v2066 = vsel %vm2055, %v2020, 0
      %v2069 = vsel %vm2055, %v2021, 0
      %v2072 = vsel %vm2055, %v2022, 0
      %v2075 = vsel %vm2055, %v2023, 0
      %v2078 = vsel %vm2055, %v2024, 0
      %v2081 = vsel %vm2055, %v2025, 0
      %v2084 = vsel %vm2055, %v2026, 0
      %v2087 = vsel %vm2055, %v2027, 0
      %v2090 = vsel %vm2055, %v2028, 0
      %v2093 = vsel %vm2055, %v2029, 0
      %v2096 = vsel %vm2055, %v2030, 0
      %v2099 = vsel %vm2055, %v2031, 0
      %v2102 = vsel %vm2055, %v2032, 0
      %v2105 = vsel %vm2055, %v2033, 0
      %v2108 = vsel %vm2055, %v2034, 0
      %v2111 = vsel %vm2055, %v2035, 0
      %v2114 = vsel %vm2055, %v2036, 0
      %v2117 = vsel %vm2055, %v2037, 0
      %v2120 = vsel %vm2055, %v2038, 0
      %v2123 = vsel %vm2055, %v2039, 0
      %v2126 = vsel %vm2055, %v2040, 0
      %v2129 = vsel %vm2055, %v2041, 0
      %v2132 = vsel %vm2055, %v2042, 0
      %v2135 = vsel %vm2055, %v2043, 0
      %v2138 = vsel %vm2055, %v2044, 0
      %v2141 = vsel %vm2055, %v2045, 0
      %v2144 = vsel %vm2055, %v2046, 0
      %v2147 = vsel %vm2055, %v2047, 0
      %v2150 = vsel %vm2055, %v2048, 0
      %vm2152 = vcmask 1043456
      %v2154 = vsel %vm2152, %v406, 0
      %2156 = vmatprep.subr.mxu0 0.0
      %2157 = vmatpush1.msra.mxu0 0.0
      %2158 = vmatprep.subr.mxu0 0.0
      %2159 = vmatpush1.msra.mxu0 0.0
      %2160 = vmatprep.subr.mxu0 0.0
      %2161 = vmatpush1.msra.mxu0 0.0
      %2162 = vmatprep.subr.mxu0 0.0
      %2163 = vmatpush1.msra.mxu0 0.0
      %2164 = vmatprep.subr.mxu0 0.0
      %2165 = vmatpush1.msra.mxu0 0.0
      %2166 = vmatprep.subr.mxu0 0.0
      %2167 = vmatpush1.msra.mxu0 0.0
      %2168 = vmatprep.subr.mxu0 0.0
      %2169 = vmatpush1.msra.mxu0 0.0
      %2170 = vmatprep.subr.mxu0 0.0
      %2171 = vmatpush1.msra.mxu0 0.0
      %2172 = vmatprep.subr.mxu0 0.0
      %2173 = vmatpush1.msra.mxu0 0.0
      %2174 = vmatprep.subr.mxu0 0.0
      %2175 = vmatpush1.msra.mxu0 0.0
      %2176 = vmatprep.subr.mxu0 0.0
      %2177 = vmatpush1.msra.mxu0 0.0
      %2178 = vmatprep.subr.mxu0 0.0
      %2179 = vmatpush1.msra.mxu0 %v2154
      %2180 = vmatprep.subr.mxu0 0.0
      %2181 = vmatpush1.msra.mxu0 %v405
      %2182 = vmatprep.subr.mxu0 0.0
      %2183 = vmatpush1.msra.mxu0 %v404
      %2184 = vmatprep.subr.mxu0 0.0
      %2185 = vmatpush1.msra.mxu0 %v403
      %2186 = vmatprep.subr.mxu0 0.0
      %2187 = vmatpush1.msra.mxu0 %v402
      %2188 = vmatprep.subr.mxu0 0.0
      %2189 = vmatpush2.msra.mxu0 0.0
      %2190 = vmatprep.subr.mxu0 0.0
      %2191 = vmatpush2.msra.mxu0 0.0
      %2192 = vmatprep.subr.mxu0 0.0
      %2193 = vmatpush2.msra.mxu0 0.0
      %2194 = vmatprep.subr.mxu0 0.0
      %2195 = vmatpush2.msra.mxu0 0.0
      %2196 = vmatprep.subr.mxu0 0.0
      %2197 = vmatpush2.msra.mxu0 0.0
      %2198 = vmatprep.subr.mxu0 0.0
      %2199 = vmatpush2.msra.mxu0 0.0
      %2200 = vmatprep.subr.mxu0 0.0
      %2201 = vmatpush2.msra.mxu0 0.0
      %2202 = vmatprep.subr.mxu0 0.0
      %2203 = vmatpush2.msra.mxu0 0.0
      %2204 = vmatprep.subr.mxu0 0.0
      %2205 = vmatpush2.msra.mxu0 0.0
      %2206 = vmatprep.subr.mxu0 0.0
      %2207 = vmatpush2.msra.mxu0 0.0
      %2208 = vmatprep.subr.mxu0 0.0
      %2209 = vmatpush2.msra.mxu0 0.0
      %2210 = vmatprep.subr.mxu0 0.0
      %2211 = vmatpush2.msra.mxu0 0.0
      %2212 = vmatprep.subr.mxu0 0.0
      %2213 = vmatpush2.msra.mxu0 0.0
      %2214 = vmatprep.subr.mxu0 0.0
      %2215 = vmatpush2.msra.mxu0 0.0
      %2216 = vmatprep.subr.mxu0 0.0
      %2217 = vmatpush2.msra.mxu0 0.0
      %2218 = vmatprep.subr.mxu0 0.0
      %2219 = vmatpush2.msra.mxu0 0.0
      %2220 = vmatprep.mubr.f32.mxu0 0.0
      %2221 = vmatmul.mubr.f32.gmra.mxu0 %v2057
      %v2222 = vpop.f32.mrf.mxu0
      %v2223 = vadd.f32 %v2053, %v2222
      %v2224 = vpop.f32.mrf.mxu0
      %2225 = vmatprep.mubr.f32.mxu0 0.0
      %2226 = vmatmul.mubr.f32.gmra.mxu0 %v2060
      %v2227 = vpop.f32.mrf.mxu0
      %v2228 = vadd.f32 %v2053, %v2227
      %v2229 = vpop.f32.mrf.mxu0
      %2230 = vmatprep.mubr.f32.mxu0 0.0
      %2231 = vmatmul.mubr.f32.gmra.mxu0 %v2063
      %v2232 = vpop.f32.mrf.mxu0
      %v2233 = vadd.f32 %v2053, %v2232
      %v2234 = vpop.f32.mrf.mxu0
      %2235 = vmatprep.mubr.f32.mxu0 0.0
      %2236 = vmatmul.mubr.f32.gmra.mxu0 %v2066
      %v2237 = vpop.f32.mrf.mxu0
      %v2238 = vadd.f32 %v2053, %v2237
      %v2239 = vpop.f32.mrf.mxu0
      %2240 = vmatprep.mubr.f32.mxu0 0.0
      %2241 = vmatmul.mubr.f32.gmra.mxu0 %v2069
      %v2242 = vpop.f32.mrf.mxu0
      %v2243 = vadd.f32 %v2053, %v2242
      %v2244 = vpop.f32.mrf.mxu0
      %2245 = vmatprep.mubr.f32.mxu0 0.0
      %2246 = vmatmul.mubr.f32.gmra.mxu0 %v2072
      %v2247 = vpop.f32.mrf.mxu0
      %v2248 = vadd.f32 %v2053, %v2247
      %v2249 = vpop.f32.mrf.mxu0
      %2250 = vmatprep.mubr.f32.mxu0 0.0
      %2251 = vmatmul.mubr.f32.gmra.mxu0 %v2075
      %v2252 = vpop.f32.mrf.mxu0
      %v2253 = vadd.f32 %v2053, %v2252
      %v2254 = vpop.f32.mrf.mxu0
      %2255 = vmatprep.mubr.f32.mxu0 0.0
      %2256 = vmatmul.mubr.f32.gmra.mxu0 %v2078
      %v2257 = vpop.f32.mrf.mxu0
      %v2258 = vadd.f32 %v2053, %v2257
      %v2259 = vpop.f32.mrf.mxu0
      %2260 = vmatprep.mubr.f32.mxu0 0.0
      %2261 = vmatmul.mubr.f32.gmra.mxu0 %v2081
      %v2262 = vpop.f32.mrf.mxu0
      %v2263 = vadd.f32 %v2053, %v2262
      %v2264 = vpop.f32.mrf.mxu0
      %2265 = vmatprep.mubr.f32.mxu0 0.0
      %2266 = vmatmul.mubr.f32.gmra.mxu0 %v2084
      %v2267 = vpop.f32.mrf.mxu0
      %v2268 = vadd.f32 %v2053, %v2267
      %v2269 = vpop.f32.mrf.mxu0
      %2270 = vmatprep.mubr.f32.mxu0 0.0
      %2271 = vmatmul.mubr.f32.gmra.mxu0 %v2087
      %v2272 = vpop.f32.mrf.mxu0
      %v2273 = vadd.f32 %v2053, %v2272
      %v2274 = vpop.f32.mrf.mxu0
      %2275 = vmatprep.mubr.f32.mxu0 0.0
      %2276 = vmatmul.mubr.f32.gmra.mxu0 %v2090
      %v2277 = vpop.f32.mrf.mxu0
      %v2278 = vadd.f32 %v2053, %v2277
      %v2279 = vpop.f32.mrf.mxu0
      %2280 = vmatprep.mubr.f32.mxu0 0.0
      %2281 = vmatmul.mubr.f32.gmra.mxu0 %v2093
      %v2282 = vpop.f32.mrf.mxu0
      %v2283 = vadd.f32 %v2053, %v2282
      %v2284 = vpop.f32.mrf.mxu0
      %2285 = vmatprep.mubr.f32.mxu0 0.0
      %2286 = vmatmul.mubr.f32.gmra.mxu0 %v2096
      %v2287 = vpop.f32.mrf.mxu0
      %v2288 = vadd.f32 %v2053, %v2287
      %v2289 = vpop.f32.mrf.mxu0
      %2290 = vmatprep.mubr.f32.mxu0 0.0
      %2291 = vmatmul.mubr.f32.gmra.mxu0 %v2099
      %v2292 = vpop.f32.mrf.mxu0
      %v2293 = vadd.f32 %v2053, %v2292
      %v2294 = vpop.f32.mrf.mxu0
      %2295 = vmatprep.mubr.f32.mxu0 0.0
      %2296 = vmatmul.mubr.f32.gmra.mxu0 %v2102
      %v2297 = vpop.f32.mrf.mxu0
      %v2298 = vadd.f32 %v2053, %v2297
      %v2299 = vpop.f32.mrf.mxu0
      %2300 = vmatprep.mubr.f32.mxu0 0.0
      %2301 = vmatmul.mubr.f32.gmra.mxu0 %v2105
      %v2302 = vpop.f32.mrf.mxu0
      %v2303 = vadd.f32 %v2053, %v2302
      %v2304 = vpop.f32.mrf.mxu0
      %2305 = vmatprep.mubr.f32.mxu0 0.0
      %2306 = vmatmul.mubr.f32.gmra.mxu0 %v2108
      %v2307 = vpop.f32.mrf.mxu0
      %v2308 = vadd.f32 %v2053, %v2307
      %v2309 = vpop.f32.mrf.mxu0
      %2310 = vmatprep.mubr.f32.mxu0 0.0
      %2311 = vmatmul.mubr.f32.gmra.mxu0 %v2111
      %v2312 = vpop.f32.mrf.mxu0
      %v2313 = vadd.f32 %v2053, %v2312
      %v2314 = vpop.f32.mrf.mxu0
      %2315 = vmatprep.mubr.f32.mxu0 0.0
      %2316 = vmatmul.mubr.f32.gmra.mxu0 %v2114
      %v2317 = vpop.f32.mrf.mxu0
      %v2318 = vadd.f32 %v2053, %v2317
      %v2319 = vpop.f32.mrf.mxu0
      %2320 = vmatprep.mubr.f32.mxu0 0.0
      %2321 = vmatmul.mubr.f32.gmra.mxu0 %v2117
      %v2322 = vpop.f32.mrf.mxu0
      %v2323 = vadd.f32 %v2053, %v2322
      %v2324 = vpop.f32.mrf.mxu0
      %2325 = vmatprep.mubr.f32.mxu0 0.0
      %2326 = vmatmul.mubr.f32.gmra.mxu0 %v2120
      %v2327 = vpop.f32.mrf.mxu0
      %v2328 = vadd.f32 %v2053, %v2327
      %v2329 = vpop.f32.mrf.mxu0
      %2330 = vmatprep.mubr.f32.mxu0 0.0
      %2331 = vmatmul.mubr.f32.gmra.mxu0 %v2123
      %v2332 = vpop.f32.mrf.mxu0
      %v2333 = vadd.f32 %v2053, %v2332
      %v2334 = vpop.f32.mrf.mxu0
      %2335 = vmatprep.mubr.f32.mxu0 0.0
      %2336 = vmatmul.mubr.f32.gmra.mxu0 %v2126
      %v2337 = vpop.f32.mrf.mxu0
      %v2338 = vadd.f32 %v2053, %v2337
      %v2339 = vpop.f32.mrf.mxu0
      %2340 = vmatprep.mubr.f32.mxu0 0.0
      %2341 = vmatmul.mubr.f32.gmra.mxu0 %v2129
      %v2342 = vpop.f32.mrf.mxu0
      %v2343 = vadd.f32 %v2053, %v2342
      %v2344 = vpop.f32.mrf.mxu0
      %2345 = vmatprep.mubr.f32.mxu0 0.0
      %2346 = vmatmul.mubr.f32.gmra.mxu0 %v2132
      %v2347 = vpop.f32.mrf.mxu0
      %v2348 = vadd.f32 %v2053, %v2347
      %v2349 = vpop.f32.mrf.mxu0
      %2350 = vmatprep.mubr.f32.mxu0 0.0
      %2351 = vmatmul.mubr.f32.gmra.mxu0 %v2135
      %v2352 = vpop.f32.mrf.mxu0
      %v2353 = vadd.f32 %v2053, %v2352
      %v2354 = vpop.f32.mrf.mxu0
      %2355 = vmatprep.mubr.f32.mxu0 0.0
      %2356 = vmatmul.mubr.f32.gmra.mxu0 %v2138
      %v2357 = vpop.f32.mrf.mxu0
      %v2358 = vadd.f32 %v2053, %v2357
      %v2359 = vpop.f32.mrf.mxu0
      %2360 = vmatprep.mubr.f32.mxu0 0.0
      %2361 = vmatmul.mubr.f32.gmra.mxu0 %v2141
      %v2362 = vpop.f32.mrf.mxu0
      %v2363 = vadd.f32 %v2053, %v2362
      %v2364 = vpop.f32.mrf.mxu0
      %2365 = vmatprep.mubr.f32.mxu0 0.0
      %2366 = vmatmul.mubr.f32.gmra.mxu0 %v2144
      %v2367 = vpop.f32.mrf.mxu0
      %v2368 = vadd.f32 %v2053, %v2367
      %v2369 = vpop.f32.mrf.mxu0
      %2370 = vmatprep.mubr.f32.mxu0 0.0
      %2371 = vmatmul.mubr.f32.gmra.mxu0 %v2147
      %v2372 = vpop.f32.mrf.mxu0
      %v2373 = vadd.f32 %v2053, %v2372
      %v2374 = vpop.f32.mrf.mxu0
      %2375 = vmatprep.mubr.f32.mxu0 0.0
      %2376 = vmatmul.mubr.f32.gmra.mxu0 %v2150
      %v2377 = vpop.f32.mrf.mxu0
      %v2378 = vadd.f32 %v2053, %v2377
      %v2379 = vpop.f32.mrf.mxu0
      %2380 = vdwg.mxu0
      %v2381 = vmax.f32 %v2223, 0.0
      %v2382 = vmax.f32 %v2228, 0.0
      %v2383 = vmax.f32 %v2233, 0.0
      %v2384 = vmax.f32 %v2238, 0.0
      %v2385 = vmax.f32 %v2243, 0.0
      %v2386 = vmax.f32 %v2248, 0.0
      %v2387 = vmax.f32 %v2253, 0.0
      %v2388 = vmax.f32 %v2258, 0.0
      %v2389 = vmax.f32 %v2263, 0.0
      %v2390 = vmax.f32 %v2268, 0.0
      %v2391 = vmax.f32 %v2273, 0.0
      %v2392 = vmax.f32 %v2278, 0.0
      %v2393 = vmax.f32 %v2283, 0.0
      %v2394 = vmax.f32 %v2288, 0.0
      %v2395 = vmax.f32 %v2293, 0.0
      %v2396 = vmax.f32 %v2298, 0.0
      %v2397 = vmax.f32 %v2303, 0.0
      %v2398 = vmax.f32 %v2308, 0.0
      %v2399 = vmax.f32 %v2313, 0.0
      %v2400 = vmax.f32 %v2318, 0.0
      %v2401 = vmax.f32 %v2323, 0.0
      %v2402 = vmax.f32 %v2328, 0.0
      %v2403 = vmax.f32 %v2333, 0.0
      %v2404 = vmax.f32 %v2338, 0.0
      %v2405 = vmax.f32 %v2343, 0.0
      %v2406 = vmax.f32 %v2348, 0.0
      %v2407 = vmax.f32 %v2353, 0.0
      %v2408 = vmax.f32 %v2358, 0.0
      %v2409 = vmax.f32 %v2363, 0.0
      %v2410 = vmax.f32 %v2368, 0.0
      %v2411 = vmax.f32 %v2373, 0.0
      %v2412 = vmax.f32 %v2378, 0.0
      %s2413 = scalar_lea.vmem [#allocation4], 24
      %2414 = vst.msk [vmem:[%s2413 + $0x1] sm:$0xff] %vm346, %v2381
      %2415 = vst.msk [vmem:[%s2413 + $0x9] sm:$0xff] %vm346, %v2382
      %2416 = vst.msk [vmem:[%s2413 + $0x19] sm:$0xff] %vm346, %v2383
      %2417 = vst.msk [vmem:[%s2413 + $0x21] sm:$0xff] %vm346, %v2384
      %2418 = vst.msk [vmem:[%s2413 + $0x31] sm:$0xff] %vm346, %v2385
      %2419 = vst.msk [vmem:[%s2413 + $0x39] sm:$0xff] %vm346, %v2386
      %2420 = vst.msk [vmem:[%s2413 + $0x49] sm:$0xff] %vm346, %v2387
      %2421 = vst.msk [vmem:[%s2413 + $0x51] sm:$0xff] %vm346, %v2388
      %2422 = vst.msk [vmem:[%s2413 + $0x61] sm:$0xff] %vm346, %v2389
      %2423 = vst.msk [vmem:[%s2413 + $0x69] sm:$0xff] %vm346, %v2390
      %2424 = vst.msk [vmem:[%s2413 + $0x79] sm:$0xff] %vm346, %v2391
      %2425 = vst.msk [vmem:[%s2413 + $0x81] sm:$0xff] %vm346, %v2392
      %2426 = vst.msk [vmem:[%s2413 + $0x91] sm:$0xff] %vm346, %v2393
      %2427 = vst.msk [vmem:[%s2413 + $0x99] sm:$0xff] %vm346, %v2394
      %2428 = vst.msk [vmem:[%s2413 + $0xa9] sm:$0xff] %vm346, %v2395
      %2429 = vst.msk [vmem:[%s2413 + $0xb1] sm:$0xff] %vm346, %v2396
      %2430 = vst.msk [vmem:[%s2413 + $0xc1] sm:$0xff] %vm346, %v2397
      %2431 = vst.msk [vmem:[%s2413 + $0xc9] sm:$0xff] %vm346, %v2398
      %2432 = vst.msk [vmem:[%s2413 + $0xd9] sm:$0xff] %vm346, %v2399
      %2433 = vst.msk [vmem:[%s2413 + $0xe1] sm:$0xff] %vm346, %v2400
      %2434 = vst.msk [vmem:[%s2413 + $0xf1] sm:$0xff] %vm346, %v2401
      %2435 = vst.msk [vmem:[%s2413 + $0xf9] sm:$0xff] %vm346, %v2402
      %2436 = vst.msk [vmem:[%s2413 + $0x109] sm:$0xff] %vm346, %v2403
      %2437 = vst.msk [vmem:[%s2413 + $0x111] sm:$0xff] %vm346, %v2404
      %2438 = vst.msk [vmem:[%s2413 + $0x121] sm:$0xff] %vm346, %v2405
      %2439 = vst.msk [vmem:[%s2413 + $0x129] sm:$0xff] %vm346, %v2406
      %2440 = vst.msk [vmem:[%s2413 + $0x139] sm:$0xff] %vm346, %v2407
      %2441 = vst.msk [vmem:[%s2413 + $0x141] sm:$0xff] %vm346, %v2408
      %2442 = vst.msk [vmem:[%s2413 + $0x151] sm:$0xff] %vm346, %v2409
      %2443 = vst.msk [vmem:[%s2413 + $0x159] sm:$0xff] %vm346, %v2410
      %2444 = vst.msk [vmem:[%s2413 + $0x169] sm:$0xff] %vm346, %v2411
      %2445 = vst.msk [vmem:[%s2413 + $0x171] sm:$0xff] %vm346, %v2412
      %v2446 = vld [vmem:[%s3] sm:$0xff]
      %v2447 = vld [vmem:[%s3 + $0x8] sm:$0xff]
      %v2448 = vld [vmem:[%s3 + $0x10] sm:$0xff]
      %v2449 = vld [vmem:[%s3 + $0x18] sm:$0xff]
      %v2450 = vld [vmem:[%s3 + $0x20] sm:$0xff]
      %v2451 = vld [vmem:[%s3 + $0x28] sm:$0xff]
      %v2452 = vld [vmem:[%s3 + $0x30] sm:$0xff]
      %v2453 = vld [vmem:[%s3 + $0x38] sm:$0xff]
      %v2454 = vld [vmem:[%s3 + $0x40] sm:$0xff]
      %v2455 = vld [vmem:[%s3 + $0x48] sm:$0xff]
      %v2456 = vld [vmem:[%s3 + $0x50] sm:$0xff]
      %v2457 = vld [vmem:[%s3 + $0x58] sm:$0xff]
      %v2458 = vld [vmem:[%s3 + $0x60] sm:$0xff]
      %v2459 = vld [vmem:[%s3 + $0x68] sm:$0xff]
      %v2460 = vld [vmem:[%s3 + $0x70] sm:$0xff]
      %v2461 = vld [vmem:[%s3 + $0x78] sm:$0xff]
      %v2462 = vld [vmem:[%s3 + $0x80] sm:$0xff]
      %v2463 = vld [vmem:[%s3 + $0x88] sm:$0xff]
      %v2464 = vld [vmem:[%s3 + $0x90] sm:$0xff]
      %v2465 = vld [vmem:[%s3 + $0x98] sm:$0xff]
      %v2466 = vld [vmem:[%s3 + $0xa0] sm:$0xff]
      %v2467 = vld [vmem:[%s3 + $0xa8] sm:$0xff]
      %v2468 = vld [vmem:[%s3 + $0xb0] sm:$0xff]
      %v2469 = vld [vmem:[%s3 + $0xb8] sm:$0xff]
      %v2470 = vld [vmem:[%s3 + $0xc0] sm:$0xff]
      %v2471 = vld [vmem:[%s3 + $0xc8] sm:$0xff]
      %v2472 = vld [vmem:[%s3 + $0xd0] sm:$0xff]
      %v2473 = vld [vmem:[%s3 + $0xd8] sm:$0xff]
      %v2474 = vld [vmem:[%s3 + $0xe0] sm:$0xff]
      %v2475 = vld [vmem:[%s3 + $0xe8] sm:$0xff]
      %v2476 = vld [vmem:[%s3 + $0xf0] sm:$0xff]
      %v2477 = vld [vmem:[%s3 + $0xf8] sm:$0xff]
      %v2478 = vld [vmem:[%s3 + $0x100] sm:$0xff]
      %v2479 = vld [vmem:[%s3 + $0x108] sm:$0xff]
      %v2480 = vld [vmem:[%s3 + $0x110] sm:$0xff]
      %v2481 = vld [vmem:[%s3 + $0x118] sm:$0xff]
      %v2482 = vld [vmem:[%s4] sm:$0x1]
      %v2483 = vld [vmem:[#allocation4] sm:$0xff]
      %v2484 = vld [vmem:[#allocation4 + $0x8] sm:$0xff]
      %v2485 = vld [vmem:[#allocation4 + $0x18] sm:$0xff]
      %v2486 = vld [vmem:[#allocation4 + $0x20] sm:$0xff]
      %v2487 = vld [vmem:[#allocation4 + $0x30] sm:$0xff]
      %v2488 = vld [vmem:[#allocation4 + $0x38] sm:$0xff]
      %v2489 = vld [vmem:[#allocation4 + $0x48] sm:$0xff]
      %v2490 = vld [vmem:[#allocation4 + $0x50] sm:$0xff]
      %v2491 = vld [vmem:[#allocation4 + $0x60] sm:$0xff]
      %v2492 = vld [vmem:[#allocation4 + $0x68] sm:$0xff]
      %v2493 = vld [vmem:[#allocation4 + $0x78] sm:$0xff]
      %v2494 = vld [vmem:[#allocation4 + $0x80] sm:$0xff]
      %v2495 = vld [vmem:[#allocation4 + $0x90] sm:$0xff]
      %v2496 = vld [vmem:[#allocation4 + $0x98] sm:$0xff]
      %v2497 = vld [vmem:[#allocation4 + $0xa8] sm:$0xff]
      %v2498 = vld [vmem:[#allocation4 + $0xb0] sm:$0xff]
      %v2499 = vld [vmem:[#allocation4 + $0xc0] sm:$0xff]
      %v2500 = vld [vmem:[#allocation4 + $0xc8] sm:$0xff]
      %v2501 = vld [vmem:[#allocation4 + $0xd8] sm:$0xff]
      %v2502 = vld [vmem:[#allocation4 + $0xe0] sm:$0xff]
      %v2503 = vld [vmem:[#allocation4 + $0xf0] sm:$0xff]
      %v2504 = vld [vmem:[#allocation4 + $0xf8] sm:$0xff]
      %v2505 = vld [vmem:[#allocation4 + $0x108] sm:$0xff]
      %v2506 = vld [vmem:[#allocation4 + $0x110] sm:$0xff]
      %v2507 = vld [vmem:[#allocation4 + $0x120] sm:$0xff]
      %v2508 = vld [vmem:[#allocation4 + $0x128] sm:$0xff]
      %v2509 = vld [vmem:[#allocation4 + $0x138] sm:$0xff]
      %v2510 = vld [vmem:[#allocation4 + $0x140] sm:$0xff]
      %v2511 = vld [vmem:[#allocation4 + $0x150] sm:$0xff]
      %v2512 = vld [vmem:[#allocation4 + $0x158] sm:$0xff]
      %v2513 = vld [vmem:[#allocation4 + $0x168] sm:$0xff]
      %v2514 = vld [vmem:[#allocation4 + $0x170] sm:$0xff]
      %2515 = vst.msk [vmem:[#allocation3] sm:$0xff] %vm346, %v2483
      %2516 = vst.msk [vmem:[#allocation3 + $0x18] sm:$0xff] %vm346, %v2484
      %2517 = vst.msk [vmem:[#allocation3 + $0x30] sm:$0xff] %vm346, %v2485
      %2518 = vst.msk [vmem:[#allocation3 + $0x48] sm:$0xff] %vm346, %v2486
      %2519 = vst.msk [vmem:[#allocation3 + $0x60] sm:$0xff] %vm346, %v2487
      %2520 = vst.msk [vmem:[#allocation3 + $0x78] sm:$0xff] %vm346, %v2488
      %2521 = vst.msk [vmem:[#allocation3 + $0x90] sm:$0xff] %vm346, %v2489
      %2522 = vst.msk [vmem:[#allocation3 + $0xa8] sm:$0xff] %vm346, %v2490
      %2523 = vst.msk [vmem:[#allocation3 + $0xc0] sm:$0xff] %vm346, %v2491
      %2524 = vst.msk [vmem:[#allocation3 + $0xd8] sm:$0xff] %vm346, %v2492
      %2525 = vst.msk [vmem:[#allocation3 + $0xf0] sm:$0xff] %vm346, %v2493
      %2526 = vst.msk [vmem:[#allocation3 + $0x108] sm:$0xff] %vm346, %v2494
      %2527 = vst.msk [vmem:[#allocation3 + $0x120] sm:$0xff] %vm346, %v2495
      %2528 = vst.msk [vmem:[#allocation3 + $0x138] sm:$0xff] %vm346, %v2496
      %2529 = vst.msk [vmem:[#allocation3 + $0x150] sm:$0xff] %vm346, %v2497
      %2530 = vst.msk [vmem:[#allocation3 + $0x168] sm:$0xff] %vm346, %v2498
      %2531 = vst.msk [vmem:[#allocation3 + $0x180] sm:$0xff] %vm346, %v2499
      %2532 = vst.msk [vmem:[#allocation3 + $0x198] sm:$0xff] %vm346, %v2500
      %2533 = vst.msk [vmem:[#allocation3 + $0x1b0] sm:$0xff] %vm346, %v2501
      %2534 = vst.msk [vmem:[#allocation3 + $0x1c8] sm:$0xff] %vm346, %v2502
      %2535 = vst.msk [vmem:[#allocation3 + $0x1e0] sm:$0xff] %vm346, %v2503
      %2536 = vst.msk [vmem:[#allocation3 + $0x1f8] sm:$0xff] %vm346, %v2504
      %2537 = vst.msk [vmem:[#allocation3 + $0x210] sm:$0xff] %vm346, %v2505
      %2538 = vst.msk [vmem:[#allocation3 + $0x228] sm:$0xff] %vm346, %v2506
      %2539 = vst.msk [vmem:[#allocation3 + $0x240] sm:$0xff] %vm346, %v2507
      %2540 = vst.msk [vmem:[#allocation3 + $0x258] sm:$0xff] %vm346, %v2508
      %2541 = vst.msk [vmem:[#allocation3 + $0x270] sm:$0xff] %vm346, %v2509
      %2542 = vst.msk [vmem:[#allocation3 + $0x288] sm:$0xff] %vm346, %v2510
      %2543 = vst.msk [vmem:[#allocation3 + $0x2a0] sm:$0xff] %vm346, %v2511
      %2544 = vst.msk [vmem:[#allocation3 + $0x2b8] sm:$0xff] %vm346, %v2512
      %2545 = vst.msk [vmem:[#allocation3 + $0x2d0] sm:$0xff] %vm346, %v2513
      %2546 = vst.msk [vmem:[#allocation3 + $0x2e8] sm:$0xff] %vm346, %v2514
      %v2547 = vld [vmem:[#allocation4 + $0x1] sm:$0xff]
      %v2548 = vld [vmem:[#allocation4 + $0x9] sm:$0xff]
      %v2549 = vld [vmem:[#allocation4 + $0x19] sm:$0xff]
      %v2550 = vld [vmem:[#allocation4 + $0x21] sm:$0xff]
      %v2551 = vld [vmem:[#allocation4 + $0x31] sm:$0xff]
      %v2552 = vld [vmem:[#allocation4 + $0x39] sm:$0xff]
      %v2553 = vld [vmem:[#allocation4 + $0x49] sm:$0xff]
      %v2554 = vld [vmem:[#allocation4 + $0x51] sm:$0xff]
      %v2555 = vld [vmem:[#allocation4 + $0x61] sm:$0xff]
      %v2556 = vld [vmem:[#allocation4 + $0x69] sm:$0xff]
      %v2557 = vld [vmem:[#allocation4 + $0x79] sm:$0xff]
      %v2558 = vld [vmem:[#allocation4 + $0x81] sm:$0xff]
      %v2559 = vld [vmem:[#allocation4 + $0x91] sm:$0xff]
      %v2560 = vld [vmem:[#allocation4 + $0x99] sm:$0xff]
      %v2561 = vld [vmem:[#allocation4 + $0xa9] sm:$0xff]
      %v2562 = vld [vmem:[#allocation4 + $0xb1] sm:$0xff]
      %v2563 = vld [vmem:[#allocation4 + $0xc1] sm:$0xff]
      %v2564 = vld [vmem:[#allocation4 + $0xc9] sm:$0xff]
      %v2565 = vld [vmem:[#allocation4 + $0xd9] sm:$0xff]
      %v2566 = vld [vmem:[#allocation4 + $0xe1] sm:$0xff]
      %v2567 = vld [vmem:[#allocation4 + $0xf1] sm:$0xff]
      %v2568 = vld [vmem:[#allocation4 + $0xf9] sm:$0xff]
      %v2569 = vld [vmem:[#allocation4 + $0x109] sm:$0xff]
      %v2570 = vld [vmem:[#allocation4 + $0x111] sm:$0xff]
      %v2571 = vld [vmem:[#allocation4 + $0x121] sm:$0xff]
      %v2572 = vld [vmem:[#allocation4 + $0x129] sm:$0xff]
      %v2573 = vld [vmem:[#allocation4 + $0x139] sm:$0xff]
      %v2574 = vld [vmem:[#allocation4 + $0x141] sm:$0xff]
      %v2575 = vld [vmem:[#allocation4 + $0x151] sm:$0xff]
      %v2576 = vld [vmem:[#allocation4 + $0x159] sm:$0xff]
      %v2577 = vld [vmem:[#allocation4 + $0x169] sm:$0xff]
      %v2578 = vld [vmem:[#allocation4 + $0x171] sm:$0xff]
      %2611 = vrot.lane.b32.xlu0 %v2547, 32
      %v2612 = vpop.permute.xlu0 %2611
      %2613 = vrot.lane.b32.xlu0 %v2548, 32
      %v2614 = vpop.permute.xlu0 %2613
      %2615 = vrot.lane.b32.xlu0 %v2549, 32
      %v2616 = vpop.permute.xlu0 %2615
      %2617 = vrot.lane.b32.xlu0 %v2550, 32
      %v2618 = vpop.permute.xlu0 %2617
      %2619 = vrot.lane.b32.xlu0 %v2551, 32
      %v2620 = vpop.permute.xlu0 %2619
      %2621 = vrot.lane.b32.xlu0 %v2552, 32
      %v2622 = vpop.permute.xlu0 %2621
      %2623 = vrot.lane.b32.xlu0 %v2553, 32
      %v2624 = vpop.permute.xlu0 %2623
      %2625 = vrot.lane.b32.xlu0 %v2554, 32
      %v2626 = vpop.permute.xlu0 %2625
      %2627 = vrot.lane.b32.xlu0 %v2555, 32
      %v2628 = vpop.permute.xlu0 %2627
      %2629 = vrot.lane.b32.xlu0 %v2556, 32
      %v2630 = vpop.permute.xlu0 %2629
      %2631 = vrot.lane.b32.xlu0 %v2557, 32
      %v2632 = vpop.permute.xlu0 %2631
      %2633 = vrot.lane.b32.xlu0 %v2558, 32
      %v2634 = vpop.permute.xlu0 %2633
      %2635 = vrot.lane.b32.xlu0 %v2559, 32
      %v2636 = vpop.permute.xlu0 %2635
      %2637 = vrot.lane.b32.xlu0 %v2560, 32
      %v2638 = vpop.permute.xlu0 %2637
      %2639 = vrot.lane.b32.xlu0 %v2561, 32
      %v2640 = vpop.permute.xlu0 %2639
      %2641 = vrot.lane.b32.xlu0 %v2562, 32
      %v2642 = vpop.permute.xlu0 %2641
      %2643 = vrot.lane.b32.xlu0 %v2563, 32
      %v2644 = vpop.permute.xlu0 %2643
      %2645 = vrot.lane.b32.xlu0 %v2564, 32
      %v2646 = vpop.permute.xlu0 %2645
      %2647 = vrot.lane.b32.xlu0 %v2565, 32
      %v2648 = vpop.permute.xlu0 %2647
      %2649 = vrot.lane.b32.xlu0 %v2566, 32
      %v2650 = vpop.permute.xlu0 %2649
      %2651 = vrot.lane.b32.xlu0 %v2567, 32
      %v2652 = vpop.permute.xlu0 %2651
      %2653 = vrot.lane.b32.xlu0 %v2568, 32
      %v2654 = vpop.permute.xlu0 %2653
      %2655 = vrot.lane.b32.xlu0 %v2569, 32
      %v2656 = vpop.permute.xlu0 %2655
      %2657 = vrot.lane.b32.xlu0 %v2570, 32
      %v2658 = vpop.permute.xlu0 %2657
      %2659 = vrot.lane.b32.xlu0 %v2571, 32
      %v2660 = vpop.permute.xlu0 %2659
      %2661 = vrot.lane.b32.xlu0 %v2572, 32
      %v2662 = vpop.permute.xlu0 %2661
      %2663 = vrot.lane.b32.xlu0 %v2573, 32
      %v2664 = vpop.permute.xlu0 %2663
      %2665 = vrot.lane.b32.xlu0 %v2574, 32
      %v2666 = vpop.permute.xlu0 %2665
      %2667 = vrot.lane.b32.xlu0 %v2575, 32
      %v2668 = vpop.permute.xlu0 %2667
      %2669 = vrot.lane.b32.xlu0 %v2576, 32
      %v2670 = vpop.permute.xlu0 %2669
      %2671 = vrot.lane.b32.xlu0 %v2577, 32
      %v2672 = vpop.permute.xlu0 %2671
      %2673 = vrot.lane.b32.xlu0 %v2578, 32
      %v2674 = vpop.permute.xlu0 %2673
      %vm2707 = vcmask 523520
      %2708 = vst.msk [vmem:[#allocation3] sm:$0xff] %vm2707, %v2612
      %2709 = vst.msk [vmem:[#allocation3 + $0x18] sm:$0xff] %vm2707, %v2614
      %2710 = vst.msk [vmem:[#allocation3 + $0x30] sm:$0xff] %vm2707, %v2616
      %2711 = vst.msk [vmem:[#allocation3 + $0x48] sm:$0xff] %vm2707, %v2618
      %2712 = vst.msk [vmem:[#allocation3 + $0x60] sm:$0xff] %vm2707, %v2620
      %2713 = vst.msk [vmem:[#allocation3 + $0x78] sm:$0xff] %vm2707, %v2622
      %2714 = vst.msk [vmem:[#allocation3 + $0x90] sm:$0xff] %vm2707, %v2624
      %2715 = vst.msk [vmem:[#allocation3 + $0xa8] sm:$0xff] %vm2707, %v2626
      %2716 = vst.msk [vmem:[#allocation3 + $0xc0] sm:$0xff] %vm2707, %v2628
      %2717 = vst.msk [vmem:[#allocation3 + $0xd8] sm:$0xff] %vm2707, %v2630
      %2718 = vst.msk [vmem:[#allocation3 + $0xf0] sm:$0xff] %vm2707, %v2632
      %2719 = vst.msk [vmem:[#allocation3 + $0x108] sm:$0xff] %vm2707, %v2634
      %2720 = vst.msk [vmem:[#allocation3 + $0x120] sm:$0xff] %vm2707, %v2636
      %2721 = vst.msk [vmem:[#allocation3 + $0x138] sm:$0xff] %vm2707, %v2638
      %2722 = vst.msk [vmem:[#allocation3 + $0x150] sm:$0xff] %vm2707, %v2640
      %2723 = vst.msk [vmem:[#allocation3 + $0x168] sm:$0xff] %vm2707, %v2642
      %2724 = vst.msk [vmem:[#allocation3 + $0x180] sm:$0xff] %vm2707, %v2644
      %2725 = vst.msk [vmem:[#allocation3 + $0x198] sm:$0xff] %vm2707, %v2646
      %2726 = vst.msk [vmem:[#allocation3 + $0x1b0] sm:$0xff] %vm2707, %v2648
      %2727 = vst.msk [vmem:[#allocation3 + $0x1c8] sm:$0xff] %vm2707, %v2650
      %2728 = vst.msk [vmem:[#allocation3 + $0x1e0] sm:$0xff] %vm2707, %v2652
      %2729 = vst.msk [vmem:[#allocation3 + $0x1f8] sm:$0xff] %vm2707, %v2654
      %2730 = vst.msk [vmem:[#allocation3 + $0x210] sm:$0xff] %vm2707, %v2656
      %2731 = vst.msk [vmem:[#allocation3 + $0x228] sm:$0xff] %vm2707, %v2658
      %2732 = vst.msk [vmem:[#allocation3 + $0x240] sm:$0xff] %vm2707, %v2660
      %2733 = vst.msk [vmem:[#allocation3 + $0x258] sm:$0xff] %vm2707, %v2662
      %2734 = vst.msk [vmem:[#allocation3 + $0x270] sm:$0xff] %vm2707, %v2664
      %2735 = vst.msk [vmem:[#allocation3 + $0x288] sm:$0xff] %vm2707, %v2666
      %2736 = vst.msk [vmem:[#allocation3 + $0x2a0] sm:$0xff] %vm2707, %v2668
      %2737 = vst.msk [vmem:[#allocation3 + $0x2b8] sm:$0xff] %vm2707, %v2670
      %2738 = vst.msk [vmem:[#allocation3 + $0x2d0] sm:$0xff] %vm2707, %v2672
      %2739 = vst.msk [vmem:[#allocation3 + $0x2e8] sm:$0xff] %vm2707, %v2674
      %v2740 = vld [vmem:[#allocation4 + $0x2] sm:$0xff]
      %v2741 = vld [vmem:[#allocation4 + $0xa] sm:$0xff]
      %v2742 = vld [vmem:[#allocation4 + $0x1a] sm:$0xff]
      %v2743 = vld [vmem:[#allocation4 + $0x22] sm:$0xff]
      %v2744 = vld [vmem:[#allocation4 + $0x32] sm:$0xff]
      %v2745 = vld [vmem:[#allocation4 + $0x3a] sm:$0xff]
      %v2746 = vld [vmem:[#allocation4 + $0x4a] sm:$0xff]
      %v2747 = vld [vmem:[#allocation4 + $0x52] sm:$0xff]
      %v2748 = vld [vmem:[#allocation4 + $0x62] sm:$0xff]
      %v2749 = vld [vmem:[#allocation4 + $0x6a] sm:$0xff]
      %v2750 = vld [vmem:[#allocation4 + $0x7a] sm:$0xff]
      %v2751 = vld [vmem:[#allocation4 + $0x82] sm:$0xff]
      %v2752 = vld [vmem:[#allocation4 + $0x92] sm:$0xff]
      %v2753 = vld [vmem:[#allocation4 + $0x9a] sm:$0xff]
      %v2754 = vld [vmem:[#allocation4 + $0xaa] sm:$0xff]
      %v2755 = vld [vmem:[#allocation4 + $0xb2] sm:$0xff]
      %v2756 = vld [vmem:[#allocation4 + $0xc2] sm:$0xff]
      %v2757 = vld [vmem:[#allocation4 + $0xca] sm:$0xff]
      %v2758 = vld [vmem:[#allocation4 + $0xda] sm:$0xff]
      %v2759 = vld [vmem:[#allocation4 + $0xe2] sm:$0xff]
      %v2760 = vld [vmem:[#allocation4 + $0xf2] sm:$0xff]
      %v2761 = vld [vmem:[#allocation4 + $0xfa] sm:$0xff]
      %v2762 = vld [vmem:[#allocation4 + $0x10a] sm:$0xff]
      %v2763 = vld [vmem:[#allocation4 + $0x112] sm:$0xff]
      %v2764 = vld [vmem:[#allocation4 + $0x122] sm:$0xff]
      %v2765 = vld [vmem:[#allocation4 + $0x12a] sm:$0xff]
      %v2766 = vld [vmem:[#allocation4 + $0x13a] sm:$0xff]
      %v2767 = vld [vmem:[#allocation4 + $0x142] sm:$0xff]
      %v2768 = vld [vmem:[#allocation4 + $0x152] sm:$0xff]
      %v2769 = vld [vmem:[#allocation4 + $0x15a] sm:$0xff]
      %v2770 = vld [vmem:[#allocation4 + $0x16a] sm:$0xff]
      %v2771 = vld [vmem:[#allocation4 + $0x172] sm:$0xff]
      %2804 = vrot.lane.b32.xlu0 %v2740, 64
      %v2805 = vpop.permute.xlu0 %2804
      %2806 = vrot.lane.b32.xlu0 %v2741, 64
      %v2807 = vpop.permute.xlu0 %2806
      %2808 = vrot.lane.b32.xlu0 %v2742, 64
      %v2809 = vpop.permute.xlu0 %2808
      %2810 = vrot.lane.b32.xlu0 %v2743, 64
      %v2811 = vpop.permute.xlu0 %2810
      %2812 = vrot.lane.b32.xlu0 %v2744, 64
      %v2813 = vpop.permute.xlu0 %2812
      %2814 = vrot.lane.b32.xlu0 %v2745, 64
      %v2815 = vpop.permute.xlu0 %2814
      %2816 = vrot.lane.b32.xlu0 %v2746, 64
      %v2817 = vpop.permute.xlu0 %2816
      %2818 = vrot.lane.b32.xlu0 %v2747, 64
      %v2819 = vpop.permute.xlu0 %2818
      %2820 = vrot.lane.b32.xlu0 %v2748, 64
      %v2821 = vpop.permute.xlu0 %2820
      %2822 = vrot.lane.b32.xlu0 %v2749, 64
      %v2823 = vpop.permute.xlu0 %2822
      %2824 = vrot.lane.b32.xlu0 %v2750, 64
      %v2825 = vpop.permute.xlu0 %2824
      %2826 = vrot.lane.b32.xlu0 %v2751, 64
      %v2827 = vpop.permute.xlu0 %2826
      %2828 = vrot.lane.b32.xlu0 %v2752, 64
      %v2829 = vpop.permute.xlu0 %2828
      %2830 = vrot.lane.b32.xlu0 %v2753, 64
      %v2831 = vpop.permute.xlu0 %2830
      %2832 = vrot.lane.b32.xlu0 %v2754, 64
      %v2833 = vpop.permute.xlu0 %2832
      %2834 = vrot.lane.b32.xlu0 %v2755, 64
      %v2835 = vpop.permute.xlu0 %2834
      %2836 = vrot.lane.b32.xlu0 %v2756, 64
      %v2837 = vpop.permute.xlu0 %2836
      %2838 = vrot.lane.b32.xlu0 %v2757, 64
      %v2839 = vpop.permute.xlu0 %2838
      %2840 = vrot.lane.b32.xlu0 %v2758, 64
      %v2841 = vpop.permute.xlu0 %2840
      %2842 = vrot.lane.b32.xlu0 %v2759, 64
      %v2843 = vpop.permute.xlu0 %2842
      %2844 = vrot.lane.b32.xlu0 %v2760, 64
      %v2845 = vpop.permute.xlu0 %2844
      %2846 = vrot.lane.b32.xlu0 %v2761, 64
      %v2847 = vpop.permute.xlu0 %2846
      %2848 = vrot.lane.b32.xlu0 %v2762, 64
      %v2849 = vpop.permute.xlu0 %2848
      %2850 = vrot.lane.b32.xlu0 %v2763, 64
      %v2851 = vpop.permute.xlu0 %2850
      %2852 = vrot.lane.b32.xlu0 %v2764, 64
      %v2853 = vpop.permute.xlu0 %2852
      %2854 = vrot.lane.b32.xlu0 %v2765, 64
      %v2855 = vpop.permute.xlu0 %2854
      %2856 = vrot.lane.b32.xlu0 %v2766, 64
      %v2857 = vpop.permute.xlu0 %2856
      %2858 = vrot.lane.b32.xlu0 %v2767, 64
      %v2859 = vpop.permute.xlu0 %2858
      %2860 = vrot.lane.b32.xlu0 %v2768, 64
      %v2861 = vpop.permute.xlu0 %2860
      %2862 = vrot.lane.b32.xlu0 %v2769, 64
      %v2863 = vpop.permute.xlu0 %2862
      %2864 = vrot.lane.b32.xlu0 %v2770, 64
      %v2865 = vpop.permute.xlu0 %2864
      %2866 = vrot.lane.b32.xlu0 %v2771, 64
      %v2867 = vpop.permute.xlu0 %2866
      %vm2900 = vcmask 785920
      %2901 = vst.msk [vmem:[#allocation3] sm:$0xff] %vm2900, %v2805
      %2902 = vst.msk [vmem:[#allocation3 + $0x18] sm:$0xff] %vm2900, %v2807
      %2903 = vst.msk [vmem:[#allocation3 + $0x30] sm:$0xff] %vm2900, %v2809
      %2904 = vst.msk [vmem:[#allocation3 + $0x48] sm:$0xff] %vm2900, %v2811
      %2905 = vst.msk [vmem:[#allocation3 + $0x60] sm:$0xff] %vm2900, %v2813
      %2906 = vst.msk [vmem:[#allocation3 + $0x78] sm:$0xff] %vm2900, %v2815
      %2907 = vst.msk [vmem:[#allocation3 + $0x90] sm:$0xff] %vm2900, %v2817
      %2908 = vst.msk [vmem:[#allocation3 + $0xa8] sm:$0xff] %vm2900, %v2819
      %2909 = vst.msk [vmem:[#allocation3 + $0xc0] sm:$0xff] %vm2900, %v2821
      %2910 = vst.msk [vmem:[#allocation3 + $0xd8] sm:$0xff] %vm2900, %v2823
      %2911 = vst.msk [vmem:[#allocation3 + $0xf0] sm:$0xff] %vm2900, %v2825
      %2912 = vst.msk [vmem:[#allocation3 + $0x108] sm:$0xff] %vm2900, %v2827
      %2913 = vst.msk [vmem:[#allocation3 + $0x120] sm:$0xff] %vm2900, %v2829
      %2914 = vst.msk [vmem:[#allocation3 + $0x138] sm:$0xff] %vm2900, %v2831
      %2915 = vst.msk [vmem:[#allocation3 + $0x150] sm:$0xff] %vm2900, %v2833
      %2916 = vst.msk [vmem:[#allocation3 + $0x168] sm:$0xff] %vm2900, %v2835
      %2917 = vst.msk [vmem:[#allocation3 + $0x180] sm:$0xff] %vm2900, %v2837
      %2918 = vst.msk [vmem:[#allocation3 + $0x198] sm:$0xff] %vm2900, %v2839
      %2919 = vst.msk [vmem:[#allocation3 + $0x1b0] sm:$0xff] %vm2900, %v2841
      %2920 = vst.msk [vmem:[#allocation3 + $0x1c8] sm:$0xff] %vm2900, %v2843
      %2921 = vst.msk [vmem:[#allocation3 + $0x1e0] sm:$0xff] %vm2900, %v2845
      %2922 = vst.msk [vmem:[#allocation3 + $0x1f8] sm:$0xff] %vm2900, %v2847
      %2923 = vst.msk [vmem:[#allocation3 + $0x210] sm:$0xff] %vm2900, %v2849
      %2924 = vst.msk [vmem:[#allocation3 + $0x228] sm:$0xff] %vm2900, %v2851
      %2925 = vst.msk [vmem:[#allocation3 + $0x240] sm:$0xff] %vm2900, %v2853
      %2926 = vst.msk [vmem:[#allocation3 + $0x258] sm:$0xff] %vm2900, %v2855
      %2927 = vst.msk [vmem:[#allocation3 + $0x270] sm:$0xff] %vm2900, %v2857
      %2928 = vst.msk [vmem:[#allocation3 + $0x288] sm:$0xff] %vm2900, %v2859
      %2929 = vst.msk [vmem:[#allocation3 + $0x2a0] sm:$0xff] %vm2900, %v2861
      %2930 = vst.msk [vmem:[#allocation3 + $0x2b8] sm:$0xff] %vm2900, %v2863
      %2931 = vst.msk [vmem:[#allocation3 + $0x2d0] sm:$0xff] %vm2900, %v2865
      %2932 = vst.msk [vmem:[#allocation3 + $0x2e8] sm:$0xff] %vm2900, %v2867
      %v2933 = vld [vmem:[%s2413] sm:$0xff]
      %v2934 = vld [vmem:[%s2413 + $0x8] sm:$0xff]
      %v2935 = vld [vmem:[%s2413 + $0x18] sm:$0xff]
      %v2936 = vld [vmem:[%s2413 + $0x20] sm:$0xff]
      %v2937 = vld [vmem:[%s2413 + $0x30] sm:$0xff]
      %v2938 = vld [vmem:[%s2413 + $0x38] sm:$0xff]
      %v2939 = vld [vmem:[%s2413 + $0x48] sm:$0xff]
      %v2940 = vld [vmem:[%s2413 + $0x50] sm:$0xff]
      %v2941 = vld [vmem:[%s2413 + $0x60] sm:$0xff]
      %v2942 = vld [vmem:[%s2413 + $0x68] sm:$0xff]
      %v2943 = vld [vmem:[%s2413 + $0x78] sm:$0xff]
      %v2944 = vld [vmem:[%s2413 + $0x80] sm:$0xff]
      %v2945 = vld [vmem:[%s2413 + $0x90] sm:$0xff]
      %v2946 = vld [vmem:[%s2413 + $0x98] sm:$0xff]
      %v2947 = vld [vmem:[%s2413 + $0xa8] sm:$0xff]
      %v2948 = vld [vmem:[%s2413 + $0xb0] sm:$0xff]
      %v2949 = vld [vmem:[%s2413 + $0xc0] sm:$0xff]
      %v2950 = vld [vmem:[%s2413 + $0xc8] sm:$0xff]
      %v2951 = vld [vmem:[%s2413 + $0xd8] sm:$0xff]
      %v2952 = vld [vmem:[%s2413 + $0xe0] sm:$0xff]
      %v2953 = vld [vmem:[%s2413 + $0xf0] sm:$0xff]
      %v2954 = vld [vmem:[%s2413 + $0xf8] sm:$0xff]
      %v2955 = vld [vmem:[%s2413 + $0x108] sm:$0xff]
      %v2956 = vld [vmem:[%s2413 + $0x110] sm:$0xff]
      %v2957 = vld [vmem:[%s2413 + $0x120] sm:$0xff]
      %v2958 = vld [vmem:[%s2413 + $0x128] sm:$0xff]
      %v2959 = vld [vmem:[%s2413 + $0x138] sm:$0xff]
      %v2960 = vld [vmem:[%s2413 + $0x140] sm:$0xff]
      %v2961 = vld [vmem:[%s2413 + $0x150] sm:$0xff]
      %v2962 = vld [vmem:[%s2413 + $0x158] sm:$0xff]
      %v2963 = vld [vmem:[%s2413 + $0x168] sm:$0xff]
      %v2964 = vld [vmem:[%s2413 + $0x170] sm:$0xff]
      %2997 = vrot.lane.b32.xlu0 %v2933, 96
      %v2998 = vpop.permute.xlu0 %2997
      %2999 = vrot.lane.b32.xlu0 %v2934, 96
      %v3000 = vpop.permute.xlu0 %2999
      %3001 = vrot.lane.b32.xlu0 %v2935, 96
      %v3002 = vpop.permute.xlu0 %3001
      %3003 = vrot.lane.b32.xlu0 %v2936, 96
      %v3004 = vpop.permute.xlu0 %3003
      %3005 = vrot.lane.b32.xlu0 %v2937, 96
      %v3006 = vpop.permute.xlu0 %3005
      %3007 = vrot.lane.b32.xlu0 %v2938, 96
      %v3008 = vpop.permute.xlu0 %3007
      %3009 = vrot.lane.b32.xlu0 %v2939, 96
      %v3010 = vpop.permute.xlu0 %3009
      %3011 = vrot.lane.b32.xlu0 %v2940, 96
      %v3012 = vpop.permute.xlu0 %3011
      %3013 = vrot.lane.b32.xlu0 %v2941, 96
      %v3014 = vpop.permute.xlu0 %3013
      %3015 = vrot.lane.b32.xlu0 %v2942, 96
      %v3016 = vpop.permute.xlu0 %3015
      %3017 = vrot.lane.b32.xlu0 %v2943, 96
      %v3018 = vpop.permute.xlu0 %3017
      %3019 = vrot.lane.b32.xlu0 %v2944, 96
      %v3020 = vpop.permute.xlu0 %3019
      %3021 = vrot.lane.b32.xlu0 %v2945, 96
      %v3022 = vpop.permute.xlu0 %3021
      %3023 = vrot.lane.b32.xlu0 %v2946, 96
      %v3024 = vpop.permute.xlu0 %3023
      %3025 = vrot.lane.b32.xlu0 %v2947, 96
      %v3026 = vpop.permute.xlu0 %3025
      %3027 = vrot.lane.b32.xlu0 %v2948, 96
      %v3028 = vpop.permute.xlu0 %3027
      %3029 = vrot.lane.b32.xlu0 %v2949, 96
      %v3030 = vpop.permute.xlu0 %3029
      %3031 = vrot.lane.b32.xlu0 %v2950, 96
      %v3032 = vpop.permute.xlu0 %3031
      %3033 = vrot.lane.b32.xlu0 %v2951, 96
      %v3034 = vpop.permute.xlu0 %3033
      %3035 = vrot.lane.b32.xlu0 %v2952, 96
      %v3036 = vpop.permute.xlu0 %3035
      %3037 = vrot.lane.b32.xlu0 %v2953, 96
      %v3038 = vpop.permute.xlu0 %3037
      %3039 = vrot.lane.b32.xlu0 %v2954, 96
      %v3040 = vpop.permute.xlu0 %3039
      %3041 = vrot.lane.b32.xlu0 %v2955, 96
      %v3042 = vpop.permute.xlu0 %3041
      %3043 = vrot.lane.b32.xlu0 %v2956, 96
      %v3044 = vpop.permute.xlu0 %3043
      %3045 = vrot.lane.b32.xlu0 %v2957, 96
      %v3046 = vpop.permute.xlu0 %3045
      %3047 = vrot.lane.b32.xlu0 %v2958, 96
      %v3048 = vpop.permute.xlu0 %3047
      %3049 = vrot.lane.b32.xlu0 %v2959, 96
      %v3050 = vpop.permute.xlu0 %3049
      %3051 = vrot.lane.b32.xlu0 %v2960, 96
      %v3052 = vpop.permute.xlu0 %3051
      %3053 = vrot.lane.b32.xlu0 %v2961, 96
      %v3054 = vpop.permute.xlu0 %3053
      %3055 = vrot.lane.b32.xlu0 %v2962, 96
      %v3056 = vpop.permute.xlu0 %3055
      %3057 = vrot.lane.b32.xlu0 %v2963, 96
      %v3058 = vpop.permute.xlu0 %3057
      %3059 = vrot.lane.b32.xlu0 %v2964, 96
      %v3060 = vpop.permute.xlu0 %3059
      %vm3093 = vcmask 1048320
      %3094 = vst.msk [vmem:[#allocation3] sm:$0xff] %vm3093, %v2998
      %3095 = vst.msk [vmem:[#allocation3 + $0x18] sm:$0xff] %vm3093, %v3000
      %3096 = vst.msk [vmem:[#allocation3 + $0x30] sm:$0xff] %vm3093, %v3002
      %3097 = vst.msk [vmem:[#allocation3 + $0x48] sm:$0xff] %vm3093, %v3004
      %3098 = vst.msk [vmem:[#allocation3 + $0x60] sm:$0xff] %vm3093, %v3006
      %3099 = vst.msk [vmem:[#allocation3 + $0x78] sm:$0xff] %vm3093, %v3008
      %3100 = vst.msk [vmem:[#allocation3 + $0x90] sm:$0xff] %vm3093, %v3010
      %3101 = vst.msk [vmem:[#allocation3 + $0xa8] sm:$0xff] %vm3093, %v3012
      %3102 = vst.msk [vmem:[#allocation3 + $0xc0] sm:$0xff] %vm3093, %v3014
      %3103 = vst.msk [vmem:[#allocation3 + $0xd8] sm:$0xff] %vm3093, %v3016
      %3104 = vst.msk [vmem:[#allocation3 + $0xf0] sm:$0xff] %vm3093, %v3018
      %3105 = vst.msk [vmem:[#allocation3 + $0x108] sm:$0xff] %vm3093, %v3020
      %3106 = vst.msk [vmem:[#allocation3 + $0x120] sm:$0xff] %vm3093, %v3022
      %3107 = vst.msk [vmem:[#allocation3 + $0x138] sm:$0xff] %vm3093, %v3024
      %3108 = vst.msk [vmem:[#allocation3 + $0x150] sm:$0xff] %vm3093, %v3026
      %3109 = vst.msk [vmem:[#allocation3 + $0x168] sm:$0xff] %vm3093, %v3028
      %3110 = vst.msk [vmem:[#allocation3 + $0x180] sm:$0xff] %vm3093, %v3030
      %3111 = vst.msk [vmem:[#allocation3 + $0x198] sm:$0xff] %vm3093, %v3032
      %3112 = vst.msk [vmem:[#allocation3 + $0x1b0] sm:$0xff] %vm3093, %v3034
      %3113 = vst.msk [vmem:[#allocation3 + $0x1c8] sm:$0xff] %vm3093, %v3036
      %3114 = vst.msk [vmem:[#allocation3 + $0x1e0] sm:$0xff] %vm3093, %v3038
      %3115 = vst.msk [vmem:[#allocation3 + $0x1f8] sm:$0xff] %vm3093, %v3040
      %3116 = vst.msk [vmem:[#allocation3 + $0x210] sm:$0xff] %vm3093, %v3042
      %3117 = vst.msk [vmem:[#allocation3 + $0x228] sm:$0xff] %vm3093, %v3044
      %3118 = vst.msk [vmem:[#allocation3 + $0x240] sm:$0xff] %vm3093, %v3046
      %3119 = vst.msk [vmem:[#allocation3 + $0x258] sm:$0xff] %vm3093, %v3048
      %3120 = vst.msk [vmem:[#allocation3 + $0x270] sm:$0xff] %vm3093, %v3050
      %3121 = vst.msk [vmem:[#allocation3 + $0x288] sm:$0xff] %vm3093, %v3052
      %3122 = vst.msk [vmem:[#allocation3 + $0x2a0] sm:$0xff] %vm3093, %v3054
      %3123 = vst.msk [vmem:[#allocation3 + $0x2b8] sm:$0xff] %vm3093, %v3056
      %3124 = vst.msk [vmem:[#allocation3 + $0x2d0] sm:$0xff] %vm3093, %v3058
      %3125 = vst.msk [vmem:[#allocation3 + $0x2e8] sm:$0xff] %vm3093, %v3060
      %v3126 = vld [vmem:[%s2413 + $0x1] sm:$0xff]
      %v3127 = vld [vmem:[%s2413 + $0x9] sm:$0xff]
      %v3128 = vld [vmem:[%s2413 + $0x19] sm:$0xff]
      %v3129 = vld [vmem:[%s2413 + $0x21] sm:$0xff]
      %v3130 = vld [vmem:[%s2413 + $0x31] sm:$0xff]
      %v3131 = vld [vmem:[%s2413 + $0x39] sm:$0xff]
      %v3132 = vld [vmem:[%s2413 + $0x49] sm:$0xff]
      %v3133 = vld [vmem:[%s2413 + $0x51] sm:$0xff]
      %v3134 = vld [vmem:[%s2413 + $0x61] sm:$0xff]
      %v3135 = vld [vmem:[%s2413 + $0x69] sm:$0xff]
      %v3136 = vld [vmem:[%s2413 + $0x79] sm:$0xff]
      %v3137 = vld [vmem:[%s2413 + $0x81] sm:$0xff]
      %v3138 = vld [vmem:[%s2413 + $0x91] sm:$0xff]
      %v3139 = vld [vmem:[%s2413 + $0x99] sm:$0xff]
      %v3140 = vld [vmem:[%s2413 + $0xa9] sm:$0xff]
      %v3141 = vld [vmem:[%s2413 + $0xb1] sm:$0xff]
      %v3142 = vld [vmem:[%s2413 + $0xc1] sm:$0xff]
      %v3143 = vld [vmem:[%s2413 + $0xc9] sm:$0xff]
      %v3144 = vld [vmem:[%s2413 + $0xd9] sm:$0xff]
      %v3145 = vld [vmem:[%s2413 + $0xe1] sm:$0xff]
      %v3146 = vld [vmem:[%s2413 + $0xf1] sm:$0xff]
      %v3147 = vld [vmem:[%s2413 + $0xf9] sm:$0xff]
      %v3148 = vld [vmem:[%s2413 + $0x109] sm:$0xff]
      %v3149 = vld [vmem:[%s2413 + $0x111] sm:$0xff]
      %v3150 = vld [vmem:[%s2413 + $0x121] sm:$0xff]
      %v3151 = vld [vmem:[%s2413 + $0x129] sm:$0xff]
      %v3152 = vld [vmem:[%s2413 + $0x139] sm:$0xff]
      %v3153 = vld [vmem:[%s2413 + $0x141] sm:$0xff]
      %v3154 = vld [vmem:[%s2413 + $0x151] sm:$0xff]
      %v3155 = vld [vmem:[%s2413 + $0x159] sm:$0xff]
      %v3156 = vld [vmem:[%s2413 + $0x169] sm:$0xff]
      %v3157 = vld [vmem:[%s2413 + $0x171] sm:$0xff]
      %3158 = vst.msk [vmem:[#allocation3 + $0x8] sm:$0xff] %vm346, %v3126
      %3159 = vst.msk [vmem:[#allocation3 + $0x20] sm:$0xff] %vm346, %v3127
      %3160 = vst.msk [vmem:[#allocation3 + $0x38] sm:$0xff] %vm346, %v3128
      %3161 = vst.msk [vmem:[#allocation3 + $0x50] sm:$0xff] %vm346, %v3129
      %3162 = vst.msk [vmem:[#allocation3 + $0x68] sm:$0xff] %vm346, %v3130
      %3163 = vst.msk [vmem:[#allocation3 + $0x80] sm:$0xff] %vm346, %v3131
      %3164 = vst.msk [vmem:[#allocation3 + $0x98] sm:$0xff] %vm346, %v3132
      %3165 = vst.msk [vmem:[#allocation3 + $0xb0] sm:$0xff] %vm346, %v3133
      %3166 = vst.msk [vmem:[#allocation3 + $0xc8] sm:$0xff] %vm346, %v3134
      %3167 = vst.msk [vmem:[#allocation3 + $0xe0] sm:$0xff] %vm346, %v3135
      %3168 = vst.msk [vmem:[#allocation3 + $0xf8] sm:$0xff] %vm346, %v3136
      %3169 = vst.msk [vmem:[#allocation3 + $0x110] sm:$0xff] %vm346, %v3137
      %3170 = vst.msk [vmem:[#allocation3 + $0x128] sm:$0xff] %vm346, %v3138
      %3171 = vst.msk [vmem:[#allocation3 + $0x140] sm:$0xff] %vm346, %v3139
      %3172 = vst.msk [vmem:[#allocation3 + $0x158] sm:$0xff] %vm346, %v3140
      %3173 = vst.msk [vmem:[#allocation3 + $0x170] sm:$0xff] %vm346, %v3141
      %3174 = vst.msk [vmem:[#allocation3 + $0x188] sm:$0xff] %vm346, %v3142
      %3175 = vst.msk [vmem:[#allocation3 + $0x1a0] sm:$0xff] %vm346, %v3143
      %3176 = vst.msk [vmem:[#allocation3 + $0x1b8] sm:$0xff] %vm346, %v3144
      %3177 = vst.msk [vmem:[#allocation3 + $0x1d0] sm:$0xff] %vm346, %v3145
      %3178 = vst.msk [vmem:[#allocation3 + $0x1e8] sm:$0xff] %vm346, %v3146
      %3179 = vst.msk [vmem:[#allocation3 + $0x200] sm:$0xff] %vm346, %v3147
      %3180 = vst.msk [vmem:[#allocation3 + $0x218] sm:$0xff] %vm346, %v3148
      %3181 = vst.msk [vmem:[#allocation3 + $0x230] sm:$0xff] %vm346, %v3149
      %3182 = vst.msk [vmem:[#allocation3 + $0x248] sm:$0xff] %vm346, %v3150
      %3183 = vst.msk [vmem:[#allocation3 + $0x260] sm:$0xff] %vm346, %v3151
      %3184 = vst.msk [vmem:[#allocation3 + $0x278] sm:$0xff] %vm346, %v3152
      %3185 = vst.msk [vmem:[#allocation3 + $0x290] sm:$0xff] %vm346, %v3153
      %3186 = vst.msk [vmem:[#allocation3 + $0x2a8] sm:$0xff] %vm346, %v3154
      %3187 = vst.msk [vmem:[#allocation3 + $0x2c0] sm:$0xff] %vm346, %v3155
      %3188 = vst.msk [vmem:[#allocation3 + $0x2d8] sm:$0xff] %vm346, %v3156
      %3189 = vst.msk [vmem:[#allocation3 + $0x2f0] sm:$0xff] %vm346, %v3157
      %v3190 = vld [vmem:[%s2413 + $0x2] sm:$0xff]
      %v3191 = vld [vmem:[%s2413 + $0xa] sm:$0xff]
      %v3192 = vld [vmem:[%s2413 + $0x1a] sm:$0xff]
      %v3193 = vld [vmem:[%s2413 + $0x22] sm:$0xff]
      %v3194 = vld [vmem:[%s2413 + $0x32] sm:$0xff]
      %v3195 = vld [vmem:[%s2413 + $0x3a] sm:$0xff]
      %v3196 = vld [vmem:[%s2413 + $0x4a] sm:$0xff]
      %v3197 = vld [vmem:[%s2413 + $0x52] sm:$0xff]
      %v3198 = vld [vmem:[%s2413 + $0x62] sm:$0xff]
      %v3199 = vld [vmem:[%s2413 + $0x6a] sm:$0xff]
      %v3200 = vld [vmem:[%s2413 + $0x7a] sm:$0xff]
      %v3201 = vld [vmem:[%s2413 + $0x82] sm:$0xff]
      %v3202 = vld [vmem:[%s2413 + $0x92] sm:$0xff]
      %v3203 = vld [vmem:[%s2413 + $0x9a] sm:$0xff]
      %v3204 = vld [vmem:[%s2413 + $0xaa] sm:$0xff]
      %v3205 = vld [vmem:[%s2413 + $0xb2] sm:$0xff]
      %v3206 = vld [vmem:[%s2413 + $0xc2] sm:$0xff]
      %v3207 = vld [vmem:[%s2413 + $0xca] sm:$0xff]
      %v3208 = vld [vmem:[%s2413 + $0xda] sm:$0xff]
      %v3209 = vld [vmem:[%s2413 + $0xe2] sm:$0xff]
      %v3210 = vld [vmem:[%s2413 + $0xf2] sm:$0xff]
      %v3211 = vld [vmem:[%s2413 + $0xfa] sm:$0xff]
      %v3212 = vld [vmem:[%s2413 + $0x10a] sm:$0xff]
      %v3213 = vld [vmem:[%s2413 + $0x112] sm:$0xff]
      %v3214 = vld [vmem:[%s2413 + $0x122] sm:$0xff]
      %v3215 = vld [vmem:[%s2413 + $0x12a] sm:$0xff]
      %v3216 = vld [vmem:[%s2413 + $0x13a] sm:$0xff]
      %v3217 = vld [vmem:[%s2413 + $0x142] sm:$0xff]
      %v3218 = vld [vmem:[%s2413 + $0x152] sm:$0xff]
      %v3219 = vld [vmem:[%s2413 + $0x15a] sm:$0xff]
      %v3220 = vld [vmem:[%s2413 + $0x16a] sm:$0xff]
      %v3221 = vld [vmem:[%s2413 + $0x172] sm:$0xff]
      %3254 = vrot.lane.b32.xlu0 %v3190, 32
      %v3255 = vpop.permute.xlu0 %3254
      %3256 = vrot.lane.b32.xlu0 %v3191, 32
      %v3257 = vpop.permute.xlu0 %3256
      %3258 = vrot.lane.b32.xlu0 %v3192, 32
      %v3259 = vpop.permute.xlu0 %3258
      %3260 = vrot.lane.b32.xlu0 %v3193, 32
      %v3261 = vpop.permute.xlu0 %3260
      %3262 = vrot.lane.b32.xlu0 %v3194, 32
      %v3263 = vpop.permute.xlu0 %3262
      %3264 = vrot.lane.b32.xlu0 %v3195, 32
      %v3265 = vpop.permute.xlu0 %3264
      %3266 = vrot.lane.b32.xlu0 %v3196, 32
      %v3267 = vpop.permute.xlu0 %3266
      %3268 = vrot.lane.b32.xlu0 %v3197, 32
      %v3269 = vpop.permute.xlu0 %3268
      %3270 = vrot.lane.b32.xlu0 %v3198, 32
      %v3271 = vpop.permute.xlu0 %3270
      %3272 = vrot.lane.b32.xlu0 %v3199, 32
      %v3273 = vpop.permute.xlu0 %3272
      %3274 = vrot.lane.b32.xlu0 %v3200, 32
      %v3275 = vpop.permute.xlu0 %3274
      %3276 = vrot.lane.b32.xlu0 %v3201, 32
      %v3277 = vpop.permute.xlu0 %3276
      %3278 = vrot.lane.b32.xlu0 %v3202, 32
      %v3279 = vpop.permute.xlu0 %3278
      %3280 = vrot.lane.b32.xlu0 %v3203, 32
      %v3281 = vpop.permute.xlu0 %3280
      %3282 = vrot.lane.b32.xlu0 %v3204, 32
      %v3283 = vpop.permute.xlu0 %3282
      %3284 = vrot.lane.b32.xlu0 %v3205, 32
      %v3285 = vpop.permute.xlu0 %3284
      %3286 = vrot.lane.b32.xlu0 %v3206, 32
      %v3287 = vpop.permute.xlu0 %3286
      %3288 = vrot.lane.b32.xlu0 %v3207, 32
      %v3289 = vpop.permute.xlu0 %3288
      %3290 = vrot.lane.b32.xlu0 %v3208, 32
      %v3291 = vpop.permute.xlu0 %3290
      %3292 = vrot.lane.b32.xlu0 %v3209, 32
      %v3293 = vpop.permute.xlu0 %3292
      %3294 = vrot.lane.b32.xlu0 %v3210, 32
      %v3295 = vpop.permute.xlu0 %3294
      %3296 = vrot.lane.b32.xlu0 %v3211, 32
      %v3297 = vpop.permute.xlu0 %3296
      %3298 = vrot.lane.b32.xlu0 %v3212, 32
      %v3299 = vpop.permute.xlu0 %3298
      %3300 = vrot.lane.b32.xlu0 %v3213, 32
      %v3301 = vpop.permute.xlu0 %3300
      %3302 = vrot.lane.b32.xlu0 %v3214, 32
      %v3303 = vpop.permute.xlu0 %3302
      %3304 = vrot.lane.b32.xlu0 %v3215, 32
      %v3305 = vpop.permute.xlu0 %3304
      %3306 = vrot.lane.b32.xlu0 %v3216, 32
      %v3307 = vpop.permute.xlu0 %3306
      %3308 = vrot.lane.b32.xlu0 %v3217, 32
      %v3309 = vpop.permute.xlu0 %3308
      %3310 = vrot.lane.b32.xlu0 %v3218, 32
      %v3311 = vpop.permute.xlu0 %3310
      %3312 = vrot.lane.b32.xlu0 %v3219, 32
      %v3313 = vpop.permute.xlu0 %3312
      %3314 = vrot.lane.b32.xlu0 %v3220, 32
      %v3315 = vpop.permute.xlu0 %3314
      %3316 = vrot.lane.b32.xlu0 %v3221, 32
      %v3317 = vpop.permute.xlu0 %3316
      %3350 = vst.msk [vmem:[#allocation3 + $0x8] sm:$0xff] %vm2707, %v3255
      %3351 = vst.msk [vmem:[#allocation3 + $0x20] sm:$0xff] %vm2707, %v3257
      %3352 = vst.msk [vmem:[#allocation3 + $0x38] sm:$0xff] %vm2707, %v3259
      %3353 = vst.msk [vmem:[#allocation3 + $0x50] sm:$0xff] %vm2707, %v3261
      %3354 = vst.msk [vmem:[#allocation3 + $0x68] sm:$0xff] %vm2707, %v3263
      %3355 = vst.msk [vmem:[#allocation3 + $0x80] sm:$0xff] %vm2707, %v3265
      %3356 = vst.msk [vmem:[#allocation3 + $0x98] sm:$0xff] %vm2707, %v3267
      %3357 = vst.msk [vmem:[#allocation3 + $0xb0] sm:$0xff] %vm2707, %v3269
      %3358 = vst.msk [vmem:[#allocation3 + $0xc8] sm:$0xff] %vm2707, %v3271
      %3359 = vst.msk [vmem:[#allocation3 + $0xe0] sm:$0xff] %vm2707, %v3273
      %3360 = vst.msk [vmem:[#allocation3 + $0xf8] sm:$0xff] %vm2707, %v3275
      %3361 = vst.msk [vmem:[#allocation3 + $0x110] sm:$0xff] %vm2707, %v3277
      %3362 = vst.msk [vmem:[#allocation3 + $0x128] sm:$0xff] %vm2707, %v3279
      %3363 = vst.msk [vmem:[#allocation3 + $0x140] sm:$0xff] %vm2707, %v3281
      %3364 = vst.msk [vmem:[#allocation3 + $0x158] sm:$0xff] %vm2707, %v3283
      %3365 = vst.msk [vmem:[#allocation3 + $0x170] sm:$0xff] %vm2707, %v3285
      %3366 = vst.msk [vmem:[#allocation3 + $0x188] sm:$0xff] %vm2707, %v3287
      %3367 = vst.msk [vmem:[#allocation3 + $0x1a0] sm:$0xff] %vm2707, %v3289
      %3368 = vst.msk [vmem:[#allocation3 + $0x1b8] sm:$0xff] %vm2707, %v3291
      %3369 = vst.msk [vmem:[#allocation3 + $0x1d0] sm:$0xff] %vm2707, %v3293
      %3370 = vst.msk [vmem:[#allocation3 + $0x1e8] sm:$0xff] %vm2707, %v3295
      %3371 = vst.msk [vmem:[#allocation3 + $0x200] sm:$0xff] %vm2707, %v3297
      %3372 = vst.msk [vmem:[#allocation3 + $0x218] sm:$0xff] %vm2707, %v3299
      %3373 = vst.msk [vmem:[#allocation3 + $0x230] sm:$0xff] %vm2707, %v3301
      %3374 = vst.msk [vmem:[#allocation3 + $0x248] sm:$0xff] %vm2707, %v3303
      %3375 = vst.msk [vmem:[#allocation3 + $0x260] sm:$0xff] %vm2707, %v3305
      %3376 = vst.msk [vmem:[#allocation3 + $0x278] sm:$0xff] %vm2707, %v3307
      %3377 = vst.msk [vmem:[#allocation3 + $0x290] sm:$0xff] %vm2707, %v3309
      %3378 = vst.msk [vmem:[#allocation3 + $0x2a8] sm:$0xff] %vm2707, %v3311
      %3379 = vst.msk [vmem:[#allocation3 + $0x2c0] sm:$0xff] %vm2707, %v3313
      %3380 = vst.msk [vmem:[#allocation3 + $0x2d8] sm:$0xff] %vm2707, %v3315
      %3381 = vst.msk [vmem:[#allocation3 + $0x2f0] sm:$0xff] %vm2707, %v3317
      %s3382 = scalar_lea.vmem [#allocation4], 48
      %v3383 = vld [vmem:[%s3382] sm:$0xff]
      %v3384 = vld [vmem:[%s3382 + $0x8] sm:$0xff]
      %v3385 = vld [vmem:[%s3382 + $0x18] sm:$0xff]
      %v3386 = vld [vmem:[%s3382 + $0x20] sm:$0xff]
      %v3387 = vld [vmem:[%s3382 + $0x30] sm:$0xff]
      %v3388 = vld [vmem:[%s3382 + $0x38] sm:$0xff]
      %v3389 = vld [vmem:[%s3382 + $0x48] sm:$0xff]
      %v3390 = vld [vmem:[%s3382 + $0x50] sm:$0xff]
      %v3391 = vld [vmem:[%s3382 + $0x60] sm:$0xff]
      %v3392 = vld [vmem:[%s3382 + $0x68] sm:$0xff]
      %v3393 = vld [vmem:[%s3382 + $0x78] sm:$0xff]
      %v3394 = vld [vmem:[%s3382 + $0x80] sm:$0xff]
      %v3395 = vld [vmem:[%s3382 + $0x90] sm:$0xff]
      %v3396 = vld [vmem:[%s3382 + $0x98] sm:$0xff]
      %v3397 = vld [vmem:[%s3382 + $0xa8] sm:$0xff]
      %v3398 = vld [vmem:[%s3382 + $0xb0] sm:$0xff]
      %v3399 = vld [vmem:[%s3382 + $0xc0] sm:$0xff]
      %v3400 = vld [vmem:[%s3382 + $0xc8] sm:$0xff]
      %v3401 = vld [vmem:[%s3382 + $0xd8] sm:$0xff]
      %v3402 = vld [vmem:[%s3382 + $0xe0] sm:$0xff]
      %v3403 = vld [vmem:[%s3382 + $0xf0] sm:$0xff]
      %v3404 = vld [vmem:[%s3382 + $0xf8] sm:$0xff]
      %v3405 = vld [vmem:[%s3382 + $0x108] sm:$0xff]
      %v3406 = vld [vmem:[%s3382 + $0x110] sm:$0xff]
      %v3407 = vld [vmem:[%s3382 + $0x120] sm:$0xff]
      %v3408 = vld [vmem:[%s3382 + $0x128] sm:$0xff]
      %v3409 = vld [vmem:[%s3382 + $0x138] sm:$0xff]
      %v3410 = vld [vmem:[%s3382 + $0x140] sm:$0xff]
      %v3411 = vld [vmem:[%s3382 + $0x150] sm:$0xff]
      %v3412 = vld [vmem:[%s3382 + $0x158] sm:$0xff]
      %v3413 = vld [vmem:[%s3382 + $0x168] sm:$0xff]
      %v3414 = vld [vmem:[%s3382 + $0x170] sm:$0xff]
      %3447 = vrot.lane.b32.xlu0 %v3383, 64
      %v3448 = vpop.permute.xlu0 %3447
      %3449 = vrot.lane.b32.xlu0 %v3384, 64
      %v3450 = vpop.permute.xlu0 %3449
      %3451 = vrot.lane.b32.xlu0 %v3385, 64
      %v3452 = vpop.permute.xlu0 %3451
      %3453 = vrot.lane.b32.xlu0 %v3386, 64
      %v3454 = vpop.permute.xlu0 %3453
      %3455 = vrot.lane.b32.xlu0 %v3387, 64
      %v3456 = vpop.permute.xlu0 %3455
      %3457 = vrot.lane.b32.xlu0 %v3388, 64
      %v3458 = vpop.permute.xlu0 %3457
      %3459 = vrot.lane.b32.xlu0 %v3389, 64
      %v3460 = vpop.permute.xlu0 %3459
      %3461 = vrot.lane.b32.xlu0 %v3390, 64
      %v3462 = vpop.permute.xlu0 %3461
      %3463 = vrot.lane.b32.xlu0 %v3391, 64
      %v3464 = vpop.permute.xlu0 %3463
      %3465 = vrot.lane.b32.xlu0 %v3392, 64
      %v3466 = vpop.permute.xlu0 %3465
      %3467 = vrot.lane.b32.xlu0 %v3393, 64
      %v3468 = vpop.permute.xlu0 %3467
      %3469 = vrot.lane.b32.xlu0 %v3394, 64
      %v3470 = vpop.permute.xlu0 %3469
      %3471 = vrot.lane.b32.xlu0 %v3395, 64
      %v3472 = vpop.permute.xlu0 %3471
      %3473 = vrot.lane.b32.xlu0 %v3396, 64
      %v3474 = vpop.permute.xlu0 %3473
      %3475 = vrot.lane.b32.xlu0 %v3397, 64
      %v3476 = vpop.permute.xlu0 %3475
      %3477 = vrot.lane.b32.xlu0 %v3398, 64
      %v3478 = vpop.permute.xlu0 %3477
      %3479 = vrot.lane.b32.xlu0 %v3399, 64
      %v3480 = vpop.permute.xlu0 %3479
      %3481 = vrot.lane.b32.xlu0 %v3400, 64
      %v3482 = vpop.permute.xlu0 %3481
      %3483 = vrot.lane.b32.xlu0 %v3401, 64
      %v3484 = vpop.permute.xlu0 %3483
      %3485 = vrot.lane.b32.xlu0 %v3402, 64
      %v3486 = vpop.permute.xlu0 %3485
      %3487 = vrot.lane.b32.xlu0 %v3403, 64
      %v3488 = vpop.permute.xlu0 %3487
      %3489 = vrot.lane.b32.xlu0 %v3404, 64
      %v3490 = vpop.permute.xlu0 %3489
      %3491 = vrot.lane.b32.xlu0 %v3405, 64
      %v3492 = vpop.permute.xlu0 %3491
      %3493 = vrot.lane.b32.xlu0 %v3406, 64
      %v3494 = vpop.permute.xlu0 %3493
      %3495 = vrot.lane.b32.xlu0 %v3407, 64
      %v3496 = vpop.permute.xlu0 %3495
      %3497 = vrot.lane.b32.xlu0 %v3408, 64
      %v3498 = vpop.permute.xlu0 %3497
      %3499 = vrot.lane.b32.xlu0 %v3409, 64
      %v3500 = vpop.permute.xlu0 %3499
      %3501 = vrot.lane.b32.xlu0 %v3410, 64
      %v3502 = vpop.permute.xlu0 %3501
      %3503 = vrot.lane.b32.xlu0 %v3411, 64
      %v3504 = vpop.permute.xlu0 %3503
      %3505 = vrot.lane.b32.xlu0 %v3412, 64
      %v3506 = vpop.permute.xlu0 %3505
      %3507 = vrot.lane.b32.xlu0 %v3413, 64
      %v3508 = vpop.permute.xlu0 %3507
      %3509 = vrot.lane.b32.xlu0 %v3414, 64
      %v3510 = vpop.permute.xlu0 %3509
      %3543 = vst.msk [vmem:[#allocation3 + $0x8] sm:$0xff] %vm2900, %v3448
      %3544 = vst.msk [vmem:[#allocation3 + $0x20] sm:$0xff] %vm2900, %v3450
      %3545 = vst.msk [vmem:[#allocation3 + $0x38] sm:$0xff] %vm2900, %v3452
      %3546 = vst.msk [vmem:[#allocation3 + $0x50] sm:$0xff] %vm2900, %v3454
      %3547 = vst.msk [vmem:[#allocation3 + $0x68] sm:$0xff] %vm2900, %v3456
      %3548 = vst.msk [vmem:[#allocation3 + $0x80] sm:$0xff] %vm2900, %v3458
      %3549 = vst.msk [vmem:[#allocation3 + $0x98] sm:$0xff] %vm2900, %v3460
      %3550 = vst.msk [vmem:[#allocation3 + $0xb0] sm:$0xff] %vm2900, %v3462
      %3551 = vst.msk [vmem:[#allocation3 + $0xc8] sm:$0xff] %vm2900, %v3464
      %3552 = vst.msk [vmem:[#allocation3 + $0xe0] sm:$0xff] %vm2900, %v3466
      %3553 = vst.msk [vmem:[#allocation3 + $0xf8] sm:$0xff] %vm2900, %v3468
      %3554 = vst.msk [vmem:[#allocation3 + $0x110] sm:$0xff] %vm2900, %v3470
      %3555 = vst.msk [vmem:[#allocation3 + $0x128] sm:$0xff] %vm2900, %v3472
      %3556 = vst.msk [vmem:[#allocation3 + $0x140] sm:$0xff] %vm2900, %v3474
      %3557 = vst.msk [vmem:[#allocation3 + $0x158] sm:$0xff] %vm2900, %v3476
      %3558 = vst.msk [vmem:[#allocation3 + $0x170] sm:$0xff] %vm2900, %v3478
      %3559 = vst.msk [vmem:[#allocation3 + $0x188] sm:$0xff] %vm2900, %v3480
      %3560 = vst.msk [vmem:[#allocation3 + $0x1a0] sm:$0xff] %vm2900, %v3482
      %3561 = vst.msk [vmem:[#allocation3 + $0x1b8] sm:$0xff] %vm2900, %v3484
      %3562 = vst.msk [vmem:[#allocation3 + $0x1d0] sm:$0xff] %vm2900, %v3486
      %3563 = vst.msk [vmem:[#allocation3 + $0x1e8] sm:$0xff] %vm2900, %v3488
      %3564 = vst.msk [vmem:[#allocation3 + $0x200] sm:$0xff] %vm2900, %v3490
      %3565 = vst.msk [vmem:[#allocation3 + $0x218] sm:$0xff] %vm2900, %v3492
      %3566 = vst.msk [vmem:[#allocation3 + $0x230] sm:$0xff] %vm2900, %v3494
      %3567 = vst.msk [vmem:[#allocation3 + $0x248] sm:$0xff] %vm2900, %v3496
      %3568 = vst.msk [vmem:[#allocation3 + $0x260] sm:$0xff] %vm2900, %v3498
      %3569 = vst.msk [vmem:[#allocation3 + $0x278] sm:$0xff] %vm2900, %v3500
      %3570 = vst.msk [vmem:[#allocation3 + $0x290] sm:$0xff] %vm2900, %v3502
      %3571 = vst.msk [vmem:[#allocation3 + $0x2a8] sm:$0xff] %vm2900, %v3504
      %3572 = vst.msk [vmem:[#allocation3 + $0x2c0] sm:$0xff] %vm2900, %v3506
      %3573 = vst.msk [vmem:[#allocation3 + $0x2d8] sm:$0xff] %vm2900, %v3508
      %3574 = vst.msk [vmem:[#allocation3 + $0x2f0] sm:$0xff] %vm2900, %v3510
      %v3575 = vld [vmem:[%s3382 + $0x1] sm:$0xff]
      %v3576 = vld [vmem:[%s3382 + $0x9] sm:$0xff]
      %v3577 = vld [vmem:[%s3382 + $0x19] sm:$0xff]
      %v3578 = vld [vmem:[%s3382 + $0x21] sm:$0xff]
      %v3579 = vld [vmem:[%s3382 + $0x31] sm:$0xff]
      %v3580 = vld [vmem:[%s3382 + $0x39] sm:$0xff]
      %v3581 = vld [vmem:[%s3382 + $0x49] sm:$0xff]
      %v3582 = vld [vmem:[%s3382 + $0x51] sm:$0xff]
      %v3583 = vld [vmem:[%s3382 + $0x61] sm:$0xff]
      %v3584 = vld [vmem:[%s3382 + $0x69] sm:$0xff]
      %v3585 = vld [vmem:[%s3382 + $0x79] sm:$0xff]
      %v3586 = vld [vmem:[%s3382 + $0x81] sm:$0xff]
      %v3587 = vld [vmem:[%s3382 + $0x91] sm:$0xff]
      %v3588 = vld [vmem:[%s3382 + $0x99] sm:$0xff]
      %v3589 = vld [vmem:[%s3382 + $0xa9] sm:$0xff]
      %v3590 = vld [vmem:[%s3382 + $0xb1] sm:$0xff]
      %v3591 = vld [vmem:[%s3382 + $0xc1] sm:$0xff]
      %v3592 = vld [vmem:[%s3382 + $0xc9] sm:$0xff]
      %v3593 = vld [vmem:[%s3382 + $0xd9] sm:$0xff]
      %v3594 = vld [vmem:[%s3382 + $0xe1] sm:$0xff]
      %v3595 = vld [vmem:[%s3382 + $0xf1] sm:$0xff]
      %v3596 = vld [vmem:[%s3382 + $0xf9] sm:$0xff]
      %v3597 = vld [vmem:[%s3382 + $0x109] sm:$0xff]
      %v3598 = vld [vmem:[%s3382 + $0x111] sm:$0xff]
      %v3599 = vld [vmem:[%s3382 + $0x121] sm:$0xff]
      %v3600 = vld [vmem:[%s3382 + $0x129] sm:$0xff]
      %v3601 = vld [vmem:[%s3382 + $0x139] sm:$0xff]
      %v3602 = vld [vmem:[%s3382 + $0x141] sm:$0xff]
      %v3603 = vld [vmem:[%s3382 + $0x151] sm:$0xff]
      %v3604 = vld [vmem:[%s3382 + $0x159] sm:$0xff]
      %v3605 = vld [vmem:[%s3382 + $0x169] sm:$0xff]
      %v3606 = vld [vmem:[%s3382 + $0x171] sm:$0xff]
      %3639 = vrot.lane.b32.xlu0 %v3575, 96
      %v3640 = vpop.permute.xlu0 %3639
      %3641 = vrot.lane.b32.xlu0 %v3576, 96
      %v3642 = vpop.permute.xlu0 %3641
      %3643 = vrot.lane.b32.xlu0 %v3577, 96
      %v3644 = vpop.permute.xlu0 %3643
      %3645 = vrot.lane.b32.xlu0 %v3578, 96
      %v3646 = vpop.permute.xlu0 %3645
      %3647 = vrot.lane.b32.xlu0 %v3579, 96
      %v3648 = vpop.permute.xlu0 %3647
      %3649 = vrot.lane.b32.xlu0 %v3580, 96
      %v3650 = vpop.permute.xlu0 %3649
      %3651 = vrot.lane.b32.xlu0 %v3581, 96
      %v3652 = vpop.permute.xlu0 %3651
      %3653 = vrot.lane.b32.xlu0 %v3582, 96
      %v3654 = vpop.permute.xlu0 %3653
      %3655 = vrot.lane.b32.xlu0 %v3583, 96
      %v3656 = vpop.permute.xlu0 %3655
      %3657 = vrot.lane.b32.xlu0 %v3584, 96
      %v3658 = vpop.permute.xlu0 %3657
      %3659 = vrot.lane.b32.xlu0 %v3585, 96
      %v3660 = vpop.permute.xlu0 %3659
      %3661 = vrot.lane.b32.xlu0 %v3586, 96
      %v3662 = vpop.permute.xlu0 %3661
      %3663 = vrot.lane.b32.xlu0 %v3587, 96
      %v3664 = vpop.permute.xlu0 %3663
      %3665 = vrot.lane.b32.xlu0 %v3588, 96
      %v3666 = vpop.permute.xlu0 %3665
      %3667 = vrot.lane.b32.xlu0 %v3589, 96
      %v3668 = vpop.permute.xlu0 %3667
      %3669 = vrot.lane.b32.xlu0 %v3590, 96
      %v3670 = vpop.permute.xlu0 %3669
      %3671 = vrot.lane.b32.xlu0 %v3591, 96
      %v3672 = vpop.permute.xlu0 %3671
      %3673 = vrot.lane.b32.xlu0 %v3592, 96
      %v3674 = vpop.permute.xlu0 %3673
      %3675 = vrot.lane.b32.xlu0 %v3593, 96
      %v3676 = vpop.permute.xlu0 %3675
      %3677 = vrot.lane.b32.xlu0 %v3594, 96
      %v3678 = vpop.permute.xlu0 %3677
      %3679 = vrot.lane.b32.xlu0 %v3595, 96
      %v3680 = vpop.permute.xlu0 %3679
      %3681 = vrot.lane.b32.xlu0 %v3596, 96
      %v3682 = vpop.permute.xlu0 %3681
      %3683 = vrot.lane.b32.xlu0 %v3597, 96
      %v3684 = vpop.permute.xlu0 %3683
      %3685 = vrot.lane.b32.xlu0 %v3598, 96
      %v3686 = vpop.permute.xlu0 %3685
      %3687 = vrot.lane.b32.xlu0 %v3599, 96
      %v3688 = vpop.permute.xlu0 %3687
      %3689 = vrot.lane.b32.xlu0 %v3600, 96
      %v3690 = vpop.permute.xlu0 %3689
      %3691 = vrot.lane.b32.xlu0 %v3601, 96
      %v3692 = vpop.permute.xlu0 %3691
      %3693 = vrot.lane.b32.xlu0 %v3602, 96
      %v3694 = vpop.permute.xlu0 %3693
      %3695 = vrot.lane.b32.xlu0 %v3603, 96
      %v3696 = vpop.permute.xlu0 %3695
      %3697 = vrot.lane.b32.xlu0 %v3604, 96
      %v3698 = vpop.permute.xlu0 %3697
      %3699 = vrot.lane.b32.xlu0 %v3605, 96
      %v3700 = vpop.permute.xlu0 %3699
      %3701 = vrot.lane.b32.xlu0 %v3606, 96
      %v3702 = vpop.permute.xlu0 %3701
      %3735 = vst.msk [vmem:[#allocation3 + $0x8] sm:$0xff] %vm3093, %v3640
      %3736 = vst.msk [vmem:[#allocation3 + $0x20] sm:$0xff] %vm3093, %v3642
      %3737 = vst.msk [vmem:[#allocation3 + $0x38] sm:$0xff] %vm3093, %v3644
      %3738 = vst.msk [vmem:[#allocation3 + $0x50] sm:$0xff] %vm3093, %v3646
      %3739 = vst.msk [vmem:[#allocation3 + $0x68] sm:$0xff] %vm3093, %v3648
      %3740 = vst.msk [vmem:[#allocation3 + $0x80] sm:$0xff] %vm3093, %v3650
      %3741 = vst.msk [vmem:[#allocation3 + $0x98] sm:$0xff] %vm3093, %v3652
      %3742 = vst.msk [vmem:[#allocation3 + $0xb0] sm:$0xff] %vm3093, %v3654
      %3743 = vst.msk [vmem:[#allocation3 + $0xc8] sm:$0xff] %vm3093, %v3656
      %3744 = vst.msk [vmem:[#allocation3 + $0xe0] sm:$0xff] %vm3093, %v3658
      %3745 = vst.msk [vmem:[#allocation3 + $0xf8] sm:$0xff] %vm3093, %v3660
      %3746 = vst.msk [vmem:[#allocation3 + $0x110] sm:$0xff] %vm3093, %v3662
      %3747 = vst.msk [vmem:[#allocation3 + $0x128] sm:$0xff] %vm3093, %v3664
      %3748 = vst.msk [vmem:[#allocation3 + $0x140] sm:$0xff] %vm3093, %v3666
      %3749 = vst.msk [vmem:[#allocation3 + $0x158] sm:$0xff] %vm3093, %v3668
      %3750 = vst.msk [vmem:[#allocation3 + $0x170] sm:$0xff] %vm3093, %v3670
      %3751 = vst.msk [vmem:[#allocation3 + $0x188] sm:$0xff] %vm3093, %v3672
      %3752 = vst.msk [vmem:[#allocation3 + $0x1a0] sm:$0xff] %vm3093, %v3674
      %3753 = vst.msk [vmem:[#allocation3 + $0x1b8] sm:$0xff] %vm3093, %v3676
      %3754 = vst.msk [vmem:[#allocation3 + $0x1d0] sm:$0xff] %vm3093, %v3678
      %3755 = vst.msk [vmem:[#allocation3 + $0x1e8] sm:$0xff] %vm3093, %v3680
      %3756 = vst.msk [vmem:[#allocation3 + $0x200] sm:$0xff] %vm3093, %v3682
      %3757 = vst.msk [vmem:[#allocation3 + $0x218] sm:$0xff] %vm3093, %v3684
      %3758 = vst.msk [vmem:[#allocation3 + $0x230] sm:$0xff] %vm3093, %v3686
      %3759 = vst.msk [vmem:[#allocation3 + $0x248] sm:$0xff] %vm3093, %v3688
      %3760 = vst.msk [vmem:[#allocation3 + $0x260] sm:$0xff] %vm3093, %v3690
      %3761 = vst.msk [vmem:[#allocation3 + $0x278] sm:$0xff] %vm3093, %v3692
      %3762 = vst.msk [vmem:[#allocation3 + $0x290] sm:$0xff] %vm3093, %v3694
      %3763 = vst.msk [vmem:[#allocation3 + $0x2a8] sm:$0xff] %vm3093, %v3696
      %3764 = vst.msk [vmem:[#allocation3 + $0x2c0] sm:$0xff] %vm3093, %v3698
      %3765 = vst.msk [vmem:[#allocation3 + $0x2d8] sm:$0xff] %vm3093, %v3700
      %3766 = vst.msk [vmem:[#allocation3 + $0x2f0] sm:$0xff] %vm3093, %v3702
      %v3767 = vld [vmem:[%s3382 + $0x2] sm:$0xff]
      %v3768 = vld [vmem:[%s3382 + $0xa] sm:$0xff]
      %v3769 = vld [vmem:[%s3382 + $0x1a] sm:$0xff]
      %v3770 = vld [vmem:[%s3382 + $0x22] sm:$0xff]
      %v3771 = vld [vmem:[%s3382 + $0x32] sm:$0xff]
      %v3772 = vld [vmem:[%s3382 + $0x3a] sm:$0xff]
      %v3773 = vld [vmem:[%s3382 + $0x4a] sm:$0xff]
      %v3774 = vld [vmem:[%s3382 + $0x52] sm:$0xff]
      %v3775 = vld [vmem:[%s3382 + $0x62] sm:$0xff]
      %v3776 = vld [vmem:[%s3382 + $0x6a] sm:$0xff]
      %v3777 = vld [vmem:[%s3382 + $0x7a] sm:$0xff]
      %v3778 = vld [vmem:[%s3382 + $0x82] sm:$0xff]
      %v3779 = vld [vmem:[%s3382 + $0x92] sm:$0xff]
      %v3780 = vld [vmem:[%s3382 + $0x9a] sm:$0xff]
      %v3781 = vld [vmem:[%s3382 + $0xaa] sm:$0xff]
      %v3782 = vld [vmem:[%s3382 + $0xb2] sm:$0xff]
      %v3783 = vld [vmem:[%s3382 + $0xc2] sm:$0xff]
      %v3784 = vld [vmem:[%s3382 + $0xca] sm:$0xff]
      %v3785 = vld [vmem:[%s3382 + $0xda] sm:$0xff]
      %v3786 = vld [vmem:[%s3382 + $0xe2] sm:$0xff]
      %v3787 = vld [vmem:[%s3382 + $0xf2] sm:$0xff]
      %v3788 = vld [vmem:[%s3382 + $0xfa] sm:$0xff]
      %v3789 = vld [vmem:[%s3382 + $0x10a] sm:$0xff]
      %v3790 = vld [vmem:[%s3382 + $0x112] sm:$0xff]
      %v3791 = vld [vmem:[%s3382 + $0x122] sm:$0xff]
      %v3792 = vld [vmem:[%s3382 + $0x12a] sm:$0xff]
      %v3793 = vld [vmem:[%s3382 + $0x13a] sm:$0xff]
      %v3794 = vld [vmem:[%s3382 + $0x142] sm:$0xff]
      %v3795 = vld [vmem:[%s3382 + $0x152] sm:$0xff]
      %v3796 = vld [vmem:[%s3382 + $0x15a] sm:$0xff]
      %v3797 = vld [vmem:[%s3382 + $0x16a] sm:$0xff]
      %v3798 = vld [vmem:[%s3382 + $0x172] sm:$0xff]
      %3799 = vst.msk [vmem:[#allocation3 + $0x10] sm:$0xff] %vm346, %v3767
      %3800 = vst.msk [vmem:[#allocation3 + $0x28] sm:$0xff] %vm346, %v3768
      %3801 = vst.msk [vmem:[#allocation3 + $0x40] sm:$0xff] %vm346, %v3769
      %3802 = vst.msk [vmem:[#allocation3 + $0x58] sm:$0xff] %vm346, %v3770
      %3803 = vst.msk [vmem:[#allocation3 + $0x70] sm:$0xff] %vm346, %v3771
      %3804 = vst.msk [vmem:[#allocation3 + $0x88] sm:$0xff] %vm346, %v3772
      %3805 = vst.msk [vmem:[#allocation3 + $0xa0] sm:$0xff] %vm346, %v3773
      %3806 = vst.msk [vmem:[#allocation3 + $0xb8] sm:$0xff] %vm346, %v3774
      %3807 = vst.msk [vmem:[#allocation3 + $0xd0] sm:$0xff] %vm346, %v3775
      %3808 = vst.msk [vmem:[#allocation3 + $0xe8] sm:$0xff] %vm346, %v3776
      %3809 = vst.msk [vmem:[#allocation3 + $0x100] sm:$0xff] %vm346, %v3777
      %3810 = vst.msk [vmem:[#allocation3 + $0x118] sm:$0xff] %vm346, %v3778
      %3811 = vst.msk [vmem:[#allocation3 + $0x130] sm:$0xff] %vm346, %v3779
      %3812 = vst.msk [vmem:[#allocation3 + $0x148] sm:$0xff] %vm346, %v3780
      %3813 = vst.msk [vmem:[#allocation3 + $0x160] sm:$0xff] %vm346, %v3781
      %3814 = vst.msk [vmem:[#allocation3 + $0x178] sm:$0xff] %vm346, %v3782
      %3815 = vst.msk [vmem:[#allocation3 + $0x190] sm:$0xff] %vm346, %v3783
      %3816 = vst.msk [vmem:[#allocation3 + $0x1a8] sm:$0xff] %vm346, %v3784
      %3817 = vst.msk [vmem:[#allocation3 + $0x1c0] sm:$0xff] %vm346, %v3785
      %3818 = vst.msk [vmem:[#allocation3 + $0x1d8] sm:$0xff] %vm346, %v3786
      %3819 = vst.msk [vmem:[#allocation3 + $0x1f0] sm:$0xff] %vm346, %v3787
      %3820 = vst.msk [vmem:[#allocation3 + $0x208] sm:$0xff] %vm346, %v3788
      %3821 = vst.msk [vmem:[#allocation3 + $0x220] sm:$0xff] %vm346, %v3789
      %3822 = vst.msk [vmem:[#allocation3 + $0x238] sm:$0xff] %vm346, %v3790
      %3823 = vst.msk [vmem:[#allocation3 + $0x250] sm:$0xff] %vm346, %v3791
      %3824 = vst.msk [vmem:[#allocation3 + $0x268] sm:$0xff] %vm346, %v3792
      %3825 = vst.msk [vmem:[#allocation3 + $0x280] sm:$0xff] %vm346, %v3793
      %3826 = vst.msk [vmem:[#allocation3 + $0x298] sm:$0xff] %vm346, %v3794
      %3827 = vst.msk [vmem:[#allocation3 + $0x2b0] sm:$0xff] %vm346, %v3795
      %3828 = vst.msk [vmem:[#allocation3 + $0x2c8] sm:$0xff] %vm346, %v3796
      %3829 = vst.msk [vmem:[#allocation3 + $0x2e0] sm:$0xff] %vm346, %v3797
      %3830 = vst.msk [vmem:[#allocation3 + $0x2f8] sm:$0xff] %vm346, %v3798
      %v3831 = vld [vmem:[#allocation3] sm:$0xff]
      %v3832 = vld [vmem:[#allocation3 + $0x8] sm:$0xff]
      %v3833 = vld [vmem:[#allocation3 + $0x10] sm:$0xff]
      %v3834 = vld [vmem:[#allocation3 + $0x18] sm:$0xff]
      %v3835 = vld [vmem:[#allocation3 + $0x20] sm:$0xff]
      %v3836 = vld [vmem:[#allocation3 + $0x28] sm:$0xff]
      %v3837 = vld [vmem:[#allocation3 + $0x30] sm:$0xff]
      %v3838 = vld [vmem:[#allocation3 + $0x38] sm:$0xff]
      %v3839 = vld [vmem:[#allocation3 + $0x40] sm:$0xff]
      %v3840 = vld [vmem:[#allocation3 + $0x48] sm:$0xff]
      %v3841 = vld [vmem:[#allocation3 + $0x50] sm:$0xff]
      %v3842 = vld [vmem:[#allocation3 + $0x58] sm:$0xff]
      %v3843 = vld [vmem:[#allocation3 + $0x60] sm:$0xff]
      %v3844 = vld [vmem:[#allocation3 + $0x68] sm:$0xff]
      %v3845 = vld [vmem:[#allocation3 + $0x70] sm:$0xff]
      %v3846 = vld [vmem:[#allocation3 + $0x78] sm:$0xff]
      %v3847 = vld [vmem:[#allocation3 + $0x80] sm:$0xff]
      %v3848 = vld [vmem:[#allocation3 + $0x88] sm:$0xff]
      %v3849 = vld [vmem:[#allocation3 + $0x90] sm:$0xff]
      %v3850 = vld [vmem:[#allocation3 + $0x98] sm:$0xff]
      %v3851 = vld [vmem:[#allocation3 + $0xa0] sm:$0xff]
      %v3852 = vld [vmem:[#allocation3 + $0xa8] sm:$0xff]
      %v3853 = vld [vmem:[#allocation3 + $0xb0] sm:$0xff]
      %v3854 = vld [vmem:[#allocation3 + $0xb8] sm:$0xff]
      %v3855 = vld [vmem:[#allocation3 + $0xc0] sm:$0xff]
      %v3856 = vld [vmem:[#allocation3 + $0xc8] sm:$0xff]
      %v3857 = vld [vmem:[#allocation3 + $0xd0] sm:$0xff]
      %v3858 = vld [vmem:[#allocation3 + $0xd8] sm:$0xff]
      %v3859 = vld [vmem:[#allocation3 + $0xe0] sm:$0xff]
      %v3860 = vld [vmem:[#allocation3 + $0xe8] sm:$0xff]
      %v3861 = vld [vmem:[#allocation3 + $0xf0] sm:$0xff]
      %v3862 = vld [vmem:[#allocation3 + $0xf8] sm:$0xff]
      %v3863 = vld [vmem:[#allocation3 + $0x100] sm:$0xff]
      %v3864 = vld [vmem:[#allocation3 + $0x108] sm:$0xff]
      %v3865 = vld [vmem:[#allocation3 + $0x110] sm:$0xff]
      %v3866 = vld [vmem:[#allocation3 + $0x118] sm:$0xff]
      %v3867 = vld [vmem:[#allocation3 + $0x120] sm:$0xff]
      %v3868 = vld [vmem:[#allocation3 + $0x128] sm:$0xff]
      %v3869 = vld [vmem:[#allocation3 + $0x130] sm:$0xff]
      %v3870 = vld [vmem:[#allocation3 + $0x138] sm:$0xff]
      %v3871 = vld [vmem:[#allocation3 + $0x140] sm:$0xff]
      %v3872 = vld [vmem:[#allocation3 + $0x148] sm:$0xff]
      %v3873 = vld [vmem:[#allocation3 + $0x150] sm:$0xff]
      %v3874 = vld [vmem:[#allocation3 + $0x158] sm:$0xff]
      %v3875 = vld [vmem:[#allocation3 + $0x160] sm:$0xff]
      %v3876 = vld [vmem:[#allocation3 + $0x168] sm:$0xff]
      %v3877 = vld [vmem:[#allocation3 + $0x170] sm:$0xff]
      %v3878 = vld [vmem:[#allocation3 + $0x178] sm:$0xff]
      %v3879 = vld [vmem:[#allocation3 + $0x180] sm:$0xff]
      %v3880 = vld [vmem:[#allocation3 + $0x188] sm:$0xff]
      %v3881 = vld [vmem:[#allocation3 + $0x190] sm:$0xff]
      %v3882 = vld [vmem:[#allocation3 + $0x198] sm:$0xff]
      %v3883 = vld [vmem:[#allocation3 + $0x1a0] sm:$0xff]
      %v3884 = vld [vmem:[#allocation3 + $0x1a8] sm:$0xff]
      %v3885 = vld [vmem:[#allocation3 + $0x1b0] sm:$0xff]
      %v3886 = vld [vmem:[#allocation3 + $0x1b8] sm:$0xff]
      %v3887 = vld [vmem:[#allocation3 + $0x1c0] sm:$0xff]
      %v3888 = vld [vmem:[#allocation3 + $0x1c8] sm:$0xff]
      %v3889 = vld [vmem:[#allocation3 + $0x1d0] sm:$0xff]
      %v3890 = vld [vmem:[#allocation3 + $0x1d8] sm:$0xff]
      %v3891 = vld [vmem:[#allocation3 + $0x1e0] sm:$0xff]
      %v3892 = vld [vmem:[#allocation3 + $0x1e8] sm:$0xff]
      %v3893 = vld [vmem:[#allocation3 + $0x1f0] sm:$0xff]
      %v3894 = vld [vmem:[#allocation3 + $0x1f8] sm:$0xff]
      %v3895 = vld [vmem:[#allocation3 + $0x200] sm:$0xff]
      %v3896 = vld [vmem:[#allocation3 + $0x208] sm:$0xff]
      %v3897 = vld [vmem:[#allocation3 + $0x210] sm:$0xff]
      %v3898 = vld [vmem:[#allocation3 + $0x218] sm:$0xff]
      %v3899 = vld [vmem:[#allocation3 + $0x220] sm:$0xff]
      %v3900 = vld [vmem:[#allocation3 + $0x228] sm:$0xff]
      %v3901 = vld [vmem:[#allocation3 + $0x230] sm:$0xff]
      %v3902 = vld [vmem:[#allocation3 + $0x238] sm:$0xff]
      %v3903 = vld [vmem:[#allocation3 + $0x240] sm:$0xff]
      %v3904 = vld [vmem:[#allocation3 + $0x248] sm:$0xff]
      %v3905 = vld [vmem:[#allocation3 + $0x250] sm:$0xff]
      %v3906 = vld [vmem:[#allocation3 + $0x258] sm:$0xff]
      %v3907 = vld [vmem:[#allocation3 + $0x260] sm:$0xff]
      %v3908 = vld [vmem:[#allocation3 + $0x268] sm:$0xff]
      %v3909 = vld [vmem:[#allocation3 + $0x270] sm:$0xff]
      %v3910 = vld [vmem:[#allocation3 + $0x278] sm:$0xff]
      %v3911 = vld [vmem:[#allocation3 + $0x280] sm:$0xff]
      %v3912 = vld [vmem:[#allocation3 + $0x288] sm:$0xff]
      %v3913 = vld [vmem:[#allocation3 + $0x290] sm:$0xff]
      %v3914 = vld [vmem:[#allocation3 + $0x298] sm:$0xff]
      %v3915 = vld [vmem:[#allocation3 + $0x2a0] sm:$0xff]
      %v3916 = vld [vmem:[#allocation3 + $0x2a8] sm:$0xff]
      %v3917 = vld [vmem:[#allocation3 + $0x2b0] sm:$0xff]
      %v3918 = vld [vmem:[#allocation3 + $0x2b8] sm:$0xff]
      %v3919 = vld [vmem:[#allocation3 + $0x2c0] sm:$0xff]
      %v3920 = vld [vmem:[#allocation3 + $0x2c8] sm:$0xff]
      %v3921 = vld [vmem:[#allocation3 + $0x2d0] sm:$0xff]
      %v3922 = vld [vmem:[#allocation3 + $0x2d8] sm:$0xff]
      %v3923 = vld [vmem:[#allocation3 + $0x2e0] sm:$0xff]
      %v3924 = vld [vmem:[#allocation3 + $0x2e8] sm:$0xff]
      %v3925 = vld [vmem:[#allocation3 + $0x2f0] sm:$0xff]
      %v3926 = vld [vmem:[#allocation3 + $0x2f8] sm:$0xff]
      %v3928 = vlaneseq
      %v3929 = vshrl.u32 %v3928, 7
      %v3930 = vsub.s32 0, %v3929
      %v3931 = vrot.slane %v2482, %v3930
      %v3934 = vsel %vm346, %v3833, 0
      %v3937 = vsel %vm346, %v3836, 0
      %v3940 = vsel %vm346, %v3839, 0
      %v3943 = vsel %vm346, %v3842, 0
      %v3946 = vsel %vm346, %v3845, 0
      %v3949 = vsel %vm346, %v3848, 0
      %v3952 = vsel %vm346, %v3851, 0
      %v3955 = vsel %vm346, %v3854, 0
      %v3958 = vsel %vm346, %v3857, 0
      %v3961 = vsel %vm346, %v3860, 0
      %v3964 = vsel %vm346, %v3863, 0
      %v3967 = vsel %vm346, %v3866, 0
      %v3970 = vsel %vm346, %v3869, 0
      %v3973 = vsel %vm346, %v3872, 0
      %v3976 = vsel %vm346, %v3875, 0
      %v3979 = vsel %vm346, %v3878, 0
      %v3982 = vsel %vm346, %v3881, 0
      %v3985 = vsel %vm346, %v3884, 0
      %v3988 = vsel %vm346, %v3887, 0
      %v3991 = vsel %vm346, %v3890, 0
      %v3994 = vsel %vm346, %v3893, 0
      %v3997 = vsel %vm346, %v3896, 0
      %v4000 = vsel %vm346, %v3899, 0
      %v4003 = vsel %vm346, %v3902, 0
      %v4006 = vsel %vm346, %v3905, 0
      %v4009 = vsel %vm346, %v3908, 0
      %v4012 = vsel %vm346, %v3911, 0
      %v4015 = vsel %vm346, %v3914, 0
      %v4018 = vsel %vm346, %v3917, 0
      %v4021 = vsel %vm346, %v3920, 0
      %v4024 = vsel %vm346, %v3923, 0
      %v4027 = vsel %vm346, %v3926, 0
      %4029 = vmatprep.subr.mxu0 0.0
      %4030 = vmatpush1.msra.mxu0 %v2461
      %4031 = vmatprep.subr.mxu0 0.0
      %4032 = vmatpush1.msra.mxu0 %v2460
      %4033 = vmatprep.subr.mxu0 0.0
      %4034 = vmatpush1.msra.mxu0 %v2459
      %4035 = vmatprep.subr.mxu0 0.0
      %4036 = vmatpush1.msra.mxu0 %v2458
      %4037 = vmatprep.subr.mxu0 0.0
      %4038 = vmatpush1.msra.mxu0 %v2457
      %4039 = vmatprep.subr.mxu0 0.0
      %4040 = vmatpush1.msra.mxu0 %v2456
      %4041 = vmatprep.subr.mxu0 0.0
      %4042 = vmatpush1.msra.mxu0 %v2455
      %4043 = vmatprep.subr.mxu0 0.0
      %4044 = vmatpush1.msra.mxu0 %v2454
      %4045 = vmatprep.subr.mxu0 0.0
      %4046 = vmatpush1.msra.mxu0 %v2453
      %4047 = vmatprep.subr.mxu0 0.0
      %4048 = vmatpush1.msra.mxu0 %v2452
      %4049 = vmatprep.subr.mxu0 0.0
      %4050 = vmatpush1.msra.mxu0 %v2451
      %4051 = vmatprep.subr.mxu0 0.0
      %4052 = vmatpush1.msra.mxu0 %v2450
      %4053 = vmatprep.subr.mxu0 0.0
      %4054 = vmatpush1.msra.mxu0 %v2449
      %4055 = vmatprep.subr.mxu0 0.0
      %4056 = vmatpush1.msra.mxu0 %v2448
      %4057 = vmatprep.subr.mxu0 0.0
      %4058 = vmatpush1.msra.mxu0 %v2447
      %4059 = vmatprep.subr.mxu0 0.0
      %4060 = vmatpush1.msra.mxu0 %v2446
      %4061 = vmatprep.subr.mxu0 0.0
      %4062 = vmatpush2.msra.mxu0 %v2477
      %4063 = vmatprep.subr.mxu0 0.0
      %4064 = vmatpush2.msra.mxu0 %v2476
      %4065 = vmatprep.subr.mxu0 0.0
      %4066 = vmatpush2.msra.mxu0 %v2475
      %4067 = vmatprep.subr.mxu0 0.0
      %4068 = vmatpush2.msra.mxu0 %v2474
      %4069 = vmatprep.subr.mxu0 0.0
      %4070 = vmatpush2.msra.mxu0 %v2473
      %4071 = vmatprep.subr.mxu0 0.0
      %4072 = vmatpush2.msra.mxu0 %v2472
      %4073 = vmatprep.subr.mxu0 0.0
      %4074 = vmatpush2.msra.mxu0 %v2471
      %4075 = vmatprep.subr.mxu0 0.0
      %4076 = vmatpush2.msra.mxu0 %v2470
      %4077 = vmatprep.subr.mxu0 0.0
      %4078 = vmatpush2.msra.mxu0 %v2469
      %4079 = vmatprep.subr.mxu0 0.0
      %4080 = vmatpush2.msra.mxu0 %v2468
      %4081 = vmatprep.subr.mxu0 0.0
      %4082 = vmatpush2.msra.mxu0 %v2467
      %4083 = vmatprep.subr.mxu0 0.0
      %4084 = vmatpush2.msra.mxu0 %v2466
      %4085 = vmatprep.subr.mxu0 0.0
      %4086 = vmatpush2.msra.mxu0 %v2465
      %4087 = vmatprep.subr.mxu0 0.0
      %4088 = vmatpush2.msra.mxu0 %v2464
      %4089 = vmatprep.subr.mxu0 0.0
      %4090 = vmatpush2.msra.mxu0 %v2463
      %4091 = vmatprep.subr.mxu0 0.0
      %4092 = vmatpush2.msra.mxu0 %v2462
      %4093 = vmatprep.mubr.f32.mxu0 %v3832
      %4094 = vmatmul.mubr.f32.gmra.mxu0 %v3831
      %v4095 = vpop.f32.mrf.mxu0
      %v4096 = vadd.f32 %v3931, %v4095
      %v4097 = vpop.f32.mrf.mxu0
      %4098 = vmatprep.mubr.f32.mxu0 %v3835
      %4099 = vmatmul.mubr.f32.gmra.mxu0 %v3834
      %v4100 = vpop.f32.mrf.mxu0
      %v4101 = vadd.f32 %v3931, %v4100
      %v4102 = vpop.f32.mrf.mxu0
      %4103 = vmatprep.mubr.f32.mxu0 %v3838
      %4104 = vmatmul.mubr.f32.gmra.mxu0 %v3837
      %v4105 = vpop.f32.mrf.mxu0
      %v4106 = vadd.f32 %v3931, %v4105
      %v4107 = vpop.f32.mrf.mxu0
      %4108 = vmatprep.mubr.f32.mxu0 %v3841
      %4109 = vmatmul.mubr.f32.gmra.mxu0 %v3840
      %v4110 = vpop.f32.mrf.mxu0
      %v4111 = vadd.f32 %v3931, %v4110
      %v4112 = vpop.f32.mrf.mxu0
      %4113 = vmatprep.mubr.f32.mxu0 %v3844
      %4114 = vmatmul.mubr.f32.gmra.mxu0 %v3843
      %v4115 = vpop.f32.mrf.mxu0
      %v4116 = vadd.f32 %v3931, %v4115
      %v4117 = vpop.f32.mrf.mxu0
      %4118 = vmatprep.mubr.f32.mxu0 %v3847
      %4119 = vmatmul.mubr.f32.gmra.mxu0 %v3846
      %v4120 = vpop.f32.mrf.mxu0
      %v4121 = vadd.f32 %v3931, %v4120
      %v4122 = vpop.f32.mrf.mxu0
      %4123 = vmatprep.mubr.f32.mxu0 %v3850
      %4124 = vmatmul.mubr.f32.gmra.mxu0 %v3849
      %v4125 = vpop.f32.mrf.mxu0
      %v4126 = vadd.f32 %v3931, %v4125
      %v4127 = vpop.f32.mrf.mxu0
      %4128 = vmatprep.mubr.f32.mxu0 %v3853
      %4129 = vmatmul.mubr.f32.gmra.mxu0 %v3852
      %v4130 = vpop.f32.mrf.mxu0
      %v4131 = vadd.f32 %v3931, %v4130
      %v4132 = vpop.f32.mrf.mxu0
      %4133 = vmatprep.mubr.f32.mxu0 %v3856
      %4134 = vmatmul.mubr.f32.gmra.mxu0 %v3855
      %v4135 = vpop.f32.mrf.mxu0
      %v4136 = vadd.f32 %v3931, %v4135
      %v4137 = vpop.f32.mrf.mxu0
      %4138 = vmatprep.mubr.f32.mxu0 %v3859
      %4139 = vmatmul.mubr.f32.gmra.mxu0 %v3858
      %v4140 = vpop.f32.mrf.mxu0
      %v4141 = vadd.f32 %v3931, %v4140
      %v4142 = vpop.f32.mrf.mxu0
      %4143 = vmatprep.mubr.f32.mxu0 %v3862
      %4144 = vmatmul.mubr.f32.gmra.mxu0 %v3861
      %v4145 = vpop.f32.mrf.mxu0
      %v4146 = vadd.f32 %v3931, %v4145
      %v4147 = vpop.f32.mrf.mxu0
      %4148 = vmatprep.mubr.f32.mxu0 %v3865
      %4149 = vmatmul.mubr.f32.gmra.mxu0 %v3864
      %v4150 = vpop.f32.mrf.mxu0
      %v4151 = vadd.f32 %v3931, %v4150
      %v4152 = vpop.f32.mrf.mxu0
      %4153 = vmatprep.mubr.f32.mxu0 %v3868
      %4154 = vmatmul.mubr.f32.gmra.mxu0 %v3867
      %v4155 = vpop.f32.mrf.mxu0
      %v4156 = vadd.f32 %v3931, %v4155
      %v4157 = vpop.f32.mrf.mxu0
      %4158 = vmatprep.mubr.f32.mxu0 %v3871
      %4159 = vmatmul.mubr.f32.gmra.mxu0 %v3870
      %v4160 = vpop.f32.mrf.mxu0
      %v4161 = vadd.f32 %v3931, %v4160
      %v4162 = vpop.f32.mrf.mxu0
      %4163 = vmatprep.mubr.f32.mxu0 %v3874
      %4164 = vmatmul.mubr.f32.gmra.mxu0 %v3873
      %v4165 = vpop.f32.mrf.mxu0
      %v4166 = vadd.f32 %v3931, %v4165
      %v4167 = vpop.f32.mrf.mxu0
      %4168 = vmatprep.mubr.f32.mxu0 %v3877
      %4169 = vmatmul.mubr.f32.gmra.mxu0 %v3876
      %v4170 = vpop.f32.mrf.mxu0
      %v4171 = vadd.f32 %v3931, %v4170
      %v4172 = vpop.f32.mrf.mxu0
      %4173 = vmatprep.mubr.f32.mxu0 %v3880
      %4174 = vmatmul.mubr.f32.gmra.mxu0 %v3879
      %v4175 = vpop.f32.mrf.mxu0
      %v4176 = vadd.f32 %v3931, %v4175
      %v4177 = vpop.f32.mrf.mxu0
      %4178 = vmatprep.mubr.f32.mxu0 %v3883
      %4179 = vmatmul.mubr.f32.gmra.mxu0 %v3882
      %v4180 = vpop.f32.mrf.mxu0
      %v4181 = vadd.f32 %v3931, %v4180
      %v4182 = vpop.f32.mrf.mxu0
      %4183 = vmatprep.mubr.f32.mxu0 %v3886
      %4184 = vmatmul.mubr.f32.gmra.mxu0 %v3885
      %v4185 = vpop.f32.mrf.mxu0
      %v4186 = vadd.f32 %v3931, %v4185
      %v4187 = vpop.f32.mrf.mxu0
      %4188 = vmatprep.mubr.f32.mxu0 %v3889
      %4189 = vmatmul.mubr.f32.gmra.mxu0 %v3888
      %v4190 = vpop.f32.mrf.mxu0
      %v4191 = vadd.f32 %v3931, %v4190
      %v4192 = vpop.f32.mrf.mxu0
      %4193 = vmatprep.mubr.f32.mxu0 %v3892
      %4194 = vmatmul.mubr.f32.gmra.mxu0 %v3891
      %v4195 = vpop.f32.mrf.mxu0
      %v4196 = vadd.f32 %v3931, %v4195
      %v4197 = vpop.f32.mrf.mxu0
      %4198 = vmatprep.mubr.f32.mxu0 %v3895
      %4199 = vmatmul.mubr.f32.gmra.mxu0 %v3894
      %v4200 = vpop.f32.mrf.mxu0
      %v4201 = vadd.f32 %v3931, %v4200
      %v4202 = vpop.f32.mrf.mxu0
      %4203 = vmatprep.mubr.f32.mxu0 %v3898
      %4204 = vmatmul.mubr.f32.gmra.mxu0 %v3897
      %v4205 = vpop.f32.mrf.mxu0
      %v4206 = vadd.f32 %v3931, %v4205
      %v4207 = vpop.f32.mrf.mxu0
      %4208 = vmatprep.mubr.f32.mxu0 %v3901
      %4209 = vmatmul.mubr.f32.gmra.mxu0 %v3900
      %v4210 = vpop.f32.mrf.mxu0
      %v4211 = vadd.f32 %v3931, %v4210
      %v4212 = vpop.f32.mrf.mxu0
      %4213 = vmatprep.mubr.f32.mxu0 %v3904
      %4214 = vmatmul.mubr.f32.gmra.mxu0 %v3903
      %v4215 = vpop.f32.mrf.mxu0
      %v4216 = vadd.f32 %v3931, %v4215
      %v4217 = vpop.f32.mrf.mxu0
      %4218 = vmatprep.mubr.f32.mxu0 %v3907
      %4219 = vmatmul.mubr.f32.gmra.mxu0 %v3906
      %v4220 = vpop.f32.mrf.mxu0
      %v4221 = vadd.f32 %v3931, %v4220
      %v4222 = vpop.f32.mrf.mxu0
      %4223 = vmatprep.mubr.f32.mxu0 %v3910
      %4224 = vmatmul.mubr.f32.gmra.mxu0 %v3909
      %v4225 = vpop.f32.mrf.mxu0
      %v4226 = vadd.f32 %v3931, %v4225
      %v4227 = vpop.f32.mrf.mxu0
      %4228 = vmatprep.mubr.f32.mxu0 %v3913
      %4229 = vmatmul.mubr.f32.gmra.mxu0 %v3912
      %v4230 = vpop.f32.mrf.mxu0
      %v4231 = vadd.f32 %v3931, %v4230
      %v4232 = vpop.f32.mrf.mxu0
      %4233 = vmatprep.mubr.f32.mxu0 %v3916
      %4234 = vmatmul.mubr.f32.gmra.mxu0 %v3915
      %v4235 = vpop.f32.mrf.mxu0
      %v4236 = vadd.f32 %v3931, %v4235
      %v4237 = vpop.f32.mrf.mxu0
      %4238 = vmatprep.mubr.f32.mxu0 %v3919
      %4239 = vmatmul.mubr.f32.gmra.mxu0 %v3918
      %v4240 = vpop.f32.mrf.mxu0
      %v4241 = vadd.f32 %v3931, %v4240
      %v4242 = vpop.f32.mrf.mxu0
      %4243 = vmatprep.mubr.f32.mxu0 %v3922
      %4244 = vmatmul.mubr.f32.gmra.mxu0 %v3921
      %v4245 = vpop.f32.mrf.mxu0
      %v4246 = vadd.f32 %v3931, %v4245
      %v4247 = vpop.f32.mrf.mxu0
      %4248 = vmatprep.mubr.f32.mxu0 %v3925
      %4249 = vmatmul.mubr.f32.gmra.mxu0 %v3924
      %v4250 = vpop.f32.mrf.mxu0
      %v4251 = vadd.f32 %v3931, %v4250
      %v4252 = vpop.f32.mrf.mxu0
      %4253 = vdwg.mxu0
      %4254 = vmatprep.subr.mxu0 0.0
      %4255 = vmatpush1.msra.mxu0 0.0
      %4256 = vmatprep.subr.mxu0 0.0
      %4257 = vmatpush1.msra.mxu0 0.0
      %4258 = vmatprep.subr.mxu0 0.0
      %4259 = vmatpush1.msra.mxu0 0.0
      %4260 = vmatprep.subr.mxu0 0.0
      %4261 = vmatpush1.msra.mxu0 0.0
      %4262 = vmatprep.subr.mxu0 0.0
      %4263 = vmatpush1.msra.mxu0 0.0
      %4264 = vmatprep.subr.mxu0 0.0
      %4265 = vmatpush1.msra.mxu0 0.0
      %4266 = vmatprep.subr.mxu0 0.0
      %4267 = vmatpush1.msra.mxu0 0.0
      %4268 = vmatprep.subr.mxu0 0.0
      %4269 = vmatpush1.msra.mxu0 0.0
      %4270 = vmatprep.subr.mxu0 0.0
      %4271 = vmatpush1.msra.mxu0 0.0
      %4272 = vmatprep.subr.mxu0 0.0
      %4273 = vmatpush1.msra.mxu0 0.0
      %4274 = vmatprep.subr.mxu0 0.0
      %4275 = vmatpush1.msra.mxu0 0.0
      %4276 = vmatprep.subr.mxu0 0.0
      %4277 = vmatpush1.msra.mxu0 0.0
      %4278 = vmatprep.subr.mxu0 0.0
      %4279 = vmatpush1.msra.mxu0 %v2481
      %4280 = vmatprep.subr.mxu0 0.0
      %4281 = vmatpush1.msra.mxu0 %v2480
      %4282 = vmatprep.subr.mxu0 0.0
      %4283 = vmatpush1.msra.mxu0 %v2479
      %4284 = vmatprep.subr.mxu0 0.0
      %4285 = vmatpush1.msra.mxu0 %v2478
      %4286 = vmatprep.subr.mxu0 0.0
      %4287 = vmatpush2.msra.mxu0 0.0
      %4288 = vmatprep.subr.mxu0 0.0
      %4289 = vmatpush2.msra.mxu0 0.0
      %4290 = vmatprep.subr.mxu0 0.0
      %4291 = vmatpush2.msra.mxu0 0.0
      %4292 = vmatprep.subr.mxu0 0.0
      %4293 = vmatpush2.msra.mxu0 0.0
      %4294 = vmatprep.subr.mxu0 0.0
      %4295 = vmatpush2.msra.mxu0 0.0
      %4296 = vmatprep.subr.mxu0 0.0
      %4297 = vmatpush2.msra.mxu0 0.0
      %4298 = vmatprep.subr.mxu0 0.0
      %4299 = vmatpush2.msra.mxu0 0.0
      %4300 = vmatprep.subr.mxu0 0.0
      %4301 = vmatpush2.msra.mxu0 0.0
      %4302 = vmatprep.subr.mxu0 0.0
      %4303 = vmatpush2.msra.mxu0 0.0
      %4304 = vmatprep.subr.mxu0 0.0
      %4305 = vmatpush2.msra.mxu0 0.0
      %4306 = vmatprep.subr.mxu0 0.0
      %4307 = vmatpush2.msra.mxu0 0.0
      %4308 = vmatprep.subr.mxu0 0.0
      %4309 = vmatpush2.msra.mxu0 0.0
      %4310 = vmatprep.subr.mxu0 0.0
      %4311 = vmatpush2.msra.mxu0 0.0
      %4312 = vmatprep.subr.mxu0 0.0
      %4313 = vmatpush2.msra.mxu0 0.0
      %4314 = vmatprep.subr.mxu0 0.0
      %4315 = vmatpush2.msra.mxu0 0.0
      %4316 = vmatprep.subr.mxu0 0.0
      %4317 = vmatpush2.msra.mxu0 0.0
      %4318 = vmatprep.mubr.f32.mxu0 0.0
      %4319 = vmatmul.mubr.f32.gmra.mxu0 %v3934
      %v4320 = vpop.f32.mrf.mxu0
      %v4321 = vadd.f32 %v4096, %v4320
      %v4322 = vpop.f32.mrf.mxu0
      %4323 = vmatprep.mubr.f32.mxu0 0.0
      %4324 = vmatmul.mubr.f32.gmra.mxu0 %v3937
      %v4325 = vpop.f32.mrf.mxu0
      %v4326 = vadd.f32 %v4101, %v4325
      %v4327 = vpop.f32.mrf.mxu0
      %4328 = vmatprep.mubr.f32.mxu0 0.0
      %4329 = vmatmul.mubr.f32.gmra.mxu0 %v3940
      %v4330 = vpop.f32.mrf.mxu0
      %v4331 = vadd.f32 %v4106, %v4330
      %v4332 = vpop.f32.mrf.mxu0
      %4333 = vmatprep.mubr.f32.mxu0 0.0
      %4334 = vmatmul.mubr.f32.gmra.mxu0 %v3943
      %v4335 = vpop.f32.mrf.mxu0
      %v4336 = vadd.f32 %v4111, %v4335
      %v4337 = vpop.f32.mrf.mxu0
      %4338 = vmatprep.mubr.f32.mxu0 0.0
      %4339 = vmatmul.mubr.f32.gmra.mxu0 %v3946
      %v4340 = vpop.f32.mrf.mxu0
      %v4341 = vadd.f32 %v4116, %v4340
      %v4342 = vpop.f32.mrf.mxu0
      %4343 = vmatprep.mubr.f32.mxu0 0.0
      %4344 = vmatmul.mubr.f32.gmra.mxu0 %v3949
      %v4345 = vpop.f32.mrf.mxu0
      %v4346 = vadd.f32 %v4121, %v4345
      %v4347 = vpop.f32.mrf.mxu0
      %4348 = vmatprep.mubr.f32.mxu0 0.0
      %4349 = vmatmul.mubr.f32.gmra.mxu0 %v3952
      %v4350 = vpop.f32.mrf.mxu0
      %v4351 = vadd.f32 %v4126, %v4350
      %v4352 = vpop.f32.mrf.mxu0
      %4353 = vmatprep.mubr.f32.mxu0 0.0
      %4354 = vmatmul.mubr.f32.gmra.mxu0 %v3955
      %v4355 = vpop.f32.mrf.mxu0
      %v4356 = vadd.f32 %v4131, %v4355
      %v4357 = vpop.f32.mrf.mxu0
      %4358 = vmatprep.mubr.f32.mxu0 0.0
      %4359 = vmatmul.mubr.f32.gmra.mxu0 %v3958
      %v4360 = vpop.f32.mrf.mxu0
      %v4361 = vadd.f32 %v4136, %v4360
      %v4362 = vpop.f32.mrf.mxu0
      %4363 = vmatprep.mubr.f32.mxu0 0.0
      %4364 = vmatmul.mubr.f32.gmra.mxu0 %v3961
      %v4365 = vpop.f32.mrf.mxu0
      %v4366 = vadd.f32 %v4141, %v4365
      %v4367 = vpop.f32.mrf.mxu0
      %4368 = vmatprep.mubr.f32.mxu0 0.0
      %4369 = vmatmul.mubr.f32.gmra.mxu0 %v3964
      %v4370 = vpop.f32.mrf.mxu0
      %v4371 = vadd.f32 %v4146, %v4370
      %v4372 = vpop.f32.mrf.mxu0
      %4373 = vmatprep.mubr.f32.mxu0 0.0
      %4374 = vmatmul.mubr.f32.gmra.mxu0 %v3967
      %v4375 = vpop.f32.mrf.mxu0
      %v4376 = vadd.f32 %v4151, %v4375
      %v4377 = vpop.f32.mrf.mxu0
      %4378 = vmatprep.mubr.f32.mxu0 0.0
      %4379 = vmatmul.mubr.f32.gmra.mxu0 %v3970
      %v4380 = vpop.f32.mrf.mxu0
      %v4381 = vadd.f32 %v4156, %v4380
      %v4382 = vpop.f32.mrf.mxu0
      %4383 = vmatprep.mubr.f32.mxu0 0.0
      %4384 = vmatmul.mubr.f32.gmra.mxu0 %v3973
      %v4385 = vpop.f32.mrf.mxu0
      %v4386 = vadd.f32 %v4161, %v4385
      %v4387 = vpop.f32.mrf.mxu0
      %4388 = vmatprep.mubr.f32.mxu0 0.0
      %4389 = vmatmul.mubr.f32.gmra.mxu0 %v3976
      %v4390 = vpop.f32.mrf.mxu0
      %v4391 = vadd.f32 %v4166, %v4390
      %v4392 = vpop.f32.mrf.mxu0
      %4393 = vmatprep.mubr.f32.mxu0 0.0
      %4394 = vmatmul.mubr.f32.gmra.mxu0 %v3979
      %v4395 = vpop.f32.mrf.mxu0
      %v4396 = vadd.f32 %v4171, %v4395
      %v4397 = vpop.f32.mrf.mxu0
      %4398 = vmatprep.mubr.f32.mxu0 0.0
      %4399 = vmatmul.mubr.f32.gmra.mxu0 %v3982
      %v4400 = vpop.f32.mrf.mxu0
      %v4401 = vadd.f32 %v4176, %v4400
      %v4402 = vpop.f32.mrf.mxu0
      %4403 = vmatprep.mubr.f32.mxu0 0.0
      %4404 = vmatmul.mubr.f32.gmra.mxu0 %v3985
      %v4405 = vpop.f32.mrf.mxu0
      %v4406 = vadd.f32 %v4181, %v4405
      %v4407 = vpop.f32.mrf.mxu0
      %4408 = vmatprep.mubr.f32.mxu0 0.0
      %4409 = vmatmul.mubr.f32.gmra.mxu0 %v3988
      %v4410 = vpop.f32.mrf.mxu0
      %v4411 = vadd.f32 %v4186, %v4410
      %v4412 = vpop.f32.mrf.mxu0
      %4413 = vmatprep.mubr.f32.mxu0 0.0
      %4414 = vmatmul.mubr.f32.gmra.mxu0 %v3991
      %v4415 = vpop.f32.mrf.mxu0
      %v4416 = vadd.f32 %v4191, %v4415
      %v4417 = vpop.f32.mrf.mxu0
      %4418 = vmatprep.mubr.f32.mxu0 0.0
      %4419 = vmatmul.mubr.f32.gmra.mxu0 %v3994
      %v4420 = vpop.f32.mrf.mxu0
      %v4421 = vadd.f32 %v4196, %v4420
      %v4422 = vpop.f32.mrf.mxu0
      %4423 = vmatprep.mubr.f32.mxu0 0.0
      %4424 = vmatmul.mubr.f32.gmra.mxu0 %v3997
      %v4425 = vpop.f32.mrf.mxu0
      %v4426 = vadd.f32 %v4201, %v4425
      %v4427 = vpop.f32.mrf.mxu0
      %4428 = vmatprep.mubr.f32.mxu0 0.0
      %4429 = vmatmul.mubr.f32.gmra.mxu0 %v4000
      %v4430 = vpop.f32.mrf.mxu0
      %v4431 = vadd.f32 %v4206, %v4430
      %v4432 = vpop.f32.mrf.mxu0
      %4433 = vmatprep.mubr.f32.mxu0 0.0
      %4434 = vmatmul.mubr.f32.gmra.mxu0 %v4003
      %v4435 = vpop.f32.mrf.mxu0
      %v4436 = vadd.f32 %v4211, %v4435
      %v4437 = vpop.f32.mrf.mxu0
      %4438 = vmatprep.mubr.f32.mxu0 0.0
      %4439 = vmatmul.mubr.f32.gmra.mxu0 %v4006
      %v4440 = vpop.f32.mrf.mxu0
      %v4441 = vadd.f32 %v4216, %v4440
      %v4442 = vpop.f32.mrf.mxu0
      %4443 = vmatprep.mubr.f32.mxu0 0.0
      %4444 = vmatmul.mubr.f32.gmra.mxu0 %v4009
      %v4445 = vpop.f32.mrf.mxu0
      %v4446 = vadd.f32 %v4221, %v4445
      %v4447 = vpop.f32.mrf.mxu0
      %4448 = vmatprep.mubr.f32.mxu0 0.0
      %4449 = vmatmul.mubr.f32.gmra.mxu0 %v4012
      %v4450 = vpop.f32.mrf.mxu0
      %v4451 = vadd.f32 %v4226, %v4450
      %v4452 = vpop.f32.mrf.mxu0
      %4453 = vmatprep.mubr.f32.mxu0 0.0
      %4454 = vmatmul.mubr.f32.gmra.mxu0 %v4015
      %v4455 = vpop.f32.mrf.mxu0
      %v4456 = vadd.f32 %v4231, %v4455
      %v4457 = vpop.f32.mrf.mxu0
      %4458 = vmatprep.mubr.f32.mxu0 0.0
      %4459 = vmatmul.mubr.f32.gmra.mxu0 %v4018
      %v4460 = vpop.f32.mrf.mxu0
      %v4461 = vadd.f32 %v4236, %v4460
      %v4462 = vpop.f32.mrf.mxu0
      %4463 = vmatprep.mubr.f32.mxu0 0.0
      %4464 = vmatmul.mubr.f32.gmra.mxu0 %v4021
      %v4465 = vpop.f32.mrf.mxu0
      %v4466 = vadd.f32 %v4241, %v4465
      %v4467 = vpop.f32.mrf.mxu0
      %4468 = vmatprep.mubr.f32.mxu0 0.0
      %4469 = vmatmul.mubr.f32.gmra.mxu0 %v4024
      %v4470 = vpop.f32.mrf.mxu0
      %v4471 = vadd.f32 %v4246, %v4470
      %v4472 = vpop.f32.mrf.mxu0
      %4473 = vmatprep.mubr.f32.mxu0 0.0
      %4474 = vmatmul.mubr.f32.gmra.mxu0 %v4027
      %v4475 = vpop.f32.mrf.mxu0
      %v4476 = vadd.f32 %v4251, %v4475
      %v4477 = vpop.f32.mrf.mxu0
      %4478 = vdwg.mxu0
      %v4479 = vmax.f32 %v4321, 0.0
      %v4480 = vmax.f32 %v4326, 0.0
      %v4481 = vmax.f32 %v4331, 0.0
      %v4482 = vmax.f32 %v4336, 0.0
      %v4483 = vmax.f32 %v4341, 0.0
      %v4484 = vmax.f32 %v4346, 0.0
      %v4485 = vmax.f32 %v4351, 0.0
      %v4486 = vmax.f32 %v4356, 0.0
      %v4487 = vmax.f32 %v4361, 0.0
      %v4488 = vmax.f32 %v4366, 0.0
      %v4489 = vmax.f32 %v4371, 0.0
      %v4490 = vmax.f32 %v4376, 0.0
      %v4491 = vmax.f32 %v4381, 0.0
      %v4492 = vmax.f32 %v4386, 0.0
      %v4493 = vmax.f32 %v4391, 0.0
      %v4494 = vmax.f32 %v4396, 0.0
      %v4495 = vmax.f32 %v4401, 0.0
      %v4496 = vmax.f32 %v4406, 0.0
      %v4497 = vmax.f32 %v4411, 0.0
      %v4498 = vmax.f32 %v4416, 0.0
      %v4499 = vmax.f32 %v4421, 0.0
      %v4500 = vmax.f32 %v4426, 0.0
      %v4501 = vmax.f32 %v4431, 0.0
      %v4502 = vmax.f32 %v4436, 0.0
      %v4503 = vmax.f32 %v4441, 0.0
      %v4504 = vmax.f32 %v4446, 0.0
      %v4505 = vmax.f32 %v4451, 0.0
      %v4506 = vmax.f32 %v4456, 0.0
      %v4507 = vmax.f32 %v4461, 0.0
      %v4508 = vmax.f32 %v4466, 0.0
      %v4509 = vmax.f32 %v4471, 0.0
      %v4510 = vmax.f32 %v4476, 0.0
      %v4511 = vmax.f32 %v4479, %v4481
      %v4512 = vmax.f32 %v4480, %v4482
      %v4513 = vmax.f32 %v4483, %v4485
      %v4514 = vmax.f32 %v4484, %v4486
      %v4515 = vmax.f32 %v4487, %v4489
      %v4516 = vmax.f32 %v4488, %v4490
      %v4517 = vmax.f32 %v4491, %v4493
      %v4518 = vmax.f32 %v4492, %v4494
      %v4519 = vmax.f32 %v4495, %v4497
      %v4520 = vmax.f32 %v4496, %v4498
      %v4521 = vmax.f32 %v4499, %v4501
      %v4522 = vmax.f32 %v4500, %v4502
      %v4523 = vmax.f32 %v4503, %v4505
      %v4524 = vmax.f32 %v4504, %v4506
      %v4525 = vmax.f32 %v4507, %v4509
      %v4526 = vmax.f32 %v4508, %v4510
      %v4543 = vcombine.high %v4511, %v4511
      %v4545 = vunpack.c.l.s4 1983009808
      %v4546 = vunpack.c.0.s8 %v4545
      %v4547 = vlaneseq
      %v4548 = vshrl.u32 %v4547, 7
      %v4549 = vsub.s32 %v4546, %v4548
      %v4550 = vrot.slane %v4511, %v4549
      %v4552 = vunpack.c.l.s4 1983009808
      %v4553 = vunpack.c.0.s8 %v4552
      %v4554 = vlaneseq
      %v4555 = vshrl.u32 %v4554, 7
      %v4556 = vsub.s32 %v4553, %v4555
      %v4557 = vrot.slane %v4543, %v4556
      %v4558 = vcombine.high %v4550, %v4550
      %v4559 = vcombine.high %v4557, %v4557
      %v4560 = vcombine.high %v4512, %v4512
      %v4562 = vunpack.c.l.s4 1983009808
      %v4563 = vunpack.c.0.s8 %v4562
      %v4564 = vlaneseq
      %v4565 = vshrl.u32 %v4564, 7
      %v4566 = vsub.s32 %v4563, %v4565
      %v4567 = vrot.slane %v4512, %v4566
      %v4569 = vunpack.c.l.s4 1983009808
      %v4570 = vunpack.c.0.s8 %v4569
      %v4571 = vlaneseq
      %v4572 = vshrl.u32 %v4571, 7
      %v4573 = vsub.s32 %v4570, %v4572
      %v4574 = vrot.slane %v4560, %v4573
      %v4575 = vcombine.high %v4567, %v4567
      %v4576 = vcombine.high %v4574, %v4574
      %v4577 = vcombine.high %v4513, %v4513
      %v4579 = vunpack.c.l.s4 1983009808
      %v4580 = vunpack.c.0.s8 %v4579
      %v4581 = vlaneseq
      %v4582 = vshrl.u32 %v4581, 7
      %v4583 = vsub.s32 %v4580, %v4582
      %v4584 = vrot.slane %v4513, %v4583
      %v4586 = vunpack.c.l.s4 1983009808
      %v4587 = vunpack.c.0.s8 %v4586
      %v4588 = vlaneseq
      %v4589 = vshrl.u32 %v4588, 7
      %v4590 = vsub.s32 %v4587, %v4589
      %v4591 = vrot.slane %v4577, %v4590
      %v4592 = vcombine.high %v4584, %v4584
      %v4593 = vcombine.high %v4591, %v4591
      %v4594 = vcombine.high %v4514, %v4514
      %v4596 = vunpack.c.l.s4 1983009808
      %v4597 = vunpack.c.0.s8 %v4596
      %v4598 = vlaneseq
      %v4599 = vshrl.u32 %v4598, 7
      %v4600 = vsub.s32 %v4597, %v4599
      %v4601 = vrot.slane %v4514, %v4600
      %v4603 = vunpack.c.l.s4 1983009808
      %v4604 = vunpack.c.0.s8 %v4603
      %v4605 = vlaneseq
      %v4606 = vshrl.u32 %v4605, 7
      %v4607 = vsub.s32 %v4604, %v4606
      %v4608 = vrot.slane %v4594, %v4607
      %v4609 = vcombine.high %v4601, %v4601
      %v4610 = vcombine.high %v4608, %v4608
      %v4611 = vcombine.high %v4515, %v4515
      %v4613 = vunpack.c.l.s4 1983009808
      %v4614 = vunpack.c.0.s8 %v4613
      %v4615 = vlaneseq
      %v4616 = vshrl.u32 %v4615, 7
      %v4617 = vsub.s32 %v4614, %v4616
      %v4618 = vrot.slane %v4515, %v4617
      %v4620 = vunpack.c.l.s4 1983009808
      %v4621 = vunpack.c.0.s8 %v4620
      %v4622 = vlaneseq
      %v4623 = vshrl.u32 %v4622, 7
      %v4624 = vsub.s32 %v4621, %v4623
      %v4625 = vrot.slane %v4611, %v4624
      %v4626 = vcombine.high %v4618, %v4618
      %v4627 = vcombine.high %v4625, %v4625
      %v4628 = vcombine.high %v4516, %v4516
      %v4630 = vunpack.c.l.s4 1983009808
      %v4631 = vunpack.c.0.s8 %v4630
      %v4632 = vlaneseq
      %v4633 = vshrl.u32 %v4632, 7
      %v4634 = vsub.s32 %v4631, %v4633
      %v4635 = vrot.slane %v4516, %v4634
      %v4637 = vunpack.c.l.s4 1983009808
      %v4638 = vunpack.c.0.s8 %v4637
      %v4639 = vlaneseq
      %v4640 = vshrl.u32 %v4639, 7
      %v4641 = vsub.s32 %v4638, %v4640
      %v4642 = vrot.slane %v4628, %v4641
      %v4643 = vcombine.high %v4635, %v4635
      %v4644 = vcombine.high %v4642, %v4642
      %v4645 = vcombine.high %v4517, %v4517
      %v4647 = vunpack.c.l.s4 1983009808
      %v4648 = vunpack.c.0.s8 %v4647
      %v4649 = vlaneseq
      %v4650 = vshrl.u32 %v4649, 7
      %v4651 = vsub.s32 %v4648, %v4650
      %v4652 = vrot.slane %v4517, %v4651
      %v4654 = vunpack.c.l.s4 1983009808
      %v4655 = vunpack.c.0.s8 %v4654
      %v4656 = vlaneseq
      %v4657 = vshrl.u32 %v4656, 7
      %v4658 = vsub.s32 %v4655, %v4657
      %v4659 = vrot.slane %v4645, %v4658
      %v4660 = vcombine.high %v4652, %v4652
      %v4661 = vcombine.high %v4659, %v4659
      %v4662 = vcombine.high %v4518, %v4518
      %v4664 = vunpack.c.l.s4 1983009808
      %v4665 = vunpack.c.0.s8 %v4664
      %v4666 = vlaneseq
      %v4667 = vshrl.u32 %v4666, 7
      %v4668 = vsub.s32 %v4665, %v4667
      %v4669 = vrot.slane %v4518, %v4668
      %v4671 = vunpack.c.l.s4 1983009808
      %v4672 = vunpack.c.0.s8 %v4671
      %v4673 = vlaneseq
      %v4674 = vshrl.u32 %v4673, 7
      %v4675 = vsub.s32 %v4672, %v4674
      %v4676 = vrot.slane %v4662, %v4675
      %v4677 = vcombine.high %v4669, %v4669
      %v4678 = vcombine.high %v4676, %v4676
      %v4679 = vcombine.high %v4519, %v4519
      %v4681 = vunpack.c.l.s4 1983009808
      %v4682 = vunpack.c.0.s8 %v4681
      %v4683 = vlaneseq
      %v4684 = vshrl.u32 %v4683, 7
      %v4685 = vsub.s32 %v4682, %v4684
      %v4686 = vrot.slane %v4519, %v4685
      %v4688 = vunpack.c.l.s4 1983009808
      %v4689 = vunpack.c.0.s8 %v4688
      %v4690 = vlaneseq
      %v4691 = vshrl.u32 %v4690, 7
      %v4692 = vsub.s32 %v4689, %v4691
      %v4693 = vrot.slane %v4679, %v4692
      %v4694 = vcombine.high %v4686, %v4686
      %v4695 = vcombine.high %v4693, %v4693
      %v4696 = vcombine.high %v4520, %v4520
      %v4698 = vunpack.c.l.s4 1983009808
      %v4699 = vunpack.c.0.s8 %v4698
      %v4700 = vlaneseq
      %v4701 = vshrl.u32 %v4700, 7
      %v4702 = vsub.s32 %v4699, %v4701
      %v4703 = vrot.slane %v4520, %v4702
      %v4705 = vunpack.c.l.s4 1983009808
      %v4706 = vunpack.c.0.s8 %v4705
      %v4707 = vlaneseq
      %v4708 = vshrl.u32 %v4707, 7
      %v4709 = vsub.s32 %v4706, %v4708
      %v4710 = vrot.slane %v4696, %v4709
      %v4711 = vcombine.high %v4703, %v4703
      %v4712 = vcombine.high %v4710, %v4710
      %v4713 = vcombine.high %v4521, %v4521
      %v4715 = vunpack.c.l.s4 1983009808
      %v4716 = vunpack.c.0.s8 %v4715
      %v4717 = vlaneseq
      %v4718 = vshrl.u32 %v4717, 7
      %v4719 = vsub.s32 %v4716, %v4718
      %v4720 = vrot.slane %v4521, %v4719
      %v4722 = vunpack.c.l.s4 1983009808
      %v4723 = vunpack.c.0.s8 %v4722
      %v4724 = vlaneseq
      %v4725 = vshrl.u32 %v4724, 7
      %v4726 = vsub.s32 %v4723, %v4725
      %v4727 = vrot.slane %v4713, %v4726
      %v4728 = vcombine.high %v4720, %v4720
      %v4729 = vcombine.high %v4727, %v4727
      %v4730 = vcombine.high %v4522, %v4522
      %v4732 = vunpack.c.l.s4 1983009808
      %v4733 = vunpack.c.0.s8 %v4732
      %v4734 = vlaneseq
      %v4735 = vshrl.u32 %v4734, 7
      %v4736 = vsub.s32 %v4733, %v4735
      %v4737 = vrot.slane %v4522, %v4736
      %v4739 = vunpack.c.l.s4 1983009808
      %v4740 = vunpack.c.0.s8 %v4739
      %v4741 = vlaneseq
      %v4742 = vshrl.u32 %v4741, 7
      %v4743 = vsub.s32 %v4740, %v4742
      %v4744 = vrot.slane %v4730, %v4743
      %v4745 = vcombine.high %v4737, %v4737
      %v4746 = vcombine.high %v4744, %v4744
      %v4747 = vcombine.high %v4523, %v4523
      %v4749 = vunpack.c.l.s4 1983009808
      %v4750 = vunpack.c.0.s8 %v4749
      %v4751 = vlaneseq
      %v4752 = vshrl.u32 %v4751, 7
      %v4753 = vsub.s32 %v4750, %v4752
      %v4754 = vrot.slane %v4523, %v4753
      %v4756 = vunpack.c.l.s4 1983009808
      %v4757 = vunpack.c.0.s8 %v4756
      %v4758 = vlaneseq
      %v4759 = vshrl.u32 %v4758, 7
      %v4760 = vsub.s32 %v4757, %v4759
      %v4761 = vrot.slane %v4747, %v4760
      %v4762 = vcombine.high %v4754, %v4754
      %v4763 = vcombine.high %v4761, %v4761
      %v4764 = vcombine.high %v4524, %v4524
      %v4766 = vunpack.c.l.s4 1983009808
      %v4767 = vunpack.c.0.s8 %v4766
      %v4768 = vlaneseq
      %v4769 = vshrl.u32 %v4768, 7
      %v4770 = vsub.s32 %v4767, %v4769
      %v4771 = vrot.slane %v4524, %v4770
      %v4773 = vunpack.c.l.s4 1983009808
      %v4774 = vunpack.c.0.s8 %v4773
      %v4775 = vlaneseq
      %v4776 = vshrl.u32 %v4775, 7
      %v4777 = vsub.s32 %v4774, %v4776
      %v4778 = vrot.slane %v4764, %v4777
      %v4779 = vcombine.high %v4771, %v4771
      %v4780 = vcombine.high %v4778, %v4778
      %v4781 = vcombine.high %v4525, %v4525
      %v4783 = vunpack.c.l.s4 1983009808
      %v4784 = vunpack.c.0.s8 %v4783
      %v4785 = vlaneseq
      %v4786 = vshrl.u32 %v4785, 7
      %v4787 = vsub.s32 %v4784, %v4786
      %v4788 = vrot.slane %v4525, %v4787
      %v4790 = vunpack.c.l.s4 1983009808
      %v4791 = vunpack.c.0.s8 %v4790
      %v4792 = vlaneseq
      %v4793 = vshrl.u32 %v4792, 7
      %v4794 = vsub.s32 %v4791, %v4793
      %v4795 = vrot.slane %v4781, %v4794
      %v4796 = vcombine.high %v4788, %v4788
      %v4797 = vcombine.high %v4795, %v4795
      %v4798 = vcombine.high %v4526, %v4526
      %v4800 = vunpack.c.l.s4 1983009808
      %v4801 = vunpack.c.0.s8 %v4800
      %v4802 = vlaneseq
      %v4803 = vshrl.u32 %v4802, 7
      %v4804 = vsub.s32 %v4801, %v4803
      %v4805 = vrot.slane %v4526, %v4804
      %v4807 = vunpack.c.l.s4 1983009808
      %v4808 = vunpack.c.0.s8 %v4807
      %v4809 = vlaneseq
      %v4810 = vshrl.u32 %v4809, 7
      %v4811 = vsub.s32 %v4808, %v4810
      %v4812 = vrot.slane %v4798, %v4811
      %v4813 = vcombine.high %v4805, %v4805
      %v4814 = vcombine.high %v4812, %v4812
      %v4879 = vrot.slane %v4550, 7
      %v4880 = vrot.slane %v4879, 2
      %v4881 = vrot.slane %v4558, 7
      %v4882 = vrot.slane %v4881, 2
      %v4883 = vrot.slane %v4557, 7
      %v4884 = vrot.slane %v4883, 2
      %v4885 = vrot.slane %v4559, 7
      %v4886 = vrot.slane %v4885, 2
      %v4887 = vrot.slane %v4567, 7
      %v4888 = vrot.slane %v4887, 2
      %v4889 = vrot.slane %v4575, 7
      %v4890 = vrot.slane %v4889, 2
      %v4891 = vrot.slane %v4574, 7
      %v4892 = vrot.slane %v4891, 2
      %v4893 = vrot.slane %v4576, 7
      %v4894 = vrot.slane %v4893, 2
      %v4895 = vrot.slane %v4584, 7
      %v4896 = vrot.slane %v4895, 2
      %v4897 = vrot.slane %v4592, 7
      %v4898 = vrot.slane %v4897, 2
      %v4899 = vrot.slane %v4591, 7
      %v4900 = vrot.slane %v4899, 2
      %v4901 = vrot.slane %v4593, 7
      %v4902 = vrot.slane %v4901, 2
      %v4903 = vrot.slane %v4601, 7
      %v4904 = vrot.slane %v4903, 2
      %v4905 = vrot.slane %v4609, 7
      %v4906 = vrot.slane %v4905, 2
      %v4907 = vrot.slane %v4608, 7
      %v4908 = vrot.slane %v4907, 2
      %v4909 = vrot.slane %v4610, 7
      %v4910 = vrot.slane %v4909, 2
      %v4911 = vrot.slane %v4618, 7
      %v4912 = vrot.slane %v4911, 2
      %v4913 = vrot.slane %v4626, 7
      %v4914 = vrot.slane %v4913, 2
      %v4915 = vrot.slane %v4625, 7
      %v4916 = vrot.slane %v4915, 2
      %v4917 = vrot.slane %v4627, 7
      %v4918 = vrot.slane %v4917, 2
      %v4919 = vrot.slane %v4635, 7
      %v4920 = vrot.slane %v4919, 2
      %v4921 = vrot.slane %v4643, 7
      %v4922 = vrot.slane %v4921, 2
      %v4923 = vrot.slane %v4642, 7
      %v4924 = vrot.slane %v4923, 2
      %v4925 = vrot.slane %v4644, 7
      %v4926 = vrot.slane %v4925, 2
      %v4927 = vrot.slane %v4652, 7
      %v4928 = vrot.slane %v4927, 2
      %v4929 = vrot.slane %v4660, 7
      %v4930 = vrot.slane %v4929, 2
      %v4931 = vrot.slane %v4659, 7
      %v4932 = vrot.slane %v4931, 2
      %v4933 = vrot.slane %v4661, 7
      %v4934 = vrot.slane %v4933, 2
      %v4935 = vrot.slane %v4669, 7
      %v4936 = vrot.slane %v4935, 2
      %v4937 = vrot.slane %v4677, 7
      %v4938 = vrot.slane %v4937, 2
      %v4939 = vrot.slane %v4676, 7
      %v4940 = vrot.slane %v4939, 2
      %v4941 = vrot.slane %v4678, 7
      %v4942 = vrot.slane %v4941, 2
      %v4943 = vrot.slane %v4686, 7
      %v4944 = vrot.slane %v4943, 2
      %v4945 = vrot.slane %v4694, 7
      %v4946 = vrot.slane %v4945, 2
      %v4947 = vrot.slane %v4693, 7
      %v4948 = vrot.slane %v4947, 2
      %v4949 = vrot.slane %v4695, 7
      %v4950 = vrot.slane %v4949, 2
      %v4951 = vrot.slane %v4703, 7
      %v4952 = vrot.slane %v4951, 2
      %v4953 = vrot.slane %v4711, 7
      %v4954 = vrot.slane %v4953, 2
      %v4955 = vrot.slane %v4710, 7
      %v4956 = vrot.slane %v4955, 2
      %v4957 = vrot.slane %v4712, 7
      %v4958 = vrot.slane %v4957, 2
      %v4959 = vrot.slane %v4720, 7
      %v4960 = vrot.slane %v4959, 2
      %v4961 = vrot.slane %v4728, 7
      %v4962 = vrot.slane %v4961, 2
      %v4963 = vrot.slane %v4727, 7
      %v4964 = vrot.slane %v4963, 2
      %v4965 = vrot.slane %v4729, 7
      %v4966 = vrot.slane %v4965, 2
      %v4967 = vrot.slane %v4737, 7
      %v4968 = vrot.slane %v4967, 2
      %v4969 = vrot.slane %v4745, 7
      %v4970 = vrot.slane %v4969, 2
      %v4971 = vrot.slane %v4744, 7
      %v4972 = vrot.slane %v4971, 2
      %v4973 = vrot.slane %v4746, 7
      %v4974 = vrot.slane %v4973, 2
      %v4975 = vrot.slane %v4754, 7
      %v4976 = vrot.slane %v4975, 2
      %v4977 = vrot.slane %v4762, 7
      %v4978 = vrot.slane %v4977, 2
      %v4979 = vrot.slane %v4761, 7
      %v4980 = vrot.slane %v4979, 2
      %v4981 = vrot.slane %v4763, 7
      %v4982 = vrot.slane %v4981, 2
      %v4983 = vrot.slane %v4771, 7
      %v4984 = vrot.slane %v4983, 2
      %v4985 = vrot.slane %v4779, 7
      %v4986 = vrot.slane %v4985, 2
      %v4987 = vrot.slane %v4778, 7
      %v4988 = vrot.slane %v4987, 2
      %v4989 = vrot.slane %v4780, 7
      %v4990 = vrot.slane %v4989, 2
      %v4991 = vrot.slane %v4788, 7
      %v4992 = vrot.slane %v4991, 2
      %v4993 = vrot.slane %v4796, 7
      %v4994 = vrot.slane %v4993, 2
      %v4995 = vrot.slane %v4795, 7
      %v4996 = vrot.slane %v4995, 2
      %v4997 = vrot.slane %v4797, 7
      %v4998 = vrot.slane %v4997, 2
      %v4999 = vrot.slane %v4805, 7
      %v5000 = vrot.slane %v4999, 2
      %v5001 = vrot.slane %v4813, 7
      %v5002 = vrot.slane %v5001, 2
      %v5003 = vrot.slane %v4812, 7
      %v5004 = vrot.slane %v5003, 2
      %v5005 = vrot.slane %v4814, 7
      %v5006 = vrot.slane %v5005, 2
      %v5071 = vmax.f32 %v4550, %v4880
      %v5072 = vmax.f32 %v4558, %v4882
      %v5073 = vmax.f32 %v4557, %v4884
      %v5074 = vmax.f32 %v4559, %v4886
      %v5075 = vmax.f32 %v4567, %v4888
      %v5076 = vmax.f32 %v4575, %v4890
      %v5077 = vmax.f32 %v4574, %v4892
      %v5078 = vmax.f32 %v4576, %v4894
      %v5079 = vmax.f32 %v4584, %v4896
      %v5080 = vmax.f32 %v4592, %v4898
      %v5081 = vmax.f32 %v4591, %v4900
      %v5082 = vmax.f32 %v4593, %v4902
      %v5083 = vmax.f32 %v4601, %v4904
      %v5084 = vmax.f32 %v4609, %v4906
      %v5085 = vmax.f32 %v4608, %v4908
      %v5086 = vmax.f32 %v4610, %v4910
      %v5087 = vmax.f32 %v4618, %v4912
      %v5088 = vmax.f32 %v4626, %v4914
      %v5089 = vmax.f32 %v4625, %v4916
      %v5090 = vmax.f32 %v4627, %v4918
      %v5091 = vmax.f32 %v4635, %v4920
      %v5092 = vmax.f32 %v4643, %v4922
      %v5093 = vmax.f32 %v4642, %v4924
      %v5094 = vmax.f32 %v4644, %v4926
      %v5095 = vmax.f32 %v4652, %v4928
      %v5096 = vmax.f32 %v4660, %v4930
      %v5097 = vmax.f32 %v4659, %v4932
      %v5098 = vmax.f32 %v4661, %v4934
      %v5099 = vmax.f32 %v4669, %v4936
      %v5100 = vmax.f32 %v4677, %v4938
      %v5101 = vmax.f32 %v4676, %v4940
      %v5102 = vmax.f32 %v4678, %v4942
      %v5103 = vmax.f32 %v4686, %v4944
      %v5104 = vmax.f32 %v4694, %v4946
      %v5105 = vmax.f32 %v4693, %v4948
      %v5106 = vmax.f32 %v4695, %v4950
      %v5107 = vmax.f32 %v4703, %v4952
      %v5108 = vmax.f32 %v4711, %v4954
      %v5109 = vmax.f32 %v4710, %v4956
      %v5110 = vmax.f32 %v4712, %v4958
      %v5111 = vmax.f32 %v4720, %v4960
      %v5112 = vmax.f32 %v4728, %v4962
      %v5113 = vmax.f32 %v4727, %v4964
      %v5114 = vmax.f32 %v4729, %v4966
      %v5115 = vmax.f32 %v4737, %v4968
      %v5116 = vmax.f32 %v4745, %v4970
      %v5117 = vmax.f32 %v4744, %v4972
      %v5118 = vmax.f32 %v4746, %v4974
      %v5119 = vmax.f32 %v4754, %v4976
      %v5120 = vmax.f32 %v4762, %v4978
      %v5121 = vmax.f32 %v4761, %v4980
      %v5122 = vmax.f32 %v4763, %v4982
      %v5123 = vmax.f32 %v4771, %v4984
      %v5124 = vmax.f32 %v4779, %v4986
      %v5125 = vmax.f32 %v4778, %v4988
      %v5126 = vmax.f32 %v4780, %v4990
      %v5127 = vmax.f32 %v4788, %v4992
      %v5128 = vmax.f32 %v4796, %v4994
      %v5129 = vmax.f32 %v4795, %v4996
      %v5130 = vmax.f32 %v4797, %v4998
      %v5131 = vmax.f32 %v4805, %v5000
      %v5132 = vmax.f32 %v4813, %v5002
      %v5133 = vmax.f32 %v4812, %v5004
      %v5134 = vmax.f32 %v4814, %v5006
      %v5199 = vlaneseq
      %v5200 = vshrl.u32 %v5199, 7
      %v5201 = vsub.s32 0, %v5200
      %v5202 = vrot.slane %v5071, %v5201
      %v5203 = vlaneseq
      %v5204 = vshrl.u32 %v5203, 7
      %v5205 = vsub.s32 0, %v5204
      %v5206 = vrot.slane %v5072, %v5205
      %v5207 = vlaneseq
      %v5208 = vshrl.u32 %v5207, 7
      %v5209 = vsub.s32 0, %v5208
      %v5210 = vrot.slane %v5073, %v5209
      %v5211 = vlaneseq
      %v5212 = vshrl.u32 %v5211, 7
      %v5213 = vsub.s32 0, %v5212
      %v5214 = vrot.slane %v5074, %v5213
      %v5215 = vlaneseq
      %v5216 = vshrl.u32 %v5215, 7
      %v5217 = vsub.s32 0, %v5216
      %v5218 = vrot.slane %v5075, %v5217
      %v5219 = vlaneseq
      %v5220 = vshrl.u32 %v5219, 7
      %v5221 = vsub.s32 0, %v5220
      %v5222 = vrot.slane %v5076, %v5221
      %v5223 = vlaneseq
      %v5224 = vshrl.u32 %v5223, 7
      %v5225 = vsub.s32 0, %v5224
      %v5226 = vrot.slane %v5077, %v5225
      %v5227 = vlaneseq
      %v5228 = vshrl.u32 %v5227, 7
      %v5229 = vsub.s32 0, %v5228
      %v5230 = vrot.slane %v5078, %v5229
      %v5231 = vlaneseq
      %v5232 = vshrl.u32 %v5231, 7
      %v5233 = vsub.s32 0, %v5232
      %v5234 = vrot.slane %v5079, %v5233
      %v5235 = vlaneseq
      %v5236 = vshrl.u32 %v5235, 7
      %v5237 = vsub.s32 0, %v5236
      %v5238 = vrot.slane %v5080, %v5237
      %v5239 = vlaneseq
      %v5240 = vshrl.u32 %v5239, 7
      %v5241 = vsub.s32 0, %v5240
      %v5242 = vrot.slane %v5081, %v5241
      %v5243 = vlaneseq
      %v5244 = vshrl.u32 %v5243, 7
      %v5245 = vsub.s32 0, %v5244
      %v5246 = vrot.slane %v5082, %v5245
      %v5247 = vlaneseq
      %v5248 = vshrl.u32 %v5247, 7
      %v5249 = vsub.s32 0, %v5248
      %v5250 = vrot.slane %v5083, %v5249
      %v5251 = vlaneseq
      %v5252 = vshrl.u32 %v5251, 7
      %v5253 = vsub.s32 0, %v5252
      %v5254 = vrot.slane %v5084, %v5253
      %v5255 = vlaneseq
      %v5256 = vshrl.u32 %v5255, 7
      %v5257 = vsub.s32 0, %v5256
      %v5258 = vrot.slane %v5085, %v5257
      %v5259 = vlaneseq
      %v5260 = vshrl.u32 %v5259, 7
      %v5261 = vsub.s32 0, %v5260
      %v5262 = vrot.slane %v5086, %v5261
      %v5263 = vlaneseq
      %v5264 = vshrl.u32 %v5263, 7
      %v5265 = vsub.s32 0, %v5264
      %v5266 = vrot.slane %v5087, %v5265
      %v5267 = vlaneseq
      %v5268 = vshrl.u32 %v5267, 7
      %v5269 = vsub.s32 0, %v5268
      %v5270 = vrot.slane %v5088, %v5269
      %v5271 = vlaneseq
      %v5272 = vshrl.u32 %v5271, 7
      %v5273 = vsub.s32 0, %v5272
      %v5274 = vrot.slane %v5089, %v5273
      %v5275 = vlaneseq
      %v5276 = vshrl.u32 %v5275, 7
      %v5277 = vsub.s32 0, %v5276
      %v5278 = vrot.slane %v5090, %v5277
      %v5279 = vlaneseq
      %v5280 = vshrl.u32 %v5279, 7
      %v5281 = vsub.s32 0, %v5280
      %v5282 = vrot.slane %v5091, %v5281
      %v5283 = vlaneseq
      %v5284 = vshrl.u32 %v5283, 7
      %v5285 = vsub.s32 0, %v5284
      %v5286 = vrot.slane %v5092, %v5285
      %v5287 = vlaneseq
      %v5288 = vshrl.u32 %v5287, 7
      %v5289 = vsub.s32 0, %v5288
      %v5290 = vrot.slane %v5093, %v5289
      %v5291 = vlaneseq
      %v5292 = vshrl.u32 %v5291, 7
      %v5293 = vsub.s32 0, %v5292
      %v5294 = vrot.slane %v5094, %v5293
      %v5295 = vlaneseq
      %v5296 = vshrl.u32 %v5295, 7
      %v5297 = vsub.s32 0, %v5296
      %v5298 = vrot.slane %v5095, %v5297
      %v5299 = vlaneseq
      %v5300 = vshrl.u32 %v5299, 7
      %v5301 = vsub.s32 0, %v5300
      %v5302 = vrot.slane %v5096, %v5301
      %v5303 = vlaneseq
      %v5304 = vshrl.u32 %v5303, 7
      %v5305 = vsub.s32 0, %v5304
      %v5306 = vrot.slane %v5097, %v5305
      %v5307 = vlaneseq
      %v5308 = vshrl.u32 %v5307, 7
      %v5309 = vsub.s32 0, %v5308
      %v5310 = vrot.slane %v5098, %v5309
      %v5311 = vlaneseq
      %v5312 = vshrl.u32 %v5311, 7
      %v5313 = vsub.s32 0, %v5312
      %v5314 = vrot.slane %v5099, %v5313
      %v5315 = vlaneseq
      %v5316 = vshrl.u32 %v5315, 7
      %v5317 = vsub.s32 0, %v5316
      %v5318 = vrot.slane %v5100, %v5317
      %v5319 = vlaneseq
      %v5320 = vshrl.u32 %v5319, 7
      %v5321 = vsub.s32 0, %v5320
      %v5322 = vrot.slane %v5101, %v5321
      %v5323 = vlaneseq
      %v5324 = vshrl.u32 %v5323, 7
      %v5325 = vsub.s32 0, %v5324
      %v5326 = vrot.slane %v5102, %v5325
      %v5327 = vlaneseq
      %v5328 = vshrl.u32 %v5327, 7
      %v5329 = vsub.s32 0, %v5328
      %v5330 = vrot.slane %v5103, %v5329
      %v5331 = vlaneseq
      %v5332 = vshrl.u32 %v5331, 7
      %v5333 = vsub.s32 0, %v5332
      %v5334 = vrot.slane %v5104, %v5333
      %v5335 = vlaneseq
      %v5336 = vshrl.u32 %v5335, 7
      %v5337 = vsub.s32 0, %v5336
      %v5338 = vrot.slane %v5105, %v5337
      %v5339 = vlaneseq
      %v5340 = vshrl.u32 %v5339, 7
      %v5341 = vsub.s32 0, %v5340
      %v5342 = vrot.slane %v5106, %v5341
      %v5343 = vlaneseq
      %v5344 = vshrl.u32 %v5343, 7
      %v5345 = vsub.s32 0, %v5344
      %v5346 = vrot.slane %v5107, %v5345
      %v5347 = vlaneseq
      %v5348 = vshrl.u32 %v5347, 7
      %v5349 = vsub.s32 0, %v5348
      %v5350 = vrot.slane %v5108, %v5349
      %v5351 = vlaneseq
      %v5352 = vshrl.u32 %v5351, 7
      %v5353 = vsub.s32 0, %v5352
      %v5354 = vrot.slane %v5109, %v5353
      %v5355 = vlaneseq
      %v5356 = vshrl.u32 %v5355, 7
      %v5357 = vsub.s32 0, %v5356
      %v5358 = vrot.slane %v5110, %v5357
      %v5359 = vlaneseq
      %v5360 = vshrl.u32 %v5359, 7
      %v5361 = vsub.s32 0, %v5360
      %v5362 = vrot.slane %v5111, %v5361
      %v5363 = vlaneseq
      %v5364 = vshrl.u32 %v5363, 7
      %v5365 = vsub.s32 0, %v5364
      %v5366 = vrot.slane %v5112, %v5365
      %v5367 = vlaneseq
      %v5368 = vshrl.u32 %v5367, 7
      %v5369 = vsub.s32 0, %v5368
      %v5370 = vrot.slane %v5113, %v5369
      %v5371 = vlaneseq
      %v5372 = vshrl.u32 %v5371, 7
      %v5373 = vsub.s32 0, %v5372
      %v5374 = vrot.slane %v5114, %v5373
      %v5375 = vlaneseq
      %v5376 = vshrl.u32 %v5375, 7
      %v5377 = vsub.s32 0, %v5376
      %v5378 = vrot.slane %v5115, %v5377
      %v5379 = vlaneseq
      %v5380 = vshrl.u32 %v5379, 7
      %v5381 = vsub.s32 0, %v5380
      %v5382 = vrot.slane %v5116, %v5381
      %v5383 = vlaneseq
      %v5384 = vshrl.u32 %v5383, 7
      %v5385 = vsub.s32 0, %v5384
      %v5386 = vrot.slane %v5117, %v5385
      %v5387 = vlaneseq
      %v5388 = vshrl.u32 %v5387, 7
      %v5389 = vsub.s32 0, %v5388
      %v5390 = vrot.slane %v5118, %v5389
      %v5391 = vlaneseq
      %v5392 = vshrl.u32 %v5391, 7
      %v5393 = vsub.s32 0, %v5392
      %v5394 = vrot.slane %v5119, %v5393
      %v5395 = vlaneseq
      %v5396 = vshrl.u32 %v5395, 7
      %v5397 = vsub.s32 0, %v5396
      %v5398 = vrot.slane %v5120, %v5397
      %v5399 = vlaneseq
      %v5400 = vshrl.u32 %v5399, 7
      %v5401 = vsub.s32 0, %v5400
      %v5402 = vrot.slane %v5121, %v5401
      %v5403 = vlaneseq
      %v5404 = vshrl.u32 %v5403, 7
      %v5405 = vsub.s32 0, %v5404
      %v5406 = vrot.slane %v5122, %v5405
      %v5407 = vlaneseq
      %v5408 = vshrl.u32 %v5407, 7
      %v5409 = vsub.s32 0, %v5408
      %v5410 = vrot.slane %v5123, %v5409
      %v5411 = vlaneseq
      %v5412 = vshrl.u32 %v5411, 7
      %v5413 = vsub.s32 0, %v5412
      %v5414 = vrot.slane %v5124, %v5413
      %v5415 = vlaneseq
      %v5416 = vshrl.u32 %v5415, 7
      %v5417 = vsub.s32 0, %v5416
      %v5418 = vrot.slane %v5125, %v5417
      %v5419 = vlaneseq
      %v5420 = vshrl.u32 %v5419, 7
      %v5421 = vsub.s32 0, %v5420
      %v5422 = vrot.slane %v5126, %v5421
      %v5423 = vlaneseq
      %v5424 = vshrl.u32 %v5423, 7
      %v5425 = vsub.s32 0, %v5424
      %v5426 = vrot.slane %v5127, %v5425
      %v5427 = vlaneseq
      %v5428 = vshrl.u32 %v5427, 7
      %v5429 = vsub.s32 0, %v5428
      %v5430 = vrot.slane %v5128, %v5429
      %v5431 = vlaneseq
      %v5432 = vshrl.u32 %v5431, 7
      %v5433 = vsub.s32 0, %v5432
      %v5434 = vrot.slane %v5129, %v5433
      %v5435 = vlaneseq
      %v5436 = vshrl.u32 %v5435, 7
      %v5437 = vsub.s32 0, %v5436
      %v5438 = vrot.slane %v5130, %v5437
      %v5439 = vlaneseq
      %v5440 = vshrl.u32 %v5439, 7
      %v5441 = vsub.s32 0, %v5440
      %v5442 = vrot.slane %v5131, %v5441
      %v5443 = vlaneseq
      %v5444 = vshrl.u32 %v5443, 7
      %v5445 = vsub.s32 0, %v5444
      %v5446 = vrot.slane %v5132, %v5445
      %v5447 = vlaneseq
      %v5448 = vshrl.u32 %v5447, 7
      %v5449 = vsub.s32 0, %v5448
      %v5450 = vrot.slane %v5133, %v5449
      %v5451 = vlaneseq
      %v5452 = vshrl.u32 %v5451, 7
      %v5453 = vsub.s32 0, %v5452
      %v5454 = vrot.slane %v5134, %v5453
      %vm5455 = vcmask 1041409
      %v5456 = vsel %vm5455, %v5206, %v5202
      %vm5457 = vcmask 1042434
      %v5458 = vsel %vm5457, %v5210, %v5456
      %vm5459 = vcmask 1043459
      %v5460 = vsel %vm5459, %v5214, %v5458
      %vm5461 = vcmask 1044484
      %v5462 = vsel %vm5461, %v5218, %v5460
      %vm5463 = vcmask 1045509
      %v5464 = vsel %vm5463, %v5222, %v5462
      %vm5465 = vcmask 1046534
      %v5466 = vsel %vm5465, %v5226, %v5464
      %vm5467 = vcmask 1047559
      %v5468 = vsel %vm5467, %v5230, %v5466
      %v5469 = vsel %vm5455, %v5238, %v5234
      %v5470 = vsel %vm5457, %v5242, %v5469
      %v5471 = vsel %vm5459, %v5246, %v5470
      %v5472 = vsel %vm5461, %v5250, %v5471
      %v5473 = vsel %vm5463, %v5254, %v5472
      %v5474 = vsel %vm5465, %v5258, %v5473
      %v5475 = vsel %vm5467, %v5262, %v5474
      %v5476 = vsel %vm5455, %v5270, %v5266
      %v5477 = vsel %vm5457, %v5274, %v5476
      %v5478 = vsel %vm5459, %v5278, %v5477
      %v5479 = vsel %vm5461, %v5282, %v5478
      %v5480 = vsel %vm5463, %v5286, %v5479
      %v5481 = vsel %vm5465, %v5290, %v5480
      %v5482 = vsel %vm5467, %v5294, %v5481
      %v5483 = vsel %vm5455, %v5302, %v5298
      %v5484 = vsel %vm5457, %v5306, %v5483
      %v5485 = vsel %vm5459, %v5310, %v5484
      %v5486 = vsel %vm5461, %v5314, %v5485
      %v5487 = vsel %vm5463, %v5318, %v5486
      %v5488 = vsel %vm5465, %v5322, %v5487
      %v5489 = vsel %vm5467, %v5326, %v5488
      %v5490 = vsel %vm5455, %v5334, %v5330
      %v5491 = vsel %vm5457, %v5338, %v5490
      %v5492 = vsel %vm5459, %v5342, %v5491
      %v5493 = vsel %vm5461, %v5346, %v5492
      %v5494 = vsel %vm5463, %v5350, %v5493
      %v5495 = vsel %vm5465, %v5354, %v5494
      %v5496 = vsel %vm5467, %v5358, %v5495
      %v5497 = vsel %vm5455, %v5366, %v5362
      %v5498 = vsel %vm5457, %v5370, %v5497
      %v5499 = vsel %vm5459, %v5374, %v5498
      %v5500 = vsel %vm5461, %v5378, %v5499
      %v5501 = vsel %vm5463, %v5382, %v5500
      %v5502 = vsel %vm5465, %v5386, %v5501
      %v5503 = vsel %vm5467, %v5390, %v5502
      %v5504 = vsel %vm5455, %v5398, %v5394
      %v5505 = vsel %vm5457, %v5402, %v5504
      %v5506 = vsel %vm5459, %v5406, %v5505
      %v5507 = vsel %vm5461, %v5410, %v5506
      %v5508 = vsel %vm5463, %v5414, %v5507
      %v5509 = vsel %vm5465, %v5418, %v5508
      %v5510 = vsel %vm5467, %v5422, %v5509
      %v5511 = vsel %vm5455, %v5430, %v5426
      %v5512 = vsel %vm5457, %v5434, %v5511
      %v5513 = vsel %vm5459, %v5438, %v5512
      %v5514 = vsel %vm5461, %v5442, %v5513
      %v5515 = vsel %vm5463, %v5446, %v5514
      %v5516 = vsel %vm5465, %v5450, %v5515
      %v5517 = vsel %vm5467, %v5454, %v5516
      %5526 = vxpose.xlu0.b32.start [1/16] %v5468, 128
      %5527 = vxpose.xlu0.b32.cont [2/16] %v5475, 128
      %5528 = vxpose.xlu0.b32.cont [3/16] %v5482, 128
      %5529 = vxpose.xlu0.b32.cont [4/16] %v5489, 128
      %5530 = vxpose.xlu0.b32.cont [5/16] %v5496, 128
      %5531 = vxpose.xlu0.b32.cont [6/16] %v5503, 128
      %5532 = vxpose.xlu0.b32.cont [7/16] %v5510, 128
      %5533 = vxpose.xlu0.b32.cont [8/16] %v5517, 128
      %5534 = vxpose.xlu0.b32.cont [9/16] 0.0, 128
      %5535 = vxpose.xlu0.b32.cont [10/16] 0.0, 128
      %5536 = vxpose.xlu0.b32.cont [11/16] 0.0, 128
      %5537 = vxpose.xlu0.b32.cont [12/16] 0.0, 128
      %5538 = vxpose.xlu0.b32.cont [13/16] 0.0, 128
      %5539 = vxpose.xlu0.b32.cont [14/16] 0.0, 128
      %5540 = vxpose.xlu0.b32.cont [15/16] 0.0, 128
      %5541 = vxpose.xlu0.b32.end [16/16] 0.0, 128
      %v5542 = vpop.trf.xlu0
      %v5543 = vpop.trf.xlu0
      %v5544 = vpop.trf.xlu0
      %v5545 = vpop.trf.xlu0
      %v5546 = vpop.trf.xlu0
      %v5547 = vpop.trf.xlu0
      %v5548 = vpop.trf.xlu0
      %v5549 = vpop.trf.xlu0
      %v5550 = vpop.trf.xlu0
      %v5551 = vpop.trf.xlu0
      %v5552 = vpop.trf.xlu0
      %v5553 = vpop.trf.xlu0
      %v5554 = vpop.trf.xlu0
      %v5555 = vpop.trf.xlu0
      %v5556 = vpop.trf.xlu0
      %v5557 = vpop.trf.xlu0
      %vm5558 = vcmask 523264
      %5559 = vst.msk [vmem:[%s224] sm:$0xff] %vm5558, %v5542
      %5560 = vst.msk [vmem:[%s224 + $0x8] sm:$0xff] %vm5558, %v5543
      %5561 = vst.msk [vmem:[%s224 + $0x10] sm:$0xff] %vm5558, %v5544
      %5562 = vst.msk [vmem:[%s224 + $0x18] sm:$0xff] %vm5558, %v5545
      %p5563 = scmp.lt.s32.totalorder %s16, 1
      %s5564 = scalar_select %p5563, %s16, 1
      %s5565 = smul.addr %s5564, 4
      %s5566 = smul.addr %s5565, 8
      %s5567 = scalar_lea.vmem %s5, %s5566
      // Predicated region
      $region41: #{vgg_block_forward.1} parent=39 // pred_check
        %p5568 = pneg %p144
      $region42: #{vgg_block_forward.1} parent=39 // pred_check_branch
        %5570 = sbr.rel (%p5568) target = $region44
      $region43: #{vgg_block_forward.1} parent=39 // pred_region
        _
      $region44: #{vgg_block_forward.1} parent=39 // pred_fallthru
        _
    $region40: #{vgg_block_forward.1} parent=5 // pred_fallthru
      _
    %p5571 = scmp.le.s32.totalorder 2, %s11
    // Predicated region
    $region45: #{vgg_block_forward.1} parent=5 // pred_check
      %p5572 = pneg %p5571
    $region46: #{vgg_block_forward.1} parent=5 // pred_check_branch
      %5574 = sbr.rel (%p5572) target = $region48
    $region47: #{vgg_block_forward.1} parent=5 // pred_region
      %s5575 = ssub.s32 %s11, 2
      // Predicated region
      $region49: #{vgg_block_forward.1} parent=47 // pred_check
        %p5576 = pneg %p150
      $region50: #{vgg_block_forward.1} parent=47 // pred_check_branch
        %5578 = sbr.rel (%p5576) target = $region52
      $region51: #{vgg_block_forward.1} parent=47 // pred_region
        %p5579 = scmp.lt.s32.totalorder %s17, 1
        %s5580 = scalar_select %p5579, %s17, 1
        %s5581 = smul.addr %s5580, 4
        %s5582 = smul.addr %s5581, 8
        %s5583 = scalar_lea.vmem %s5, %s5582
      $region52: #{vgg_block_forward.1} parent=47 // pred_fallthru
        _
    $region48: #{vgg_block_forward.1} parent=5 // pred_fallthru
      _
  $region6: #{vgg_block_forward.1} parent=0 // loop_footer
    %s15 = sadd.s32 1, %s11
  $region7: #{vgg_block_forward.1} parent=0 // loop_footer_branch
    %10 = sbr.rel target = $region3
  $region8: #{vgg_block_forward.1} parent=0 // loop_exit
    _

</llo_original>
